<compile_context>
chip_gen: v6e
topology: v6e:2x2x1
jax: 0.10.0
libtpu: 0.0.40
codegen_flags: <defaults>
</compile_context>

<pallas_src>
import functools

import jax
import jax.numpy as jnp
import numpy as np
from jax.experimental import pallas as pl
from jax.experimental.pallas import tpu as pltpu

NEG_SLOPE = 0.01  # torch.nn.LeakyReLU default


def _leaky(x):
    return jnp.where(x > 0, x, NEG_SLOPE * x)


def _elu(x):
    return jnp.where(x > 0, x, jnp.expm1(x))  # torch.nn.ELU(alpha=1)


def _round_up(v, m):
    return ((v + m - 1) // m) * m


def _vmem_capacity_bytes():
    try:
        return int(pltpu.get_tpu_info().vmem_capacity_bytes)
    except Exception:
        return 64 * 1024 * 1024  # conservative (v7x per-TC)


def compute_edge_weights(edge_attr, layer_params):
    """Per-edge NWM weights for all layers/channels: [L*C, E] (hoisted out of the kernel)."""
    hp = jax.lax.Precision.HIGHEST
    ws = []
    for p in layer_params:
        C = p["eW1"].shape[0]
        for c in range(C):
            h = _leaky(jnp.dot(edge_attr, p["eW1"][c], precision=hp) + p["eb1"][c])   # [E, 8]
            w = _elu(jnp.dot(h, p["eW2"][c], precision=hp) + p["eb2"][c])             # [E, 1]
            ws.append(w[:, 0])
    return jnp.stack(ws, axis=0)


# ----------------------------------------------------------------------------
# Fused kernel: L x (MCNWMConv + LeakyReLU + BatchNorm) + JK max + Set2Set
# (everything in the transposed, lane-dense layout: features on sublanes, nodes/edges on lanes)
# ----------------------------------------------------------------------------
def fused_gnn_kernel(xT_ref, srcT_ref, dst_ref, wT_ref, b_ref,
                     W1T_ref, W1effT_ref, b1T_ref, W2T_ref, b2T_ref,
                     gammaT_ref, betaT_ref,
                     wih0_ref, whh0_ref, bih0_ref, bhh0_ref,
                     wih1_ref, whh1_ref, bih1_ref, bhh1_ref,
                     out_ref, *scratch,
                     num_layers, num_channels, dim, steps, out_pad,
                     inv_n, stream_edges, eblk):
    L, C, D = num_layers, num_channels, dim
    CD = C * D

    b = b_ref[...]                                      # [G, N_pad] graph membership (0/1)
    node_mask = jnp.sum(b, axis=0, keepdims=True)       # [1, N_pad] 1=real node, 0=padding
    G, N_pad = b.shape

    xT = xT_ref[...]                                    # [D, N_pad] f32
    if not stream_edges:
        srcT = srcT_ref[...]                            # [N_pad, e_pad] bf16 one-hot (exact)
        dstm = dst_ref[...]                             # [e_pad, N_pad] bf16 one-hot (exact)
        wT = wT_ref[...]                                # [L*C, e_pad] f32 per-edge weights

    x_jkT = None
    for l in range(L):
        xT_bf = xT.astype(jnp.bfloat16)

        if stream_edges:
            aggT_scr = scratch[0]
            aggT_scr[...] = jnp.zeros_like(aggT_scr)

            def edge_block(srcT_blk, dst_blk, w_blk, _l=l, _x=xT_bf):
                # gather x[src]^T for this edge block (lanes = eblk, dense)
                x_jT = jnp.dot(_x, srcT_blk[...],
                               preferred_element_type=jnp.float32)        # [D, eblk]
                wblk = w_blk[...]
                msgT = jnp.concatenate(
                    [x_jT * wblk[_l * C + c:_l * C + c + 1, :] for c in range(C)],
                    axis=0).astype(jnp.bfloat16)                          # [C*D, eblk]
                # scatter-add to destinations (lanes = N_pad, dense)
                aggT_scr[...] += jnp.dot(msgT, dst_blk[...],
                                         preferred_element_type=jnp.float32)

            n_blocks = srcT_ref.shape[1] // eblk
            pltpu.emit_pipeline(
                edge_block,
                grid=(n_blocks,),
                in_specs=[pl.BlockSpec((N_pad, eblk), lambda e: (0, e)),
                          pl.BlockSpec((eblk, N_pad), lambda e: (e, 0)),
                          pl.BlockSpec((L * C, eblk), lambda e: (0, e))],
            )(srcT_ref, dst_ref, wT_ref)
            aggT = aggT_scr[...]
        else:
            # fully VMEM-resident structure: one gather + one scatter matmul per layer
            x_jT = jnp.dot(xT_bf, srcT, preferred_element_type=jnp.float32)     # [D, e_pad]
            msgT = jnp.concatenate(
                [x_jT * wT[l * C + c:l * C + c + 1, :] for c in range(C)],
                axis=0).astype(jnp.bfloat16)                                    # [C*D, e_pad]
            aggT = jnp.dot(msgT, dstm, preferred_element_type=jnp.float32)      # [C*D, N_pad]

        # conv MLP; (1+eps)*x root term folded into W1eff (precomputed in the wrapper)
        accT = (jnp.dot(W1T_ref[l], aggT.astype(jnp.bfloat16),
                        preferred_element_type=jnp.float32)
                + jnp.dot(W1effT_ref[l], xT_bf, preferred_element_type=jnp.float32)
                + b1T_ref[l])                                                   # [D, N_pad]
        hT = _leaky(accT)
        yT = jnp.dot(W2T_ref[l], hT.astype(jnp.bfloat16),
                     preferred_element_type=jnp.float32) + b2T_ref[l]
        yT = _leaky(yT)                                   # F.leaky_relu(conv(...))

        # BatchNorm1d, training-mode batch stats over the real nodes only (padding masked out)
        mean = jnp.sum(yT * node_mask, axis=1, keepdims=True) * inv_n           # [D, 1]
        diff = yT - mean
        var = jnp.sum(diff * diff * node_mask, axis=1, keepdims=True) * inv_n
        yT = diff * jax.lax.rsqrt(var + 1e-5) * gammaT_ref[l] + betaT_ref[l]

        xT = yT
        x_jkT = yT if x_jkT is None else jnp.maximum(x_jkT, yT)   # running JK 'max'

    # ------------------- Set2Set pooling (2-layer LSTM, `steps` iterations) -------------------
    mask = b > 0.5                                              # [G, N_pad]

    wih0 = wih0_ref[...]; whh0 = whh0_ref[...]; bih0 = bih0_ref[...]; bhh0 = bhh0_ref[...]
    wih1 = wih1_ref[...]; whh1 = whh1_ref[...]; bih1 = bih1_ref[...]; bhh1 = bhh1_ref[...]

    h0 = jnp.zeros((G, D), jnp.float32); c0 = jnp.zeros((G, D), jnp.float32)
    h1 = jnp.zeros((G, D), jnp.float32); c1 = jnp.zeros((G, D), jnp.float32)
    q = jnp.zeros((G, D), jnp.float32); r = jnp.zeros((G, D), jnp.float32)

    def lstm_cell(gates_in, h, c, whh, bhh):
        g = gates_in + jnp.dot(h, whh, preferred_element_type=jnp.float32) + bhh
        i = jax.nn.sigmoid(g[:, 0:D])
        f = jax.nn.sigmoid(g[:, D:2 * D])
        gg = jnp.tanh(g[:, 2 * D:3 * D])
        o = jax.nn.sigmoid(g[:, 3 * D:4 * D])
        c = f * c + i * gg
        return o * jnp.tanh(c), c

    for _ in range(steps):
        # LSTM layer 0, input = q_star = [q, r]  (concat folded into a split matmul)
        inp0 = (jnp.dot(q, wih0[:D, :], preferred_element_type=jnp.float32)
                + jnp.dot(r, wih0[D:, :], preferred_element_type=jnp.float32) + bih0)
        h0, c0 = lstm_cell(inp0, h0, c0, whh0, bhh0)
        inp1 = jnp.dot(h0, wih1, preferred_element_type=jnp.float32) + bih1
        h1, c1 = lstm_cell(inp1, h1, c1, whh1, bhh1)
        q = h1

        # e[g, n] = <x_jk[n], q[g]>; per-graph masked softmax; r = attention-weighted sum
        e = jnp.dot(q, x_jkT, preferred_element_type=jnp.float32)               # [G, N_pad]
        m = jnp.max(jnp.where(mask, e, -1e30), axis=1, keepdims=True)
        p = jnp.where(mask, jnp.exp(e - m), 0.0)
        denom = jnp.sum(p, axis=1, keepdims=True) + 1e-16
        a = p / denom                                                           # exact division
        r = jax.lax.dot_general(a, x_jkT, (((1,), (1,)), ((), ())),
                                preferred_element_type=jnp.float32)             # [G, D]

    # single lane-dense store: [q | r | zero-pad] -> [G, out_pad]
    if out_pad > 2 * D:
        out_ref[...] = jnp.concatenate(
            [q, r, jnp.zeros((G, out_pad - 2 * D), jnp.float32)], axis=1)
    else:
        out_ref[...] = jnp.concatenate([q, r], axis=1)


# ----------------------------------------------------------------------------
# Wrapper: builds transposed bf16 one-hot structure, packs params, size-gates residency
# ----------------------------------------------------------------------------
def jkmcnwm_forward(x, edge_index, edge_attr, batch, layer_params, lstm_params,
                    num_graphs, steps=5):
    N, f_in = x.shape
    L = len(layer_params)
    C = layer_params[0]["W1"].shape[0]
    D = layer_params[0]["W2"].shape[0]
    E = edge_index.shape[1]
    LC = L * C
    out_pad = max(128, _round_up(2 * D, 128))
    N_pad = _round_up(N, 128)

    # ---- size gate: VMEM-resident structure vs. HBM streaming (per-generation budget) ----
    cap = _vmem_capacity_bytes()
    budget = int(0.72 * cap)
    e_pad128 = _round_up(max(E, 1), 128)
    resident_bytes = (2 * N_pad * e_pad128 * 2                          # SRC^T + DST (bf16)
                      + e_pad128 * (LC * 4 + 4 * D + 6 * C * D + 64)    # wT + x_j/msg temporaries
                      + N_pad * (8 * C * D + 32 * D + 4 * num_graphs)   # agg/acc/y/x_jk etc.
                      + (4 << 20))
    stream_edges = resident_bytes > budget

    if stream_edges:
        per_edge = 2 * (2 * N_pad * 2 + LC * 4 + 16)     # double-buffered src+dst (bf16) + w
        eblk = max(128, (budget // (2 * max(per_edge, 1))) // 128 * 128)
        node_bytes = N_pad * (8 * C * D + 32 * D + 4 * num_graphs)
        if node_bytes + per_edge * eblk > budget:
            # TODO(synk): index-driven DMA gather + dst-sorted CSR accumulation for huge graphs
            raise NotImplementedError("graph too large for the one-hot formulation")
    else:
        eblk = 128
    e_pad = _round_up(max(E, 1), eblk)
    vmem_limit = int(min(0.88 * cap, max(resident_bytes + (8 << 20), 32 << 20)))

    src = edge_index[0].astype(jnp.int32)
    dst = edge_index[1].astype(jnp.int32)
    e_ids = jnp.arange(E)

    # transposed one-hot structure (exact in bf16); padded nodes/edges are all-zero rows/cols
    srcT = jnp.zeros((N_pad, e_pad), jnp.bfloat16).at[src, e_ids].set(1.0)   # x_j^T = x^T @ SRC^T
    dstm = jnp.zeros((e_pad, N_pad), jnp.bfloat16).at[e_ids, dst].set(1.0)   # agg^T = msg^T @ DST
    Bm = jnp.zeros((num_graphs, N_pad), jnp.float32).at[batch, jnp.arange(N)].set(1.0)

    # per-edge NWM weights for all layers/channels, hoisted out of the kernel (perf review #1)
    w_all = compute_edge_weights(edge_attr, layer_params)                     # [L*C, E]
    wT = jnp.zeros((LC, e_pad), jnp.float32).at[:, :E].set(w_all)

    # transposed node features, zero-padded to D rows / N_pad cols
    xT0 = jnp.zeros((D, N_pad), jnp.float32).at[:f_in, :N].set(x.T)

    # conv MLP params (transposed, channel-batched, eps root term folded into W1eff)
    W1T_list, W1effT_list = [], []
    for p in layer_params:
        W1 = p["W1"]                                                          # [C, in_dim, D]
        in_dim = W1.shape[1]
        if in_dim < D:
            W1 = jnp.zeros((C, D, D), jnp.float32).at[:, :in_dim, :].set(W1)
        W1T_list.append(W1.reshape(C * D, D).T)                               # [D, C*D]
        eps = p["eps"].reshape(C, 1, 1)
        W1effT_list.append(jnp.sum((1.0 + eps) * W1, axis=0).T)               # [D, D]
    W1T = jnp.stack(W1T_list).astype(jnp.bfloat16)                            # [L, D, C*D]
    W1effT = jnp.stack(W1effT_list).astype(jnp.bfloat16)                      # [L, D, D]
    W2T = jnp.stack([p["W2"].T for p in layer_params]).astype(jnp.bfloat16)   # [L, D, D]
    b1T = jnp.stack([p["b1"].T for p in layer_params])                        # [L, D, 1]
    b2T = jnp.stack([p["b2"].T for p in layer_params])
    gammaT = jnp.stack([p["gamma"].T for p in layer_params])
    betaT = jnp.stack([p["beta"].T for p in layer_params])

    vmem = pl.BlockSpec(memory_space=pltpu.MemorySpace.VMEM)
    struct_spec = pl.BlockSpec(memory_space=pl.ANY) if stream_edges else vmem

    kernel = functools.partial(
        fused_gnn_kernel, num_layers=L, num_channels=C, dim=D, steps=steps,
        out_pad=out_pad, inv_n=1.0 / float(N), stream_edges=stream_edges, eblk=eblk)

    out = pl.pallas_call(
        kernel,
        out_shape=jax.ShapeDtypeStruct((num_graphs, out_pad), jnp.float32),
        in_specs=[vmem, struct_spec, struct_spec, struct_spec] + [vmem] * 16,
        out_specs=vmem,
        scratch_shapes=([pltpu.VMEM((C * D, N_pad), jnp.float32)] if stream_edges else []),
        compiler_params=pltpu.CompilerParams(vmem_limit_bytes=vmem_limit),
    )(xT0, srcT, dstm, wT, Bm,
      W1T, W1effT, b1T, W2T, b2T, gammaT, betaT,
      lstm_params["wih0"], lstm_params["whh0"], lstm_params["bih0"], lstm_params["bhh0"],
      lstm_params["wih1"], lstm_params["whh1"], lstm_params["bih1"], lstm_params["bhh1"])

    return out[:, :2 * D]


# ----------------------------------------------------------------------------
# Deterministic parameter init
# ----------------------------------------------------------------------------
def init_layer_params(key, in_dim, dim, num_channels, num_edge_attr):
    ks = jax.random.split(key, 8)
    return {
        "eW1": 0.3 * jax.random.normal(ks[0], (num_channels, num_edge_attr, 8), jnp.float32),
        "eb1": 0.1 * jax.random.normal(ks[1], (num_channels, 1, 8), jnp.float32),
        "eW2": 0.3 * jax.random.normal(ks[2], (num_channels, 8, 1), jnp.float32),
        "eb2": 0.1 * jax.random.normal(ks[3], (num_channels, 1, 1), jnp.float32),
        "eps": jnp.zeros((num_channels,), jnp.float32),      # NWMConv eps init = 0
        "W1": 0.3 * jax.random.normal(ks[4], (num_channels, in_dim, dim), jnp.float32),
        "b1": 0.1 * jax.random.normal(ks[5], (1, dim), jnp.float32),
        "W2": 0.3 * jax.random.normal(ks[6], (dim, dim), jnp.float32),
        "b2": 0.1 * jax.random.normal(ks[7], (1, dim), jnp.float32),
        "gamma": jnp.ones((1, dim), jnp.float32),            # BatchNorm1d default init
        "beta": jnp.zeros((1, dim), jnp.float32),
    }


def init_lstm_params(key, dim):
    ks = jax.random.split(key, 8)
    s = 0.2
    return {
        "wih0": s * jax.random.normal(ks[0], (2 * dim, 4 * dim), jnp.float32),
        "whh0": s * jax.random.normal(ks[1], (dim, 4 * dim), jnp.float32),
        "bih0": s * jax.random.normal(ks[2], (1, 4 * dim), jnp.float32),
        "bhh0": s * jax.random.normal(ks[3], (1, 4 * dim), jnp.float32),
        "wih1": s * jax.random.normal(ks[4], (dim, 4 * dim), jnp.float32),
        "whh1": s * jax.random.normal(ks[5], (dim, 4 * dim), jnp.float32),
        "bih1": s * jax.random.normal(ks[6], (1, 4 * dim), jnp.float32),
        "bhh1": s * jax.random.normal(ks[7], (1, 4 * dim), jnp.float32),
    }


# ----------------------------------------------------------------------------
# Pure-JAX references.
#   * reference_forward_f32: straight f32 transcription of the PyTorch module (spec).
#   * reference_forward_emulated: mirrors the kernel's bf16 rounding points exactly
#     (one-hot structure matmuls are exact in bf16; only value roundings differ).
# ----------------------------------------------------------------------------
def _set2set_ref(x_jk, batch, num_graphs, lstm_params, steps):
    hp = jax.lax.Precision.HIGHEST
    G, D, Lp = num_graphs, x_jk.shape[1], lstm_params
    h0 = c0 = h1 = c1 = jnp.zeros((G, D), jnp.float32)
    q_star = jnp.zeros((G, 2 * D), jnp.float32)
    for _ in range(steps):
        g0 = (jnp.dot(q_star, Lp["wih0"], precision=hp) + Lp["bih0"]
              + jnp.dot(h0, Lp["whh0"], precision=hp) + Lp["bhh0"])
        i0, f0 = jax.nn.sigmoid(g0[:, :D]), jax.nn.sigmoid(g0[:, D:2 * D])
        gg0, o0 = jnp.tanh(g0[:, 2 * D:3 * D]), jax.nn.sigmoid(g0[:, 3 * D:])
        c0 = f0 * c0 + i0 * gg0
        h0 = o0 * jnp.tanh(c0)
        g1 = (jnp.dot(h0, Lp["wih1"], precision=hp) + Lp["bih1"]
              + jnp.dot(h1, Lp["whh1"], precision=hp) + Lp["bhh1"])
        i1, f1 = jax.nn.sigmoid(g1[:, :D]), jax.nn.sigmoid(g1[:, D:2 * D])
        gg1, o1 = jnp.tanh(g1[:, 2 * D:3 * D]), jax.nn.sigmoid(g1[:, 3 * D:])
        c1 = f1 * c1 + i1 * gg1
        h1 = o1 * jnp.tanh(c1)
        q = h1
        e = jnp.sum(x_jk * q[batch], axis=-1)
        m = jax.ops.segment_max(e, batch, num_segments=G)
        ex = jnp.exp(e - m[batch])
        den = jax.ops.segment_sum(ex, batch, num_segments=G)
        a = ex / (den[batch] + 1e-16)
        r = jax.ops.segment_sum(a[:, None] * x_jk, batch, num_segments=G)
        q_star = jnp.concatenate([q, r], axis=1)
    return q_star


def reference_forward_f32(x, edge_index, edge_attr, batch, layer_params, lstm_params,
                          num_graphs, steps=5):
    hp = jax.lax.Precision.HIGHEST
    src, dst = edge_index[0], edge_index[1]
    xl, x_jk = x, None
    for p in layer_params:
        C, in_dim, D = p["W1"].shape
        chans = []
        for c in range(C):
            h = _leaky(jnp.dot(edge_attr, p["eW1"][c], precision=hp) + p["eb1"][c])
            w = _elu(jnp.dot(h, p["eW2"][c], precision=hp) + p["eb2"][c])
            msg = xl[src] * w
            agg = jnp.zeros((xl.shape[0], in_dim), jnp.float32).at[dst].add(msg)
            chans.append(agg + (1.0 + p["eps"][c]) * xl)
        cat = jnp.concatenate(chans, axis=1)
        acc = jnp.dot(cat, p["W1"].reshape(C * in_dim, D), precision=hp) + p["b1"]
        y = jnp.dot(_leaky(acc), p["W2"], precision=hp) + p["b2"]
        y = _leaky(y)
        mean = jnp.mean(y, axis=0, keepdims=True)
        var = jnp.mean((y - mean) ** 2, axis=0, keepdims=True)
        y = (y - mean) * jax.lax.rsqrt(var + 1e-5) * p["gamma"] + p["beta"]
        x_jk = y if x_jk is None else jnp.maximum(x_jk, y)
        xl = y
    return _set2set_ref(x_jk, batch, num_graphs, lstm_params, steps)


def reference_forward_emulated(x, edge_index, edge_attr, batch, layer_params, lstm_params,
                               num_graphs, steps=5):
    def rnd(v):
        return v.astype(jnp.bfloat16).astype(jnp.float32)

    hp = jax.lax.Precision.HIGHEST
    src, dst = edge_index[0], edge_index[1]
    N = x.shape[0]
    w_all = compute_edge_weights(edge_attr, layer_params)                 # [L*C, E]
    xl, x_jk = x, None
    for li, p in enumerate(layer_params):
        C, in_dim, D = p["W1"].shape
        x_bf = rnd(xl)
        aggs = []
        for c in range(C):
            w = w_all[li * C + c][:, None]
            msg = rnd(x_bf[src] * w)
            aggs.append(jnp.zeros((N, in_dim), jnp.float32).at[dst].add(msg))
        agg = rnd(jnp.concatenate(aggs, axis=1))
        W1flat = rnd(p["W1"].reshape(C * in_dim, D))
        W1eff = rnd(jnp.sum((1.0 + p["eps"]).reshape(C, 1, 1) * p["W1"], axis=0))
        acc = (jnp.dot(agg, W1flat, precision=hp)
               + jnp.dot(x_bf, W1eff, precision=hp) + p["b1"])
        h = rnd(_leaky(acc))
        y = jnp.dot(h, rnd(p["W2"]), precision=hp) + p["b2"]
        y = _leaky(y)
        mean = jnp.mean(y, axis=0, keepdims=True)
        var = jnp.mean((y - mean) ** 2, axis=0, keepdims=True)
        y = (y - mean) * jax.lax.rsqrt(var + 1e-5) * p["gamma"] + p["beta"]
        x_jk = y if x_jk is None else jnp.maximum(x_jk, y)
        xl = y
    return _set2set_ref(x_jk, batch, num_graphs, lstm_params, steps)


if __name__ == "__main__":
    key = jax.random.PRNGKey(0)
    num_features, dim = 4, 16
    num_layers, num_channels, num_edge_attr = 3, 2, 2
    n_per_graph, G = 64, 2
    N = n_per_graph * G
    e_per_graph = 96
    E = e_per_graph * G

    keys = jax.random.split(key, 4 + num_layers)
    x = jax.random.normal(keys[0], (N, num_features), jnp.float32)
    edge_attr = jax.random.normal(keys[1], (E, num_edge_attr), jnp.float32)

    # edges stay inside their own graph
    src_parts, dst_parts = [], []
    for g in range(G):
        ks, kd = jax.random.split(jax.random.fold_in(keys[2], g))
        src_parts.append(jax.random.randint(ks, (e_per_graph,), 0, n_per_graph) + g * n_per_graph)
        dst_parts.append(jax.random.randint(kd, (e_per_graph,), 0, n_per_graph) + g * n_per_graph)
    edge_index = jnp.stack([jnp.concatenate(src_parts),
                            jnp.concatenate(dst_parts)], axis=0).astype(jnp.int32)
    batch = jnp.repeat(jnp.arange(G, dtype=jnp.int32), n_per_graph)

    layer_params = []
    for l in range(num_layers):
        in_dim = num_features if l == 0 else dim
        layer_params.append(init_layer_params(keys[3 + l], in_dim, dim, num_channels,
                                              num_edge_attr))
    lstm_params = init_lstm_params(jax.random.fold_in(key, 12345), dim)

    out = jax.block_until_ready(
        jkmcnwm_forward(x, edge_index, edge_attr, batch, layer_params, lstm_params, G))
    assert out.shape == (G, 2 * dim)

    # tight check vs a reference that mirrors the kernel's deliberate bf16 rounding points
    ref_emul = jax.block_until_ready(
        reference_forward_emulated(x, edge_index, edge_attr, batch, layer_params, lstm_params, G))
    np.testing.assert_allclose(np.asarray(out), np.asarray(ref_emul), rtol=1e-2, atol=1e-2)

    # sanity check vs the straight f32 transcription of the PyTorch module (bf16-operand MXU
    # matmuls compound over layers + Set2Set attention, so only a coarse bound is asserted)
    ref_f32 = jax.block_until_ready(
        reference_forward_f32(x, edge_index, edge_attr, batch, layer_params, lstm_params, G))
    max_diff = float(np.max(np.abs(np.asarray(out) - np.asarray(ref_f32))))
    assert max_diff < 0.25, f"kernel deviates from f32 reference by {max_diff}"

    print("KERNEL_OK")
</pallas_src>

<mosaic_0001>
module attributes {stable_mosaic.version = 11 : i64} {
  func.func @fused_gnn_kernel(%arg0: memref<16x128xf32, #tpu.memory_space<vmem>>, %arg1: memref<128x256xbf16, #tpu.memory_space<vmem>>, %arg2: memref<256x128xbf16, #tpu.memory_space<vmem>>, %arg3: memref<6x256xf32, #tpu.memory_space<vmem>>, %arg4: memref<2x128xf32, #tpu.memory_space<vmem>>, %arg5: memref<3x16x32xbf16, #tpu.memory_space<vmem>>, %arg6: memref<3x16x16xbf16, #tpu.memory_space<vmem>>, %arg7: memref<3x16x1xf32, #tpu.memory_space<vmem>>, %arg8: memref<3x16x16xbf16, #tpu.memory_space<vmem>>, %arg9: memref<3x16x1xf32, #tpu.memory_space<vmem>>, %arg10: memref<3x16x1xf32, #tpu.memory_space<vmem>>, %arg11: memref<3x16x1xf32, #tpu.memory_space<vmem>>, %arg12: memref<32x64xf32, #tpu.memory_space<vmem>>, %arg13: memref<16x64xf32, #tpu.memory_space<vmem>>, %arg14: memref<1x64xf32, #tpu.memory_space<vmem>>, %arg15: memref<1x64xf32, #tpu.memory_space<vmem>>, %arg16: memref<16x64xf32, #tpu.memory_space<vmem>>, %arg17: memref<16x64xf32, #tpu.memory_space<vmem>>, %arg18: memref<1x64xf32, #tpu.memory_space<vmem>>, %arg19: memref<1x64xf32, #tpu.memory_space<vmem>>, %arg20: memref<2x128xf32, #tpu.memory_space<vmem>>) attributes {dimension_semantics = [], scalar_prefetch = 0 : i64, scratch_operands = 0 : i64, tpu.core_type = #tpu.core_type<tc>} {
    %c0 = arith.constant 0 : index
    %c0_0 = arith.constant 0 : index
    %0 = vector.load %arg4[%c0, %c0_0] : memref<2x128xf32, #tpu.memory_space<vmem>>, vector<2x128xf32>
    %cst = arith.constant dense<0.000000e+00> : vector<128xf32>
    %1 = vector.multi_reduction <add>, %0, %cst [0] : vector<2x128xf32> to vector<128xf32>
    %2 = vector.shape_cast %1 : vector<128xf32> to vector<1x128xf32>
    %c0_1 = arith.constant 0 : index
    %c0_2 = arith.constant 0 : index
    %3 = vector.load %arg0[%c0_1, %c0_2] : memref<16x128xf32, #tpu.memory_space<vmem>>, vector<16x128xf32>
    %c0_3 = arith.constant 0 : index
    %c0_4 = arith.constant 0 : index
    %4 = vector.load %arg1[%c0_3, %c0_4] : memref<128x256xbf16, #tpu.memory_space<vmem>>, vector<128x256xbf16>
    %c0_5 = arith.constant 0 : index
    %c0_6 = arith.constant 0 : index
    %5 = vector.load %arg2[%c0_5, %c0_6] : memref<256x128xbf16, #tpu.memory_space<vmem>>, vector<256x128xbf16>
    %c0_7 = arith.constant 0 : index
    %c0_8 = arith.constant 0 : index
    %6 = vector.load %arg3[%c0_7, %c0_8] : memref<6x256xf32, #tpu.memory_space<vmem>>, vector<6x256xf32>
    %7 = arith.truncf %3 : vector<16x128xf32> to vector<16x128xbf16>
    %cst_9 = arith.constant dense<0.000000e+00> : vector<16x256xf32>
    %8 = tpu.matmul %7, %4, %cst_9 {dimension_numbers = #tpu.dot_dimension_numbers<[1], [0], [0], [1], [0, 0, 1, 1], [], []>} : vector<16x128xbf16>, vector<128x256xbf16>, vector<16x256xf32> -> vector<16x256xf32>
    %9 = vector.extract_strided_slice %6 {offsets = [0, 0], sizes = [1, 256], strides = [1, 1]} : vector<6x256xf32> to vector<1x256xf32>
    %10 = vector.broadcast %9 : vector<1x256xf32> to vector<16x256xf32>
    %11 = arith.mulf %8, %10 : vector<16x256xf32>
    %12 = vector.extract_strided_slice %6 {offsets = [1, 0], sizes = [1, 256], strides = [1, 1]} : vector<6x256xf32> to vector<1x256xf32>
    %13 = vector.broadcast %12 : vector<1x256xf32> to vector<16x256xf32>
    %14 = arith.mulf %8, %13 : vector<16x256xf32>
    %15 = tpu.concatenate %11, %14 in 0 : vector<16x256xf32>, vector<16x256xf32> -> vector<32x256xf32>
    %16 = arith.truncf %15 : vector<32x256xf32> to vector<32x256xbf16>
    %cst_10 = arith.constant dense<0.000000e+00> : vector<32x128xf32>
    %17 = tpu.matmul %16, %5, %cst_10 {dimension_numbers = #tpu.dot_dimension_numbers<[1], [0], [0], [1], [0, 0, 1, 1], [], []>} : vector<32x256xbf16>, vector<256x128xbf16>, vector<32x128xf32> -> vector<32x128xf32>
    %c0_11 = arith.constant 0 : index
    %c0_12 = arith.constant 0 : index
    %c0_13 = arith.constant 0 : index
    %18 = vector.load %arg5[%c0_11, %c0_12, %c0_13] : memref<3x16x32xbf16, #tpu.memory_space<vmem>>, vector<1x16x32xbf16>
    %19 = vector.shape_cast %18 : vector<1x16x32xbf16> to vector<16x32xbf16>
    %20 = arith.truncf %17 : vector<32x128xf32> to vector<32x128xbf16>
    %cst_14 = arith.constant dense<0.000000e+00> : vector<16x128xf32>
    %21 = tpu.matmul %19, %20, %cst_14 {dimension_numbers = #tpu.dot_dimension_numbers<[1], [0], [0], [1], [0, 0, 1, 1], [], []>} : vector<16x32xbf16>, vector<32x128xbf16>, vector<16x128xf32> -> vector<16x128xf32>
    %c0_15 = arith.constant 0 : index
    %c0_16 = arith.constant 0 : index
    %c0_17 = arith.constant 0 : index
    %22 = vector.load %arg6[%c0_15, %c0_16, %c0_17] : memref<3x16x16xbf16, #tpu.memory_space<vmem>>, vector<1x16x16xbf16>
    %23 = vector.shape_cast %22 : vector<1x16x16xbf16> to vector<16x16xbf16>
    %cst_18 = arith.constant dense<0.000000e+00> : vector<16x128xf32>
    %24 = tpu.matmul %23, %7, %cst_18 {dimension_numbers = #tpu.dot_dimension_numbers<[1], [0], [0], [1], [0, 0, 1, 1], [], []>} : vector<16x16xbf16>, vector<16x128xbf16>, vector<16x128xf32> -> vector<16x128xf32>
    %25 = arith.addf %21, %24 : vector<16x128xf32>
    %c0_19 = arith.constant 0 : index
    %c0_20 = arith.constant 0 : index
    %c0_21 = arith.constant 0 : index
    %26 = vector.load %arg7[%c0_19, %c0_20, %c0_21] : memref<3x16x1xf32, #tpu.memory_space<vmem>>, vector<1x16x1xf32>
    %27 = vector.shape_cast %26 : vector<1x16x1xf32> to vector<16x1xf32>
    %28 = vector.broadcast %27 : vector<16x1xf32> to vector<16x128xf32>
    %29 = arith.addf %25, %28 : vector<16x128xf32>
    %cst_22 = arith.constant 0.000000e+00 : f32
    %30 = vector.broadcast %cst_22 : f32 to vector<16x128xf32>
    %31 = arith.cmpf ogt, %29, %30 : vector<16x128xf32>
    %cst_23 = arith.constant 0.00999999977 : f32
    %32 = vector.broadcast %cst_23 : f32 to vector<16x128xf32>
    %33 = arith.mulf %32, %29 : vector<16x128xf32>
    %34 = arith.select %31, %29, %33 : vector<16x128xi1>, vector<16x128xf32>
    %c0_24 = arith.constant 0 : index
    %c0_25 = arith.constant 0 : index
    %c0_26 = arith.constant 0 : index
    %35 = vector.load %arg8[%c0_24, %c0_25, %c0_26] : memref<3x16x16xbf16, #tpu.memory_space<vmem>>, vector<1x16x16xbf16>
    %36 = vector.shape_cast %35 : vector<1x16x16xbf16> to vector<16x16xbf16>
    %37 = arith.truncf %34 : vector<16x128xf32> to vector<16x128xbf16>
    %cst_27 = arith.constant dense<0.000000e+00> : vector<16x128xf32>
    %38 = tpu.matmul %36, %37, %cst_27 {dimension_numbers = #tpu.dot_dimension_numbers<[1], [0], [0], [1], [0, 0, 1, 1], [], []>} : vector<16x16xbf16>, vector<16x128xbf16>, vector<16x128xf32> -> vector<16x128xf32>
    %c0_28 = arith.constant 0 : index
    %c0_29 = arith.constant 0 : index
    %c0_30 = arith.constant 0 : index
    %39 = vector.load %arg9[%c0_28, %c0_29, %c0_30] : memref<3x16x1xf32, #tpu.memory_space<vmem>>, vector<1x16x1xf32>
    %40 = vector.shape_cast %39 : vector<1x16x1xf32> to vector<16x1xf32>
    %41 = vector.broadcast %40 : vector<16x1xf32> to vector<16x128xf32>
    %42 = arith.addf %38, %41 : vector<16x128xf32>
    %cst_31 = arith.constant 0.000000e+00 : f32
    %43 = vector.broadcast %cst_31 : f32 to vector<16x128xf32>
    %44 = arith.cmpf ogt, %42, %43 : vector<16x128xf32>
    %cst_32 = arith.constant 0.00999999977 : f32
    %45 = vector.broadcast %cst_32 : f32 to vector<16x128xf32>
    %46 = arith.mulf %45, %42 : vector<16x128xf32>
    %47 = arith.select %44, %42, %46 : vector<16x128xi1>, vector<16x128xf32>
    %48 = vector.broadcast %2 : vector<1x128xf32> to vector<16x128xf32>
    %49 = arith.mulf %47, %48 : vector<16x128xf32>
    %cst_33 = arith.constant dense<0.000000e+00> : vector<16xf32>
    %50 = vector.multi_reduction <add>, %49, %cst_33 [1] : vector<16x128xf32> to vector<16xf32>
    %51 = vector.shape_cast %50 : vector<16xf32> to vector<16x1xf32>
    %cst_34 = arith.constant 7.812500e-03 : f32
    %52 = vector.broadcast %cst_34 : f32 to vector<16x1xf32>
    %53 = arith.mulf %51, %52 : vector<16x1xf32>
    %54 = vector.broadcast %53 : vector<16x1xf32> to vector<16x128xf32>
    %55 = arith.subf %47, %54 : vector<16x128xf32>
    %56 = arith.mulf %55, %55 : vector<16x128xf32>
    %57 = vector.broadcast %2 : vector<1x128xf32> to vector<16x128xf32>
    %58 = arith.mulf %56, %57 : vector<16x128xf32>
    %cst_35 = arith.constant dense<0.000000e+00> : vector<16xf32>
    %59 = vector.multi_reduction <add>, %58, %cst_35 [1] : vector<16x128xf32> to vector<16xf32>
    %60 = vector.shape_cast %59 : vector<16xf32> to vector<16x1xf32>
    %cst_36 = arith.constant 7.812500e-03 : f32
    %61 = vector.broadcast %cst_36 : f32 to vector<16x1xf32>
    %62 = arith.mulf %60, %61 : vector<16x1xf32>
    %cst_37 = arith.constant 9.99999974E-6 : f32
    %63 = vector.broadcast %cst_37 : f32 to vector<16x1xf32>
    %64 = arith.addf %62, %63 : vector<16x1xf32>
    %65 = math.rsqrt %64 : vector<16x1xf32>
    %66 = vector.broadcast %65 : vector<16x1xf32> to vector<16x128xf32>
    %67 = arith.mulf %55, %66 : vector<16x128xf32>
    %c0_38 = arith.constant 0 : index
    %c0_39 = arith.constant 0 : index
    %c0_40 = arith.constant 0 : index
    %68 = vector.load %arg10[%c0_38, %c0_39, %c0_40] : memref<3x16x1xf32, #tpu.memory_space<vmem>>, vector<1x16x1xf32>
    %69 = vector.shape_cast %68 : vector<1x16x1xf32> to vector<16x1xf32>
    %70 = vector.broadcast %69 : vector<16x1xf32> to vector<16x128xf32>
    %71 = arith.mulf %67, %70 : vector<16x128xf32>
    %c0_41 = arith.constant 0 : index
    %c0_42 = arith.constant 0 : index
    %c0_43 = arith.constant 0 : index
    %72 = vector.load %arg11[%c0_41, %c0_42, %c0_43] : memref<3x16x1xf32, #tpu.memory_space<vmem>>, vector<1x16x1xf32>
    %73 = vector.shape_cast %72 : vector<1x16x1xf32> to vector<16x1xf32>
    %74 = vector.broadcast %73 : vector<16x1xf32> to vector<16x128xf32>
    %75 = arith.addf %71, %74 : vector<16x128xf32>
    %76 = arith.truncf %75 : vector<16x128xf32> to vector<16x128xbf16>
    %cst_44 = arith.constant dense<0.000000e+00> : vector<16x256xf32>
    %77 = tpu.matmul %76, %4, %cst_44 {dimension_numbers = #tpu.dot_dimension_numbers<[1], [0], [0], [1], [0, 0, 1, 1], [], []>} : vector<16x128xbf16>, vector<128x256xbf16>, vector<16x256xf32> -> vector<16x256xf32>
    %78 = vector.extract_strided_slice %6 {offsets = [2, 0], sizes = [1, 256], strides = [1, 1]} : vector<6x256xf32> to vector<1x256xf32>
    %79 = vector.broadcast %78 : vector<1x256xf32> to vector<16x256xf32>
    %80 = arith.mulf %77, %79 : vector<16x256xf32>
    %81 = vector.extract_strided_slice %6 {offsets = [3, 0], sizes = [1, 256], strides = [1, 1]} : vector<6x256xf32> to vector<1x256xf32>
    %82 = vector.broadcast %81 : vector<1x256xf32> to vector<16x256xf32>
    %83 = arith.mulf %77, %82 : vector<16x256xf32>
    %84 = tpu.concatenate %80, %83 in 0 : vector<16x256xf32>, vector<16x256xf32> -> vector<32x256xf32>
    %85 = arith.truncf %84 : vector<32x256xf32> to vector<32x256xbf16>
    %cst_45 = arith.constant dense<0.000000e+00> : vector<32x128xf32>
    %86 = tpu.matmul %85, %5, %cst_45 {dimension_numbers = #tpu.dot_dimension_numbers<[1], [0], [0], [1], [0, 0, 1, 1], [], []>} : vector<32x256xbf16>, vector<256x128xbf16>, vector<32x128xf32> -> vector<32x128xf32>
    %c1 = arith.constant 1 : index
    %c0_46 = arith.constant 0 : index
    %c0_47 = arith.constant 0 : index
    %87 = vector.load %arg5[%c1, %c0_46, %c0_47] : memref<3x16x32xbf16, #tpu.memory_space<vmem>>, vector<1x16x32xbf16>
    %88 = vector.shape_cast %87 : vector<1x16x32xbf16> to vector<16x32xbf16>
    %89 = arith.truncf %86 : vector<32x128xf32> to vector<32x128xbf16>
    %cst_48 = arith.constant dense<0.000000e+00> : vector<16x128xf32>
    %90 = tpu.matmul %88, %89, %cst_48 {dimension_numbers = #tpu.dot_dimension_numbers<[1], [0], [0], [1], [0, 0, 1, 1], [], []>} : vector<16x32xbf16>, vector<32x128xbf16>, vector<16x128xf32> -> vector<16x128xf32>
    %c1_49 = arith.constant 1 : index
    %c0_50 = arith.constant 0 : index
    %c0_51 = arith.constant 0 : index
    %91 = vector.load %arg6[%c1_49, %c0_50, %c0_51] : memref<3x16x16xbf16, #tpu.memory_space<vmem>>, vector<1x16x16xbf16>
    %92 = vector.shape_cast %91 : vector<1x16x16xbf16> to vector<16x16xbf16>
    %cst_52 = arith.constant dense<0.000000e+00> : vector<16x128xf32>
    %93 = tpu.matmul %92, %76, %cst_52 {dimension_numbers = #tpu.dot_dimension_numbers<[1], [0], [0], [1], [0, 0, 1, 1], [], []>} : vector<16x16xbf16>, vector<16x128xbf16>, vector<16x128xf32> -> vector<16x128xf32>
    %94 = arith.addf %90, %93 : vector<16x128xf32>
    %c1_53 = arith.constant 1 : index
    %c0_54 = arith.constant 0 : index
    %c0_55 = arith.constant 0 : index
    %95 = vector.load %arg7[%c1_53, %c0_54, %c0_55] : memref<3x16x1xf32, #tpu.memory_space<vmem>>, vector<1x16x1xf32>
    %96 = vector.shape_cast %95 : vector<1x16x1xf32> to vector<16x1xf32>
    %97 = vector.broadcast %96 : vector<16x1xf32> to vector<16x128xf32>
    %98 = arith.addf %94, %97 : vector<16x128xf32>
    %cst_56 = arith.constant 0.000000e+00 : f32
    %99 = vector.broadcast %cst_56 : f32 to vector<16x128xf32>
    %100 = arith.cmpf ogt, %98, %99 : vector<16x128xf32>
    %cst_57 = arith.constant 0.00999999977 : f32
    %101 = vector.broadcast %cst_57 : f32 to vector<16x128xf32>
    %102 = arith.mulf %101, %98 : vector<16x128xf32>
    %103 = arith.select %100, %98, %102 : vector<16x128xi1>, vector<16x128xf32>
    %c1_58 = arith.constant 1 : index
    %c0_59 = arith.constant 0 : index
    %c0_60 = arith.constant 0 : index
    %104 = vector.load %arg8[%c1_58, %c0_59, %c0_60] : memref<3x16x16xbf16, #tpu.memory_space<vmem>>, vector<1x16x16xbf16>
    %105 = vector.shape_cast %104 : vector<1x16x16xbf16> to vector<16x16xbf16>
    %106 = arith.truncf %103 : vector<16x128xf32> to vector<16x128xbf16>
    %cst_61 = arith.constant dense<0.000000e+00> : vector<16x128xf32>
    %107 = tpu.matmul %105, %106, %cst_61 {dimension_numbers = #tpu.dot_dimension_numbers<[1], [0], [0], [1], [0, 0, 1, 1], [], []>} : vector<16x16xbf16>, vector<16x128xbf16>, vector<16x128xf32> -> vector<16x128xf32>
    %c1_62 = arith.constant 1 : index
    %c0_63 = arith.constant 0 : index
    %c0_64 = arith.constant 0 : index
    %108 = vector.load %arg9[%c1_62, %c0_63, %c0_64] : memref<3x16x1xf32, #tpu.memory_space<vmem>>, vector<1x16x1xf32>
    %109 = vector.shape_cast %108 : vector<1x16x1xf32> to vector<16x1xf32>
    %110 = vector.broadcast %109 : vector<16x1xf32> to vector<16x128xf32>
    %111 = arith.addf %107, %110 : vector<16x128xf32>
    %cst_65 = arith.constant 0.000000e+00 : f32
    %112 = vector.broadcast %cst_65 : f32 to vector<16x128xf32>
    %113 = arith.cmpf ogt, %111, %112 : vector<16x128xf32>
    %cst_66 = arith.constant 0.00999999977 : f32
    %114 = vector.broadcast %cst_66 : f32 to vector<16x128xf32>
    %115 = arith.mulf %114, %111 : vector<16x128xf32>
    %116 = arith.select %113, %111, %115 : vector<16x128xi1>, vector<16x128xf32>
    %117 = vector.broadcast %2 : vector<1x128xf32> to vector<16x128xf32>
    %118 = arith.mulf %116, %117 : vector<16x128xf32>
    %cst_67 = arith.constant dense<0.000000e+00> : vector<16xf32>
    %119 = vector.multi_reduction <add>, %118, %cst_67 [1] : vector<16x128xf32> to vector<16xf32>
    %120 = vector.shape_cast %119 : vector<16xf32> to vector<16x1xf32>
    %cst_68 = arith.constant 7.812500e-03 : f32
    %121 = vector.broadcast %cst_68 : f32 to vector<16x1xf32>
    %122 = arith.mulf %120, %121 : vector<16x1xf32>
    %123 = vector.broadcast %122 : vector<16x1xf32> to vector<16x128xf32>
    %124 = arith.subf %116, %123 : vector<16x128xf32>
    %125 = arith.mulf %124, %124 : vector<16x128xf32>
    %126 = vector.broadcast %2 : vector<1x128xf32> to vector<16x128xf32>
    %127 = arith.mulf %125, %126 : vector<16x128xf32>
    %cst_69 = arith.constant dense<0.000000e+00> : vector<16xf32>
    %128 = vector.multi_reduction <add>, %127, %cst_69 [1] : vector<16x128xf32> to vector<16xf32>
    %129 = vector.shape_cast %128 : vector<16xf32> to vector<16x1xf32>
    %cst_70 = arith.constant 7.812500e-03 : f32
    %130 = vector.broadcast %cst_70 : f32 to vector<16x1xf32>
    %131 = arith.mulf %129, %130 : vector<16x1xf32>
    %cst_71 = arith.constant 9.99999974E-6 : f32
    %132 = vector.broadcast %cst_71 : f32 to vector<16x1xf32>
    %133 = arith.addf %131, %132 : vector<16x1xf32>
    %134 = math.rsqrt %133 : vector<16x1xf32>
    %135 = vector.broadcast %134 : vector<16x1xf32> to vector<16x128xf32>
    %136 = arith.mulf %124, %135 : vector<16x128xf32>
    %c1_72 = arith.constant 1 : index
    %c0_73 = arith.constant 0 : index
    %c0_74 = arith.constant 0 : index
    %137 = vector.load %arg10[%c1_72, %c0_73, %c0_74] : memref<3x16x1xf32, #tpu.memory_space<vmem>>, vector<1x16x1xf32>
    %138 = vector.shape_cast %137 : vector<1x16x1xf32> to vector<16x1xf32>
    %139 = vector.broadcast %138 : vector<16x1xf32> to vector<16x128xf32>
    %140 = arith.mulf %136, %139 : vector<16x128xf32>
    %c1_75 = arith.constant 1 : index
    %c0_76 = arith.constant 0 : index
    %c0_77 = arith.constant 0 : index
    %141 = vector.load %arg11[%c1_75, %c0_76, %c0_77] : memref<3x16x1xf32, #tpu.memory_space<vmem>>, vector<1x16x1xf32>
    %142 = vector.shape_cast %141 : vector<1x16x1xf32> to vector<16x1xf32>
    %143 = vector.broadcast %142 : vector<16x1xf32> to vector<16x128xf32>
    %144 = arith.addf %140, %143 : vector<16x128xf32>
    %145 = arith.maximumf %75, %144 : vector<16x128xf32>
    %146 = arith.truncf %144 : vector<16x128xf32> to vector<16x128xbf16>
    %cst_78 = arith.constant dense<0.000000e+00> : vector<16x256xf32>
    %147 = tpu.matmul %146, %4, %cst_78 {dimension_numbers = #tpu.dot_dimension_numbers<[1], [0], [0], [1], [0, 0, 1, 1], [], []>} : vector<16x128xbf16>, vector<128x256xbf16>, vector<16x256xf32> -> vector<16x256xf32>
    %148 = vector.extract_strided_slice %6 {offsets = [4, 0], sizes = [1, 256], strides = [1, 1]} : vector<6x256xf32> to vector<1x256xf32>
    %149 = vector.broadcast %148 : vector<1x256xf32> to vector<16x256xf32>
    %150 = arith.mulf %147, %149 : vector<16x256xf32>
    %151 = vector.extract_strided_slice %6 {offsets = [5, 0], sizes = [1, 256], strides = [1, 1]} : vector<6x256xf32> to vector<1x256xf32>
    %152 = vector.broadcast %151 : vector<1x256xf32> to vector<16x256xf32>
    %153 = arith.mulf %147, %152 : vector<16x256xf32>
    %154 = tpu.concatenate %150, %153 in 0 : vector<16x256xf32>, vector<16x256xf32> -> vector<32x256xf32>
    %155 = arith.truncf %154 : vector<32x256xf32> to vector<32x256xbf16>
    %cst_79 = arith.constant dense<0.000000e+00> : vector<32x128xf32>
    %156 = tpu.matmul %155, %5, %cst_79 {dimension_numbers = #tpu.dot_dimension_numbers<[1], [0], [0], [1], [0, 0, 1, 1], [], []>} : vector<32x256xbf16>, vector<256x128xbf16>, vector<32x128xf32> -> vector<32x128xf32>
    %c2 = arith.constant 2 : index
    %c0_80 = arith.constant 0 : index
    %c0_81 = arith.constant 0 : index
    %157 = vector.load %arg5[%c2, %c0_80, %c0_81] : memref<3x16x32xbf16, #tpu.memory_space<vmem>>, vector<1x16x32xbf16>
    %158 = vector.shape_cast %157 : vector<1x16x32xbf16> to vector<16x32xbf16>
    %159 = arith.truncf %156 : vector<32x128xf32> to vector<32x128xbf16>
    %cst_82 = arith.constant dense<0.000000e+00> : vector<16x128xf32>
    %160 = tpu.matmul %158, %159, %cst_82 {dimension_numbers = #tpu.dot_dimension_numbers<[1], [0], [0], [1], [0, 0, 1, 1], [], []>} : vector<16x32xbf16>, vector<32x128xbf16>, vector<16x128xf32> -> vector<16x128xf32>
    %c2_83 = arith.constant 2 : index
    %c0_84 = arith.constant 0 : index
    %c0_85 = arith.constant 0 : index
    %161 = vector.load %arg6[%c2_83, %c0_84, %c0_85] : memref<3x16x16xbf16, #tpu.memory_space<vmem>>, vector<1x16x16xbf16>
    %162 = vector.shape_cast %161 : vector<1x16x16xbf16> to vector<16x16xbf16>
    %cst_86 = arith.constant dense<0.000000e+00> : vector<16x128xf32>
    %163 = tpu.matmul %162, %146, %cst_86 {dimension_numbers = #tpu.dot_dimension_numbers<[1], [0], [0], [1], [0, 0, 1, 1], [], []>} : vector<16x16xbf16>, vector<16x128xbf16>, vector<16x128xf32> -> vector<16x128xf32>
    %164 = arith.addf %160, %163 : vector<16x128xf32>
    %c2_87 = arith.constant 2 : index
    %c0_88 = arith.constant 0 : index
    %c0_89 = arith.constant 0 : index
    %165 = vector.load %arg7[%c2_87, %c0_88, %c0_89] : memref<3x16x1xf32, #tpu.memory_space<vmem>>, vector<1x16x1xf32>
    %166 = vector.shape_cast %165 : vector<1x16x1xf32> to vector<16x1xf32>
    %167 = vector.broadcast %166 : vector<16x1xf32> to vector<16x128xf32>
    %168 = arith.addf %164, %167 : vector<16x128xf32>
    %cst_90 = arith.constant 0.000000e+00 : f32
    %169 = vector.broadcast %cst_90 : f32 to vector<16x128xf32>
    %170 = arith.cmpf ogt, %168, %169 : vector<16x128xf32>
    %cst_91 = arith.constant 0.00999999977 : f32
    %171 = vector.broadcast %cst_91 : f32 to vector<16x128xf32>
    %172 = arith.mulf %171, %168 : vector<16x128xf32>
    %173 = arith.select %170, %168, %172 : vector<16x128xi1>, vector<16x128xf32>
    %c2_92 = arith.constant 2 : index
    %c0_93 = arith.constant 0 : index
    %c0_94 = arith.constant 0 : index
    %174 = vector.load %arg8[%c2_92, %c0_93, %c0_94] : memref<3x16x16xbf16, #tpu.memory_space<vmem>>, vector<1x16x16xbf16>
    %175 = vector.shape_cast %174 : vector<1x16x16xbf16> to vector<16x16xbf16>
    %176 = arith.truncf %173 : vector<16x128xf32> to vector<16x128xbf16>
    %cst_95 = arith.constant dense<0.000000e+00> : vector<16x128xf32>
    %177 = tpu.matmul %175, %176, %cst_95 {dimension_numbers = #tpu.dot_dimension_numbers<[1], [0], [0], [1], [0, 0, 1, 1], [], []>} : vector<16x16xbf16>, vector<16x128xbf16>, vector<16x128xf32> -> vector<16x128xf32>
    %c2_96 = arith.constant 2 : index
    %c0_97 = arith.constant 0 : index
    %c0_98 = arith.constant 0 : index
    %178 = vector.load %arg9[%c2_96, %c0_97, %c0_98] : memref<3x16x1xf32, #tpu.memory_space<vmem>>, vector<1x16x1xf32>
    %179 = vector.shape_cast %178 : vector<1x16x1xf32> to vector<16x1xf32>
    %180 = vector.broadcast %179 : vector<16x1xf32> to vector<16x128xf32>
    %181 = arith.addf %177, %180 : vector<16x128xf32>
    %cst_99 = arith.constant 0.000000e+00 : f32
    %182 = vector.broadcast %cst_99 : f32 to vector<16x128xf32>
    %183 = arith.cmpf ogt, %181, %182 : vector<16x128xf32>
    %cst_100 = arith.constant 0.00999999977 : f32
    %184 = vector.broadcast %cst_100 : f32 to vector<16x128xf32>
    %185 = arith.mulf %184, %181 : vector<16x128xf32>
    %186 = arith.select %183, %181, %185 : vector<16x128xi1>, vector<16x128xf32>
    %187 = vector.broadcast %2 : vector<1x128xf32> to vector<16x128xf32>
    %188 = arith.mulf %186, %187 : vector<16x128xf32>
    %cst_101 = arith.constant dense<0.000000e+00> : vector<16xf32>
    %189 = vector.multi_reduction <add>, %188, %cst_101 [1] : vector<16x128xf32> to vector<16xf32>
    %190 = vector.shape_cast %189 : vector<16xf32> to vector<16x1xf32>
    %cst_102 = arith.constant 7.812500e-03 : f32
    %191 = vector.broadcast %cst_102 : f32 to vector<16x1xf32>
    %192 = arith.mulf %190, %191 : vector<16x1xf32>
    %193 = vector.broadcast %192 : vector<16x1xf32> to vector<16x128xf32>
    %194 = arith.subf %186, %193 : vector<16x128xf32>
    %195 = arith.mulf %194, %194 : vector<16x128xf32>
    %196 = vector.broadcast %2 : vector<1x128xf32> to vector<16x128xf32>
    %197 = arith.mulf %195, %196 : vector<16x128xf32>
    %cst_103 = arith.constant dense<0.000000e+00> : vector<16xf32>
    %198 = vector.multi_reduction <add>, %197, %cst_103 [1] : vector<16x128xf32> to vector<16xf32>
    %199 = vector.shape_cast %198 : vector<16xf32> to vector<16x1xf32>
    %cst_104 = arith.constant 7.812500e-03 : f32
    %200 = vector.broadcast %cst_104 : f32 to vector<16x1xf32>
    %201 = arith.mulf %199, %200 : vector<16x1xf32>
    %cst_105 = arith.constant 9.99999974E-6 : f32
    %202 = vector.broadcast %cst_105 : f32 to vector<16x1xf32>
    %203 = arith.addf %201, %202 : vector<16x1xf32>
    %204 = math.rsqrt %203 : vector<16x1xf32>
    %205 = vector.broadcast %204 : vector<16x1xf32> to vector<16x128xf32>
    %206 = arith.mulf %194, %205 : vector<16x128xf32>
    %c2_106 = arith.constant 2 : index
    %c0_107 = arith.constant 0 : index
    %c0_108 = arith.constant 0 : index
    %207 = vector.load %arg10[%c2_106, %c0_107, %c0_108] : memref<3x16x1xf32, #tpu.memory_space<vmem>>, vector<1x16x1xf32>
    %208 = vector.shape_cast %207 : vector<1x16x1xf32> to vector<16x1xf32>
    %209 = vector.broadcast %208 : vector<16x1xf32> to vector<16x128xf32>
    %210 = arith.mulf %206, %209 : vector<16x128xf32>
    %c2_109 = arith.constant 2 : index
    %c0_110 = arith.constant 0 : index
    %c0_111 = arith.constant 0 : index
    %211 = vector.load %arg11[%c2_109, %c0_110, %c0_111] : memref<3x16x1xf32, #tpu.memory_space<vmem>>, vector<1x16x1xf32>
    %212 = vector.shape_cast %211 : vector<1x16x1xf32> to vector<16x1xf32>
    %213 = vector.broadcast %212 : vector<16x1xf32> to vector<16x128xf32>
    %214 = arith.addf %210, %213 : vector<16x128xf32>
    %215 = arith.maximumf %145, %214 : vector<16x128xf32>
    %cst_112 = arith.constant 5.000000e-01 : f32
    %216 = vector.broadcast %cst_112 : f32 to vector<2x128xf32>
    %217 = arith.cmpf ogt, %0, %216 : vector<2x128xf32>
    %c0_113 = arith.constant 0 : index
    %c0_114 = arith.constant 0 : index
    %218 = vector.load %arg12[%c0_113, %c0_114] : memref<32x64xf32, #tpu.memory_space<vmem>>, vector<32x64xf32>
    %c0_115 = arith.constant 0 : index
    %c0_116 = arith.constant 0 : index
    %219 = vector.load %arg13[%c0_115, %c0_116] : memref<16x64xf32, #tpu.memory_space<vmem>>, vector<16x64xf32>
    %c0_117 = arith.constant 0 : index
    %c0_118 = arith.constant 0 : index
    %220 = vector.load %arg14[%c0_117, %c0_118] : memref<1x64xf32, #tpu.memory_space<vmem>>, vector<1x64xf32>
    %c0_119 = arith.constant 0 : index
    %c0_120 = arith.constant 0 : index
    %221 = vector.load %arg15[%c0_119, %c0_120] : memref<1x64xf32, #tpu.memory_space<vmem>>, vector<1x64xf32>
    %c0_121 = arith.constant 0 : index
    %c0_122 = arith.constant 0 : index
    %222 = vector.load %arg16[%c0_121, %c0_122] : memref<16x64xf32, #tpu.memory_space<vmem>>, vector<16x64xf32>
    %c0_123 = arith.constant 0 : index
    %c0_124 = arith.constant 0 : index
    %223 = vector.load %arg17[%c0_123, %c0_124] : memref<16x64xf32, #tpu.memory_space<vmem>>, vector<16x64xf32>
    %c0_125 = arith.constant 0 : index
    %c0_126 = arith.constant 0 : index
    %224 = vector.load %arg18[%c0_125, %c0_126] : memref<1x64xf32, #tpu.memory_space<vmem>>, vector<1x64xf32>
    %c0_127 = arith.constant 0 : index
    %c0_128 = arith.constant 0 : index
    %225 = vector.load %arg19[%c0_127, %c0_128] : memref<1x64xf32, #tpu.memory_space<vmem>>, vector<1x64xf32>
    %cst_129 = arith.constant 0.000000e+00 : f32
    %226 = vector.broadcast %cst_129 : f32 to vector<2x16xf32>
    %cst_130 = arith.constant 0.000000e+00 : f32
    %227 = vector.broadcast %cst_130 : f32 to vector<2x16xf32>
    %cst_131 = arith.constant 0.000000e+00 : f32
    %228 = vector.broadcast %cst_131 : f32 to vector<2x16xf32>
    %cst_132 = arith.constant 0.000000e+00 : f32
    %229 = vector.broadcast %cst_132 : f32 to vector<2x16xf32>
    %cst_133 = arith.constant 0.000000e+00 : f32
    %230 = vector.broadcast %cst_133 : f32 to vector<2x16xf32>
    %cst_134 = arith.constant 0.000000e+00 : f32
    %231 = vector.broadcast %cst_134 : f32 to vector<2x16xf32>
    %232 = vector.extract_strided_slice %218 {offsets = [0, 0], sizes = [16, 64], strides = [1, 1]} : vector<32x64xf32> to vector<16x64xf32>
    %cst_135 = arith.constant dense<0.000000e+00> : vector<2x64xf32>
    %233 = tpu.matmul %230, %232, %cst_135 {dimension_numbers = #tpu.dot_dimension_numbers<[1], [0], [0], [1], [0, 0, 1, 1], [], []>} : vector<2x16xf32>, vector<16x64xf32>, vector<2x64xf32> -> vector<2x64xf32>
    %234 = vector.extract_strided_slice %218 {offsets = [16, 0], sizes = [16, 64], strides = [1, 1]} : vector<32x64xf32> to vector<16x64xf32>
    %cst_136 = arith.constant dense<0.000000e+00> : vector<2x64xf32>
    %235 = tpu.matmul %231, %234, %cst_136 {dimension_numbers = #tpu.dot_dimension_numbers<[1], [0], [0], [1], [0, 0, 1, 1], [], []>} : vector<2x16xf32>, vector<16x64xf32>, vector<2x64xf32> -> vector<2x64xf32>
    %236 = arith.addf %233, %235 : vector<2x64xf32>
    %237 = vector.broadcast %220 : vector<1x64xf32> to vector<2x64xf32>
    %238 = arith.addf %236, %237 : vector<2x64xf32>
    %cst_137 = arith.constant dense<0.000000e+00> : vector<2x64xf32>
    %239 = tpu.matmul %226, %219, %cst_137 {dimension_numbers = #tpu.dot_dimension_numbers<[1], [0], [0], [1], [0, 0, 1, 1], [], []>} : vector<2x16xf32>, vector<16x64xf32>, vector<2x64xf32> -> vector<2x64xf32>
    %240 = arith.addf %238, %239 : vector<2x64xf32>
    %241 = vector.broadcast %221 : vector<1x64xf32> to vector<2x64xf32>
    %242 = arith.addf %240, %241 : vector<2x64xf32>
    %243 = vector.extract_strided_slice %242 {offsets = [0, 0], sizes = [2, 16], strides = [1, 1]} : vector<2x64xf32> to vector<2x16xf32>
    %244 = arith.negf %243 : vector<2x16xf32>
    %245 = math.exp %244 : vector<2x16xf32>
    %cst_138 = arith.constant 1.000000e+00 : f32
    %246 = vector.broadcast %cst_138 : f32 to vector<2x16xf32>
    %247 = arith.addf %246, %245 : vector<2x16xf32>
    %248 = arith.divf %246, %247 : vector<2x16xf32>
    %249 = vector.extract_strided_slice %242 {offsets = [0, 16], sizes = [2, 16], strides = [1, 1]} : vector<2x64xf32> to vector<2x16xf32>
    %250 = arith.negf %249 : vector<2x16xf32>
    %251 = math.exp %250 : vector<2x16xf32>
    %cst_139 = arith.constant 1.000000e+00 : f32
    %252 = vector.broadcast %cst_139 : f32 to vector<2x16xf32>
    %253 = arith.addf %252, %251 : vector<2x16xf32>
    %254 = arith.divf %252, %253 : vector<2x16xf32>
    %255 = vector.extract_strided_slice %242 {offsets = [0, 32], sizes = [2, 16], strides = [1, 1]} : vector<2x64xf32> to vector<2x16xf32>
    %256 = math.tanh %255 : vector<2x16xf32>
    %257 = vector.extract_strided_slice %242 {offsets = [0, 48], sizes = [2, 16], strides = [1, 1]} : vector<2x64xf32> to vector<2x16xf32>
    %258 = arith.negf %257 : vector<2x16xf32>
    %259 = math.exp %258 : vector<2x16xf32>
    %cst_140 = arith.constant 1.000000e+00 : f32
    %260 = vector.broadcast %cst_140 : f32 to vector<2x16xf32>
    %261 = arith.addf %260, %259 : vector<2x16xf32>
    %262 = arith.divf %260, %261 : vector<2x16xf32>
    %263 = arith.mulf %254, %227 : vector<2x16xf32>
    %264 = arith.mulf %248, %256 : vector<2x16xf32>
    %265 = arith.addf %263, %264 : vector<2x16xf32>
    %266 = math.tanh %265 : vector<2x16xf32>
    %267 = arith.mulf %262, %266 : vector<2x16xf32>
    %cst_141 = arith.constant dense<0.000000e+00> : vector<2x64xf32>
    %268 = tpu.matmul %267, %222, %cst_141 {dimension_numbers = #tpu.dot_dimension_numbers<[1], [0], [0], [1], [0, 0, 1, 1], [], []>} : vector<2x16xf32>, vector<16x64xf32>, vector<2x64xf32> -> vector<2x64xf32>
    %269 = vector.broadcast %224 : vector<1x64xf32> to vector<2x64xf32>
    %270 = arith.addf %268, %269 : vector<2x64xf32>
    %cst_142 = arith.constant dense<0.000000e+00> : vector<2x64xf32>
    %271 = tpu.matmul %228, %223, %cst_142 {dimension_numbers = #tpu.dot_dimension_numbers<[1], [0], [0], [1], [0, 0, 1, 1], [], []>} : vector<2x16xf32>, vector<16x64xf32>, vector<2x64xf32> -> vector<2x64xf32>
    %272 = arith.addf %270, %271 : vector<2x64xf32>
    %273 = vector.broadcast %225 : vector<1x64xf32> to vector<2x64xf32>
    %274 = arith.addf %272, %273 : vector<2x64xf32>
    %275 = vector.extract_strided_slice %274 {offsets = [0, 0], sizes = [2, 16], strides = [1, 1]} : vector<2x64xf32> to vector<2x16xf32>
    %276 = arith.negf %275 : vector<2x16xf32>
    %277 = math.exp %276 : vector<2x16xf32>
    %cst_143 = arith.constant 1.000000e+00 : f32
    %278 = vector.broadcast %cst_143 : f32 to vector<2x16xf32>
    %279 = arith.addf %278, %277 : vector<2x16xf32>
    %280 = arith.divf %278, %279 : vector<2x16xf32>
    %281 = vector.extract_strided_slice %274 {offsets = [0, 16], sizes = [2, 16], strides = [1, 1]} : vector<2x64xf32> to vector<2x16xf32>
    %282 = arith.negf %281 : vector<2x16xf32>
    %283 = math.exp %282 : vector<2x16xf32>
    %cst_144 = arith.constant 1.000000e+00 : f32
    %284 = vector.broadcast %cst_144 : f32 to vector<2x16xf32>
    %285 = arith.addf %284, %283 : vector<2x16xf32>
    %286 = arith.divf %284, %285 : vector<2x16xf32>
    %287 = vector.extract_strided_slice %274 {offsets = [0, 32], sizes = [2, 16], strides = [1, 1]} : vector<2x64xf32> to vector<2x16xf32>
    %288 = math.tanh %287 : vector<2x16xf32>
    %289 = vector.extract_strided_slice %274 {offsets = [0, 48], sizes = [2, 16], strides = [1, 1]} : vector<2x64xf32> to vector<2x16xf32>
    %290 = arith.negf %289 : vector<2x16xf32>
    %291 = math.exp %290 : vector<2x16xf32>
    %cst_145 = arith.constant 1.000000e+00 : f32
    %292 = vector.broadcast %cst_145 : f32 to vector<2x16xf32>
    %293 = arith.addf %292, %291 : vector<2x16xf32>
    %294 = arith.divf %292, %293 : vector<2x16xf32>
    %295 = arith.mulf %286, %229 : vector<2x16xf32>
    %296 = arith.mulf %280, %288 : vector<2x16xf32>
    %297 = arith.addf %295, %296 : vector<2x16xf32>
    %298 = math.tanh %297 : vector<2x16xf32>
    %299 = arith.mulf %294, %298 : vector<2x16xf32>
    %cst_146 = arith.constant dense<0.000000e+00> : vector<2x128xf32>
    %300 = tpu.matmul %299, %215, %cst_146 {dimension_numbers = #tpu.dot_dimension_numbers<[1], [0], [0], [1], [0, 0, 1, 1], [], []>} : vector<2x16xf32>, vector<16x128xf32>, vector<2x128xf32> -> vector<2x128xf32>
    %cst_147 = arith.constant -1.000000e+30 : f32
    %301 = vector.broadcast %cst_147 : f32 to vector<2x128xf32>
    %302 = arith.select %217, %300, %301 : vector<2x128xi1>, vector<2x128xf32>
    %cst_148 = arith.constant dense<0xFF800000> : vector<2xf32>
    %303 = vector.multi_reduction <maximumf>, %302, %cst_148 [1] : vector<2x128xf32> to vector<2xf32>
    %304 = vector.shape_cast %303 : vector<2xf32> to vector<2x1xf32>
    %305 = vector.broadcast %304 : vector<2x1xf32> to vector<2x128xf32>
    %306 = arith.subf %300, %305 : vector<2x128xf32>
    %307 = math.exp %306 : vector<2x128xf32>
    %cst_149 = arith.constant 0.000000e+00 : f32
    %308 = vector.broadcast %cst_149 : f32 to vector<2x128xf32>
    %309 = arith.select %217, %307, %308 : vector<2x128xi1>, vector<2x128xf32>
    %cst_150 = arith.constant dense<0.000000e+00> : vector<2xf32>
    %310 = vector.multi_reduction <add>, %309, %cst_150 [1] : vector<2x128xf32> to vector<2xf32>
    %311 = vector.shape_cast %310 : vector<2xf32> to vector<2x1xf32>
    %cst_151 = arith.constant 1.000000e-16 : f32
    %312 = vector.broadcast %cst_151 : f32 to vector<2x1xf32>
    %313 = arith.addf %311, %312 : vector<2x1xf32>
    %314 = vector.broadcast %313 : vector<2x1xf32> to vector<2x128xf32>
    %315 = arith.divf %309, %314 : vector<2x128xf32>
    %cst_152 = arith.constant dense<0.000000e+00> : vector<2x16xf32>
    %316 = tpu.matmul %315, %215, %cst_152 {dimension_numbers = #tpu.dot_dimension_numbers<[1], [1], [0], [0], [0, 0, 1, 0], [], []>} : vector<2x128xf32>, vector<16x128xf32>, vector<2x16xf32> -> vector<2x16xf32>
    %317 = vector.extract_strided_slice %218 {offsets = [0, 0], sizes = [16, 64], strides = [1, 1]} : vector<32x64xf32> to vector<16x64xf32>
    %cst_153 = arith.constant dense<0.000000e+00> : vector<2x64xf32>
    %318 = tpu.matmul %299, %317, %cst_153 {dimension_numbers = #tpu.dot_dimension_numbers<[1], [0], [0], [1], [0, 0, 1, 1], [], []>} : vector<2x16xf32>, vector<16x64xf32>, vector<2x64xf32> -> vector<2x64xf32>
    %319 = vector.extract_strided_slice %218 {offsets = [16, 0], sizes = [16, 64], strides = [1, 1]} : vector<32x64xf32> to vector<16x64xf32>
    %cst_154 = arith.constant dense<0.000000e+00> : vector<2x64xf32>
    %320 = tpu.matmul %316, %319, %cst_154 {dimension_numbers = #tpu.dot_dimension_numbers<[1], [0], [0], [1], [0, 0, 1, 1], [], []>} : vector<2x16xf32>, vector<16x64xf32>, vector<2x64xf32> -> vector<2x64xf32>
    %321 = arith.addf %318, %320 : vector<2x64xf32>
    %322 = vector.broadcast %220 : vector<1x64xf32> to vector<2x64xf32>
    %323 = arith.addf %321, %322 : vector<2x64xf32>
    %cst_155 = arith.constant dense<0.000000e+00> : vector<2x64xf32>
    %324 = tpu.matmul %267, %219, %cst_155 {dimension_numbers = #tpu.dot_dimension_numbers<[1], [0], [0], [1], [0, 0, 1, 1], [], []>} : vector<2x16xf32>, vector<16x64xf32>, vector<2x64xf32> -> vector<2x64xf32>
    %325 = arith.addf %323, %324 : vector<2x64xf32>
    %326 = vector.broadcast %221 : vector<1x64xf32> to vector<2x64xf32>
    %327 = arith.addf %325, %326 : vector<2x64xf32>
    %328 = vector.extract_strided_slice %327 {offsets = [0, 0], sizes = [2, 16], strides = [1, 1]} : vector<2x64xf32> to vector<2x16xf32>
    %329 = arith.negf %328 : vector<2x16xf32>
    %330 = math.exp %329 : vector<2x16xf32>
    %cst_156 = arith.constant 1.000000e+00 : f32
    %331 = vector.broadcast %cst_156 : f32 to vector<2x16xf32>
    %332 = arith.addf %331, %330 : vector<2x16xf32>
    %333 = arith.divf %331, %332 : vector<2x16xf32>
    %334 = vector.extract_strided_slice %327 {offsets = [0, 16], sizes = [2, 16], strides = [1, 1]} : vector<2x64xf32> to vector<2x16xf32>
    %335 = arith.negf %334 : vector<2x16xf32>
    %336 = math.exp %335 : vector<2x16xf32>
    %cst_157 = arith.constant 1.000000e+00 : f32
    %337 = vector.broadcast %cst_157 : f32 to vector<2x16xf32>
    %338 = arith.addf %337, %336 : vector<2x16xf32>
    %339 = arith.divf %337, %338 : vector<2x16xf32>
    %340 = vector.extract_strided_slice %327 {offsets = [0, 32], sizes = [2, 16], strides = [1, 1]} : vector<2x64xf32> to vector<2x16xf32>
    %341 = math.tanh %340 : vector<2x16xf32>
    %342 = vector.extract_strided_slice %327 {offsets = [0, 48], sizes = [2, 16], strides = [1, 1]} : vector<2x64xf32> to vector<2x16xf32>
    %343 = arith.negf %342 : vector<2x16xf32>
    %344 = math.exp %343 : vector<2x16xf32>
    %cst_158 = arith.constant 1.000000e+00 : f32
    %345 = vector.broadcast %cst_158 : f32 to vector<2x16xf32>
    %346 = arith.addf %345, %344 : vector<2x16xf32>
    %347 = arith.divf %345, %346 : vector<2x16xf32>
    %348 = arith.mulf %339, %265 : vector<2x16xf32>
    %349 = arith.mulf %333, %341 : vector<2x16xf32>
    %350 = arith.addf %348, %349 : vector<2x16xf32>
    %351 = math.tanh %350 : vector<2x16xf32>
    %352 = arith.mulf %347, %351 : vector<2x16xf32>
    %cst_159 = arith.constant dense<0.000000e+00> : vector<2x64xf32>
    %353 = tpu.matmul %352, %222, %cst_159 {dimension_numbers = #tpu.dot_dimension_numbers<[1], [0], [0], [1], [0, 0, 1, 1], [], []>} : vector<2x16xf32>, vector<16x64xf32>, vector<2x64xf32> -> vector<2x64xf32>
    %354 = vector.broadcast %224 : vector<1x64xf32> to vector<2x64xf32>
    %355 = arith.addf %353, %354 : vector<2x64xf32>
    %cst_160 = arith.constant dense<0.000000e+00> : vector<2x64xf32>
    %356 = tpu.matmul %299, %223, %cst_160 {dimension_numbers = #tpu.dot_dimension_numbers<[1], [0], [0], [1], [0, 0, 1, 1], [], []>} : vector<2x16xf32>, vector<16x64xf32>, vector<2x64xf32> -> vector<2x64xf32>
    %357 = arith.addf %355, %356 : vector<2x64xf32>
    %358 = vector.broadcast %225 : vector<1x64xf32> to vector<2x64xf32>
    %359 = arith.addf %357, %358 : vector<2x64xf32>
    %360 = vector.extract_strided_slice %359 {offsets = [0, 0], sizes = [2, 16], strides = [1, 1]} : vector<2x64xf32> to vector<2x16xf32>
    %361 = arith.negf %360 : vector<2x16xf32>
    %362 = math.exp %361 : vector<2x16xf32>
    %cst_161 = arith.constant 1.000000e+00 : f32
    %363 = vector.broadcast %cst_161 : f32 to vector<2x16xf32>
    %364 = arith.addf %363, %362 : vector<2x16xf32>
    %365 = arith.divf %363, %364 : vector<2x16xf32>
    %366 = vector.extract_strided_slice %359 {offsets = [0, 16], sizes = [2, 16], strides = [1, 1]} : vector<2x64xf32> to vector<2x16xf32>
    %367 = arith.negf %366 : vector<2x16xf32>
    %368 = math.exp %367 : vector<2x16xf32>
    %cst_162 = arith.constant 1.000000e+00 : f32
    %369 = vector.broadcast %cst_162 : f32 to vector<2x16xf32>
    %370 = arith.addf %369, %368 : vector<2x16xf32>
    %371 = arith.divf %369, %370 : vector<2x16xf32>
    %372 = vector.extract_strided_slice %359 {offsets = [0, 32], sizes = [2, 16], strides = [1, 1]} : vector<2x64xf32> to vector<2x16xf32>
    %373 = math.tanh %372 : vector<2x16xf32>
    %374 = vector.extract_strided_slice %359 {offsets = [0, 48], sizes = [2, 16], strides = [1, 1]} : vector<2x64xf32> to vector<2x16xf32>
    %375 = arith.negf %374 : vector<2x16xf32>
    %376 = math.exp %375 : vector<2x16xf32>
    %cst_163 = arith.constant 1.000000e+00 : f32
    %377 = vector.broadcast %cst_163 : f32 to vector<2x16xf32>
    %378 = arith.addf %377, %376 : vector<2x16xf32>
    %379 = arith.divf %377, %378 : vector<2x16xf32>
    %380 = arith.mulf %371, %297 : vector<2x16xf32>
    %381 = arith.mulf %365, %373 : vector<2x16xf32>
    %382 = arith.addf %380, %381 : vector<2x16xf32>
    %383 = math.tanh %382 : vector<2x16xf32>
    %384 = arith.mulf %379, %383 : vector<2x16xf32>
    %cst_164 = arith.constant dense<0.000000e+00> : vector<2x128xf32>
    %385 = tpu.matmul %384, %215, %cst_164 {dimension_numbers = #tpu.dot_dimension_numbers<[1], [0], [0], [1], [0, 0, 1, 1], [], []>} : vector<2x16xf32>, vector<16x128xf32>, vector<2x128xf32> -> vector<2x128xf32>
    %cst_165 = arith.constant -1.000000e+30 : f32
    %386 = vector.broadcast %cst_165 : f32 to vector<2x128xf32>
    %387 = arith.select %217, %385, %386 : vector<2x128xi1>, vector<2x128xf32>
    %cst_166 = arith.constant dense<0xFF800000> : vector<2xf32>
    %388 = vector.multi_reduction <maximumf>, %387, %cst_166 [1] : vector<2x128xf32> to vector<2xf32>
    %389 = vector.shape_cast %388 : vector<2xf32> to vector<2x1xf32>
    %390 = vector.broadcast %389 : vector<2x1xf32> to vector<2x128xf32>
    %391 = arith.subf %385, %390 : vector<2x128xf32>
    %392 = math.exp %391 : vector<2x128xf32>
    %cst_167 = arith.constant 0.000000e+00 : f32
    %393 = vector.broadcast %cst_167 : f32 to vector<2x128xf32>
    %394 = arith.select %217, %392, %393 : vector<2x128xi1>, vector<2x128xf32>
    %cst_168 = arith.constant dense<0.000000e+00> : vector<2xf32>
    %395 = vector.multi_reduction <add>, %394, %cst_168 [1] : vector<2x128xf32> to vector<2xf32>
    %396 = vector.shape_cast %395 : vector<2xf32> to vector<2x1xf32>
    %cst_169 = arith.constant 1.000000e-16 : f32
    %397 = vector.broadcast %cst_169 : f32 to vector<2x1xf32>
    %398 = arith.addf %396, %397 : vector<2x1xf32>
    %399 = vector.broadcast %398 : vector<2x1xf32> to vector<2x128xf32>
    %400 = arith.divf %394, %399 : vector<2x128xf32>
    %cst_170 = arith.constant dense<0.000000e+00> : vector<2x16xf32>
    %401 = tpu.matmul %400, %215, %cst_170 {dimension_numbers = #tpu.dot_dimension_numbers<[1], [1], [0], [0], [0, 0, 1, 0], [], []>} : vector<2x128xf32>, vector<16x128xf32>, vector<2x16xf32> -> vector<2x16xf32>
    %402 = vector.extract_strided_slice %218 {offsets = [0, 0], sizes = [16, 64], strides = [1, 1]} : vector<32x64xf32> to vector<16x64xf32>
    %cst_171 = arith.constant dense<0.000000e+00> : vector<2x64xf32>
    %403 = tpu.matmul %384, %402, %cst_171 {dimension_numbers = #tpu.dot_dimension_numbers<[1], [0], [0], [1], [0, 0, 1, 1], [], []>} : vector<2x16xf32>, vector<16x64xf32>, vector<2x64xf32> -> vector<2x64xf32>
    %404 = vector.extract_strided_slice %218 {offsets = [16, 0], sizes = [16, 64], strides = [1, 1]} : vector<32x64xf32> to vector<16x64xf32>
    %cst_172 = arith.constant dense<0.000000e+00> : vector<2x64xf32>
    %405 = tpu.matmul %401, %404, %cst_172 {dimension_numbers = #tpu.dot_dimension_numbers<[1], [0], [0], [1], [0, 0, 1, 1], [], []>} : vector<2x16xf32>, vector<16x64xf32>, vector<2x64xf32> -> vector<2x64xf32>
    %406 = arith.addf %403, %405 : vector<2x64xf32>
    %407 = vector.broadcast %220 : vector<1x64xf32> to vector<2x64xf32>
    %408 = arith.addf %406, %407 : vector<2x64xf32>
    %cst_173 = arith.constant dense<0.000000e+00> : vector<2x64xf32>
    %409 = tpu.matmul %352, %219, %cst_173 {dimension_numbers = #tpu.dot_dimension_numbers<[1], [0], [0], [1], [0, 0, 1, 1], [], []>} : vector<2x16xf32>, vector<16x64xf32>, vector<2x64xf32> -> vector<2x64xf32>
    %410 = arith.addf %408, %409 : vector<2x64xf32>
    %411 = vector.broadcast %221 : vector<1x64xf32> to vector<2x64xf32>
    %412 = arith.addf %410, %411 : vector<2x64xf32>
    %413 = vector.extract_strided_slice %412 {offsets = [0, 0], sizes = [2, 16], strides = [1, 1]} : vector<2x64xf32> to vector<2x16xf32>
    %414 = arith.negf %413 : vector<2x16xf32>
    %415 = math.exp %414 : vector<2x16xf32>
    %cst_174 = arith.constant 1.000000e+00 : f32
    %416 = vector.broadcast %cst_174 : f32 to vector<2x16xf32>
    %417 = arith.addf %416, %415 : vector<2x16xf32>
    %418 = arith.divf %416, %417 : vector<2x16xf32>
    %419 = vector.extract_strided_slice %412 {offsets = [0, 16], sizes = [2, 16], strides = [1, 1]} : vector<2x64xf32> to vector<2x16xf32>
    %420 = arith.negf %419 : vector<2x16xf32>
    %421 = math.exp %420 : vector<2x16xf32>
    %cst_175 = arith.constant 1.000000e+00 : f32
    %422 = vector.broadcast %cst_175 : f32 to vector<2x16xf32>
    %423 = arith.addf %422, %421 : vector<2x16xf32>
    %424 = arith.divf %422, %423 : vector<2x16xf32>
    %425 = vector.extract_strided_slice %412 {offsets = [0, 32], sizes = [2, 16], strides = [1, 1]} : vector<2x64xf32> to vector<2x16xf32>
    %426 = math.tanh %425 : vector<2x16xf32>
    %427 = vector.extract_strided_slice %412 {offsets = [0, 48], sizes = [2, 16], strides = [1, 1]} : vector<2x64xf32> to vector<2x16xf32>
    %428 = arith.negf %427 : vector<2x16xf32>
    %429 = math.exp %428 : vector<2x16xf32>
    %cst_176 = arith.constant 1.000000e+00 : f32
    %430 = vector.broadcast %cst_176 : f32 to vector<2x16xf32>
    %431 = arith.addf %430, %429 : vector<2x16xf32>
    %432 = arith.divf %430, %431 : vector<2x16xf32>
    %433 = arith.mulf %424, %350 : vector<2x16xf32>
    %434 = arith.mulf %418, %426 : vector<2x16xf32>
    %435 = arith.addf %433, %434 : vector<2x16xf32>
    %436 = math.tanh %435 : vector<2x16xf32>
    %437 = arith.mulf %432, %436 : vector<2x16xf32>
    %cst_177 = arith.constant dense<0.000000e+00> : vector<2x64xf32>
    %438 = tpu.matmul %437, %222, %cst_177 {dimension_numbers = #tpu.dot_dimension_numbers<[1], [0], [0], [1], [0, 0, 1, 1], [], []>} : vector<2x16xf32>, vector<16x64xf32>, vector<2x64xf32> -> vector<2x64xf32>
    %439 = vector.broadcast %224 : vector<1x64xf32> to vector<2x64xf32>
    %440 = arith.addf %438, %439 : vector<2x64xf32>
    %cst_178 = arith.constant dense<0.000000e+00> : vector<2x64xf32>
    %441 = tpu.matmul %384, %223, %cst_178 {dimension_numbers = #tpu.dot_dimension_numbers<[1], [0], [0], [1], [0, 0, 1, 1], [], []>} : vector<2x16xf32>, vector<16x64xf32>, vector<2x64xf32> -> vector<2x64xf32>
    %442 = arith.addf %440, %441 : vector<2x64xf32>
    %443 = vector.broadcast %225 : vector<1x64xf32> to vector<2x64xf32>
    %444 = arith.addf %442, %443 : vector<2x64xf32>
    %445 = vector.extract_strided_slice %444 {offsets = [0, 0], sizes = [2, 16], strides = [1, 1]} : vector<2x64xf32> to vector<2x16xf32>
    %446 = arith.negf %445 : vector<2x16xf32>
    %447 = math.exp %446 : vector<2x16xf32>
    %cst_179 = arith.constant 1.000000e+00 : f32
    %448 = vector.broadcast %cst_179 : f32 to vector<2x16xf32>
    %449 = arith.addf %448, %447 : vector<2x16xf32>
    %450 = arith.divf %448, %449 : vector<2x16xf32>
    %451 = vector.extract_strided_slice %444 {offsets = [0, 16], sizes = [2, 16], strides = [1, 1]} : vector<2x64xf32> to vector<2x16xf32>
    %452 = arith.negf %451 : vector<2x16xf32>
    %453 = math.exp %452 : vector<2x16xf32>
    %cst_180 = arith.constant 1.000000e+00 : f32
    %454 = vector.broadcast %cst_180 : f32 to vector<2x16xf32>
    %455 = arith.addf %454, %453 : vector<2x16xf32>
    %456 = arith.divf %454, %455 : vector<2x16xf32>
    %457 = vector.extract_strided_slice %444 {offsets = [0, 32], sizes = [2, 16], strides = [1, 1]} : vector<2x64xf32> to vector<2x16xf32>
    %458 = math.tanh %457 : vector<2x16xf32>
    %459 = vector.extract_strided_slice %444 {offsets = [0, 48], sizes = [2, 16], strides = [1, 1]} : vector<2x64xf32> to vector<2x16xf32>
    %460 = arith.negf %459 : vector<2x16xf32>
    %461 = math.exp %460 : vector<2x16xf32>
    %cst_181 = arith.constant 1.000000e+00 : f32
    %462 = vector.broadcast %cst_181 : f32 to vector<2x16xf32>
    %463 = arith.addf %462, %461 : vector<2x16xf32>
    %464 = arith.divf %462, %463 : vector<2x16xf32>
    %465 = arith.mulf %456, %382 : vector<2x16xf32>
    %466 = arith.mulf %450, %458 : vector<2x16xf32>
    %467 = arith.addf %465, %466 : vector<2x16xf32>
    %468 = math.tanh %467 : vector<2x16xf32>
    %469 = arith.mulf %464, %468 : vector<2x16xf32>
    %cst_182 = arith.constant dense<0.000000e+00> : vector<2x128xf32>
    %470 = tpu.matmul %469, %215, %cst_182 {dimension_numbers = #tpu.dot_dimension_numbers<[1], [0], [0], [1], [0, 0, 1, 1], [], []>} : vector<2x16xf32>, vector<16x128xf32>, vector<2x128xf32> -> vector<2x128xf32>
    %cst_183 = arith.constant -1.000000e+30 : f32
    %471 = vector.broadcast %cst_183 : f32 to vector<2x128xf32>
    %472 = arith.select %217, %470, %471 : vector<2x128xi1>, vector<2x128xf32>
    %cst_184 = arith.constant dense<0xFF800000> : vector<2xf32>
    %473 = vector.multi_reduction <maximumf>, %472, %cst_184 [1] : vector<2x128xf32> to vector<2xf32>
    %474 = vector.shape_cast %473 : vector<2xf32> to vector<2x1xf32>
    %475 = vector.broadcast %474 : vector<2x1xf32> to vector<2x128xf32>
    %476 = arith.subf %470, %475 : vector<2x128xf32>
    %477 = math.exp %476 : vector<2x128xf32>
    %cst_185 = arith.constant 0.000000e+00 : f32
    %478 = vector.broadcast %cst_185 : f32 to vector<2x128xf32>
    %479 = arith.select %217, %477, %478 : vector<2x128xi1>, vector<2x128xf32>
    %cst_186 = arith.constant dense<0.000000e+00> : vector<2xf32>
    %480 = vector.multi_reduction <add>, %479, %cst_186 [1] : vector<2x128xf32> to vector<2xf32>
    %481 = vector.shape_cast %480 : vector<2xf32> to vector<2x1xf32>
    %cst_187 = arith.constant 1.000000e-16 : f32
    %482 = vector.broadcast %cst_187 : f32 to vector<2x1xf32>
    %483 = arith.addf %481, %482 : vector<2x1xf32>
    %484 = vector.broadcast %483 : vector<2x1xf32> to vector<2x128xf32>
    %485 = arith.divf %479, %484 : vector<2x128xf32>
    %cst_188 = arith.constant dense<0.000000e+00> : vector<2x16xf32>
    %486 = tpu.matmul %485, %215, %cst_188 {dimension_numbers = #tpu.dot_dimension_numbers<[1], [1], [0], [0], [0, 0, 1, 0], [], []>} : vector<2x128xf32>, vector<16x128xf32>, vector<2x16xf32> -> vector<2x16xf32>
    %487 = vector.extract_strided_slice %218 {offsets = [0, 0], sizes = [16, 64], strides = [1, 1]} : vector<32x64xf32> to vector<16x64xf32>
    %cst_189 = arith.constant dense<0.000000e+00> : vector<2x64xf32>
    %488 = tpu.matmul %469, %487, %cst_189 {dimension_numbers = #tpu.dot_dimension_numbers<[1], [0], [0], [1], [0, 0, 1, 1], [], []>} : vector<2x16xf32>, vector<16x64xf32>, vector<2x64xf32> -> vector<2x64xf32>
    %489 = vector.extract_strided_slice %218 {offsets = [16, 0], sizes = [16, 64], strides = [1, 1]} : vector<32x64xf32> to vector<16x64xf32>
    %cst_190 = arith.constant dense<0.000000e+00> : vector<2x64xf32>
    %490 = tpu.matmul %486, %489, %cst_190 {dimension_numbers = #tpu.dot_dimension_numbers<[1], [0], [0], [1], [0, 0, 1, 1], [], []>} : vector<2x16xf32>, vector<16x64xf32>, vector<2x64xf32> -> vector<2x64xf32>
    %491 = arith.addf %488, %490 : vector<2x64xf32>
    %492 = vector.broadcast %220 : vector<1x64xf32> to vector<2x64xf32>
    %493 = arith.addf %491, %492 : vector<2x64xf32>
    %cst_191 = arith.constant dense<0.000000e+00> : vector<2x64xf32>
    %494 = tpu.matmul %437, %219, %cst_191 {dimension_numbers = #tpu.dot_dimension_numbers<[1], [0], [0], [1], [0, 0, 1, 1], [], []>} : vector<2x16xf32>, vector<16x64xf32>, vector<2x64xf32> -> vector<2x64xf32>
    %495 = arith.addf %493, %494 : vector<2x64xf32>
    %496 = vector.broadcast %221 : vector<1x64xf32> to vector<2x64xf32>
    %497 = arith.addf %495, %496 : vector<2x64xf32>
    %498 = vector.extract_strided_slice %497 {offsets = [0, 0], sizes = [2, 16], strides = [1, 1]} : vector<2x64xf32> to vector<2x16xf32>
    %499 = arith.negf %498 : vector<2x16xf32>
    %500 = math.exp %499 : vector<2x16xf32>
    %cst_192 = arith.constant 1.000000e+00 : f32
    %501 = vector.broadcast %cst_192 : f32 to vector<2x16xf32>
    %502 = arith.addf %501, %500 : vector<2x16xf32>
    %503 = arith.divf %501, %502 : vector<2x16xf32>
    %504 = vector.extract_strided_slice %497 {offsets = [0, 16], sizes = [2, 16], strides = [1, 1]} : vector<2x64xf32> to vector<2x16xf32>
    %505 = arith.negf %504 : vector<2x16xf32>
    %506 = math.exp %505 : vector<2x16xf32>
    %cst_193 = arith.constant 1.000000e+00 : f32
    %507 = vector.broadcast %cst_193 : f32 to vector<2x16xf32>
    %508 = arith.addf %507, %506 : vector<2x16xf32>
    %509 = arith.divf %507, %508 : vector<2x16xf32>
    %510 = vector.extract_strided_slice %497 {offsets = [0, 32], sizes = [2, 16], strides = [1, 1]} : vector<2x64xf32> to vector<2x16xf32>
    %511 = math.tanh %510 : vector<2x16xf32>
    %512 = vector.extract_strided_slice %497 {offsets = [0, 48], sizes = [2, 16], strides = [1, 1]} : vector<2x64xf32> to vector<2x16xf32>
    %513 = arith.negf %512 : vector<2x16xf32>
    %514 = math.exp %513 : vector<2x16xf32>
    %cst_194 = arith.constant 1.000000e+00 : f32
    %515 = vector.broadcast %cst_194 : f32 to vector<2x16xf32>
    %516 = arith.addf %515, %514 : vector<2x16xf32>
    %517 = arith.divf %515, %516 : vector<2x16xf32>
    %518 = arith.mulf %509, %435 : vector<2x16xf32>
    %519 = arith.mulf %503, %511 : vector<2x16xf32>
    %520 = arith.addf %518, %519 : vector<2x16xf32>
    %521 = math.tanh %520 : vector<2x16xf32>
    %522 = arith.mulf %517, %521 : vector<2x16xf32>
    %cst_195 = arith.constant dense<0.000000e+00> : vector<2x64xf32>
    %523 = tpu.matmul %522, %222, %cst_195 {dimension_numbers = #tpu.dot_dimension_numbers<[1], [0], [0], [1], [0, 0, 1, 1], [], []>} : vector<2x16xf32>, vector<16x64xf32>, vector<2x64xf32> -> vector<2x64xf32>
    %524 = vector.broadcast %224 : vector<1x64xf32> to vector<2x64xf32>
    %525 = arith.addf %523, %524 : vector<2x64xf32>
    %cst_196 = arith.constant dense<0.000000e+00> : vector<2x64xf32>
    %526 = tpu.matmul %469, %223, %cst_196 {dimension_numbers = #tpu.dot_dimension_numbers<[1], [0], [0], [1], [0, 0, 1, 1], [], []>} : vector<2x16xf32>, vector<16x64xf32>, vector<2x64xf32> -> vector<2x64xf32>
    %527 = arith.addf %525, %526 : vector<2x64xf32>
    %528 = vector.broadcast %225 : vector<1x64xf32> to vector<2x64xf32>
    %529 = arith.addf %527, %528 : vector<2x64xf32>
    %530 = vector.extract_strided_slice %529 {offsets = [0, 0], sizes = [2, 16], strides = [1, 1]} : vector<2x64xf32> to vector<2x16xf32>
    %531 = arith.negf %530 : vector<2x16xf32>
    %532 = math.exp %531 : vector<2x16xf32>
    %cst_197 = arith.constant 1.000000e+00 : f32
    %533 = vector.broadcast %cst_197 : f32 to vector<2x16xf32>
    %534 = arith.addf %533, %532 : vector<2x16xf32>
    %535 = arith.divf %533, %534 : vector<2x16xf32>
    %536 = vector.extract_strided_slice %529 {offsets = [0, 16], sizes = [2, 16], strides = [1, 1]} : vector<2x64xf32> to vector<2x16xf32>
    %537 = arith.negf %536 : vector<2x16xf32>
    %538 = math.exp %537 : vector<2x16xf32>
    %cst_198 = arith.constant 1.000000e+00 : f32
    %539 = vector.broadcast %cst_198 : f32 to vector<2x16xf32>
    %540 = arith.addf %539, %538 : vector<2x16xf32>
    %541 = arith.divf %539, %540 : vector<2x16xf32>
    %542 = vector.extract_strided_slice %529 {offsets = [0, 32], sizes = [2, 16], strides = [1, 1]} : vector<2x64xf32> to vector<2x16xf32>
    %543 = math.tanh %542 : vector<2x16xf32>
    %544 = vector.extract_strided_slice %529 {offsets = [0, 48], sizes = [2, 16], strides = [1, 1]} : vector<2x64xf32> to vector<2x16xf32>
    %545 = arith.negf %544 : vector<2x16xf32>
    %546 = math.exp %545 : vector<2x16xf32>
    %cst_199 = arith.constant 1.000000e+00 : f32
    %547 = vector.broadcast %cst_199 : f32 to vector<2x16xf32>
    %548 = arith.addf %547, %546 : vector<2x16xf32>
    %549 = arith.divf %547, %548 : vector<2x16xf32>
    %550 = arith.mulf %541, %467 : vector<2x16xf32>
    %551 = arith.mulf %535, %543 : vector<2x16xf32>
    %552 = arith.addf %550, %551 : vector<2x16xf32>
    %553 = math.tanh %552 : vector<2x16xf32>
    %554 = arith.mulf %549, %553 : vector<2x16xf32>
    %cst_200 = arith.constant dense<0.000000e+00> : vector<2x128xf32>
    %555 = tpu.matmul %554, %215, %cst_200 {dimension_numbers = #tpu.dot_dimension_numbers<[1], [0], [0], [1], [0, 0, 1, 1], [], []>} : vector<2x16xf32>, vector<16x128xf32>, vector<2x128xf32> -> vector<2x128xf32>
    %cst_201 = arith.constant -1.000000e+30 : f32
    %556 = vector.broadcast %cst_201 : f32 to vector<2x128xf32>
    %557 = arith.select %217, %555, %556 : vector<2x128xi1>, vector<2x128xf32>
    %cst_202 = arith.constant dense<0xFF800000> : vector<2xf32>
    %558 = vector.multi_reduction <maximumf>, %557, %cst_202 [1] : vector<2x128xf32> to vector<2xf32>
    %559 = vector.shape_cast %558 : vector<2xf32> to vector<2x1xf32>
    %560 = vector.broadcast %559 : vector<2x1xf32> to vector<2x128xf32>
    %561 = arith.subf %555, %560 : vector<2x128xf32>
    %562 = math.exp %561 : vector<2x128xf32>
    %cst_203 = arith.constant 0.000000e+00 : f32
    %563 = vector.broadcast %cst_203 : f32 to vector<2x128xf32>
    %564 = arith.select %217, %562, %563 : vector<2x128xi1>, vector<2x128xf32>
    %cst_204 = arith.constant dense<0.000000e+00> : vector<2xf32>
    %565 = vector.multi_reduction <add>, %564, %cst_204 [1] : vector<2x128xf32> to vector<2xf32>
    %566 = vector.shape_cast %565 : vector<2xf32> to vector<2x1xf32>
    %cst_205 = arith.constant 1.000000e-16 : f32
    %567 = vector.broadcast %cst_205 : f32 to vector<2x1xf32>
    %568 = arith.addf %566, %567 : vector<2x1xf32>
    %569 = vector.broadcast %568 : vector<2x1xf32> to vector<2x128xf32>
    %570 = arith.divf %564, %569 : vector<2x128xf32>
    %cst_206 = arith.constant dense<0.000000e+00> : vector<2x16xf32>
    %571 = tpu.matmul %570, %215, %cst_206 {dimension_numbers = #tpu.dot_dimension_numbers<[1], [1], [0], [0], [0, 0, 1, 0], [], []>} : vector<2x128xf32>, vector<16x128xf32>, vector<2x16xf32> -> vector<2x16xf32>
    %572 = vector.extract_strided_slice %218 {offsets = [0, 0], sizes = [16, 64], strides = [1, 1]} : vector<32x64xf32> to vector<16x64xf32>
    %cst_207 = arith.constant dense<0.000000e+00> : vector<2x64xf32>
    %573 = tpu.matmul %554, %572, %cst_207 {dimension_numbers = #tpu.dot_dimension_numbers<[1], [0], [0], [1], [0, 0, 1, 1], [], []>} : vector<2x16xf32>, vector<16x64xf32>, vector<2x64xf32> -> vector<2x64xf32>
    %574 = vector.extract_strided_slice %218 {offsets = [16, 0], sizes = [16, 64], strides = [1, 1]} : vector<32x64xf32> to vector<16x64xf32>
    %cst_208 = arith.constant dense<0.000000e+00> : vector<2x64xf32>
    %575 = tpu.matmul %571, %574, %cst_208 {dimension_numbers = #tpu.dot_dimension_numbers<[1], [0], [0], [1], [0, 0, 1, 1], [], []>} : vector<2x16xf32>, vector<16x64xf32>, vector<2x64xf32> -> vector<2x64xf32>
    %576 = arith.addf %573, %575 : vector<2x64xf32>
    %577 = vector.broadcast %220 : vector<1x64xf32> to vector<2x64xf32>
    %578 = arith.addf %576, %577 : vector<2x64xf32>
    %cst_209 = arith.constant dense<0.000000e+00> : vector<2x64xf32>
    %579 = tpu.matmul %522, %219, %cst_209 {dimension_numbers = #tpu.dot_dimension_numbers<[1], [0], [0], [1], [0, 0, 1, 1], [], []>} : vector<2x16xf32>, vector<16x64xf32>, vector<2x64xf32> -> vector<2x64xf32>
    %580 = arith.addf %578, %579 : vector<2x64xf32>
    %581 = vector.broadcast %221 : vector<1x64xf32> to vector<2x64xf32>
    %582 = arith.addf %580, %581 : vector<2x64xf32>
    %583 = vector.extract_strided_slice %582 {offsets = [0, 0], sizes = [2, 16], strides = [1, 1]} : vector<2x64xf32> to vector<2x16xf32>
    %584 = arith.negf %583 : vector<2x16xf32>
    %585 = math.exp %584 : vector<2x16xf32>
    %cst_210 = arith.constant 1.000000e+00 : f32
    %586 = vector.broadcast %cst_210 : f32 to vector<2x16xf32>
    %587 = arith.addf %586, %585 : vector<2x16xf32>
    %588 = arith.divf %586, %587 : vector<2x16xf32>
    %589 = vector.extract_strided_slice %582 {offsets = [0, 16], sizes = [2, 16], strides = [1, 1]} : vector<2x64xf32> to vector<2x16xf32>
    %590 = arith.negf %589 : vector<2x16xf32>
    %591 = math.exp %590 : vector<2x16xf32>
    %cst_211 = arith.constant 1.000000e+00 : f32
    %592 = vector.broadcast %cst_211 : f32 to vector<2x16xf32>
    %593 = arith.addf %592, %591 : vector<2x16xf32>
    %594 = arith.divf %592, %593 : vector<2x16xf32>
    %595 = vector.extract_strided_slice %582 {offsets = [0, 32], sizes = [2, 16], strides = [1, 1]} : vector<2x64xf32> to vector<2x16xf32>
    %596 = math.tanh %595 : vector<2x16xf32>
    %597 = vector.extract_strided_slice %582 {offsets = [0, 48], sizes = [2, 16], strides = [1, 1]} : vector<2x64xf32> to vector<2x16xf32>
    %598 = arith.negf %597 : vector<2x16xf32>
    %599 = math.exp %598 : vector<2x16xf32>
    %cst_212 = arith.constant 1.000000e+00 : f32
    %600 = vector.broadcast %cst_212 : f32 to vector<2x16xf32>
    %601 = arith.addf %600, %599 : vector<2x16xf32>
    %602 = arith.divf %600, %601 : vector<2x16xf32>
    %603 = arith.mulf %594, %520 : vector<2x16xf32>
    %604 = arith.mulf %588, %596 : vector<2x16xf32>
    %605 = arith.addf %603, %604 : vector<2x16xf32>
    %606 = math.tanh %605 : vector<2x16xf32>
    %607 = arith.mulf %602, %606 : vector<2x16xf32>
    %cst_213 = arith.constant dense<0.000000e+00> : vector<2x64xf32>
    %608 = tpu.matmul %607, %222, %cst_213 {dimension_numbers = #tpu.dot_dimension_numbers<[1], [0], [0], [1], [0, 0, 1, 1], [], []>} : vector<2x16xf32>, vector<16x64xf32>, vector<2x64xf32> -> vector<2x64xf32>
    %609 = vector.broadcast %224 : vector<1x64xf32> to vector<2x64xf32>
    %610 = arith.addf %608, %609 : vector<2x64xf32>
    %cst_214 = arith.constant dense<0.000000e+00> : vector<2x64xf32>
    %611 = tpu.matmul %554, %223, %cst_214 {dimension_numbers = #tpu.dot_dimension_numbers<[1], [0], [0], [1], [0, 0, 1, 1], [], []>} : vector<2x16xf32>, vector<16x64xf32>, vector<2x64xf32> -> vector<2x64xf32>
    %612 = arith.addf %610, %611 : vector<2x64xf32>
    %613 = vector.broadcast %225 : vector<1x64xf32> to vector<2x64xf32>
    %614 = arith.addf %612, %613 : vector<2x64xf32>
    %615 = vector.extract_strided_slice %614 {offsets = [0, 0], sizes = [2, 16], strides = [1, 1]} : vector<2x64xf32> to vector<2x16xf32>
    %616 = arith.negf %615 : vector<2x16xf32>
    %617 = math.exp %616 : vector<2x16xf32>
    %cst_215 = arith.constant 1.000000e+00 : f32
    %618 = vector.broadcast %cst_215 : f32 to vector<2x16xf32>
    %619 = arith.addf %618, %617 : vector<2x16xf32>
    %620 = arith.divf %618, %619 : vector<2x16xf32>
    %621 = vector.extract_strided_slice %614 {offsets = [0, 16], sizes = [2, 16], strides = [1, 1]} : vector<2x64xf32> to vector<2x16xf32>
    %622 = arith.negf %621 : vector<2x16xf32>
    %623 = math.exp %622 : vector<2x16xf32>
    %cst_216 = arith.constant 1.000000e+00 : f32
    %624 = vector.broadcast %cst_216 : f32 to vector<2x16xf32>
    %625 = arith.addf %624, %623 : vector<2x16xf32>
    %626 = arith.divf %624, %625 : vector<2x16xf32>
    %627 = vector.extract_strided_slice %614 {offsets = [0, 32], sizes = [2, 16], strides = [1, 1]} : vector<2x64xf32> to vector<2x16xf32>
    %628 = math.tanh %627 : vector<2x16xf32>
    %629 = vector.extract_strided_slice %614 {offsets = [0, 48], sizes = [2, 16], strides = [1, 1]} : vector<2x64xf32> to vector<2x16xf32>
    %630 = arith.negf %629 : vector<2x16xf32>
    %631 = math.exp %630 : vector<2x16xf32>
    %cst_217 = arith.constant 1.000000e+00 : f32
    %632 = vector.broadcast %cst_217 : f32 to vector<2x16xf32>
    %633 = arith.addf %632, %631 : vector<2x16xf32>
    %634 = arith.divf %632, %633 : vector<2x16xf32>
    %635 = arith.mulf %626, %552 : vector<2x16xf32>
    %636 = arith.mulf %620, %628 : vector<2x16xf32>
    %637 = arith.addf %635, %636 : vector<2x16xf32>
    %638 = math.tanh %637 : vector<2x16xf32>
    %639 = arith.mulf %634, %638 : vector<2x16xf32>
    %cst_218 = arith.constant dense<0.000000e+00> : vector<2x128xf32>
    %640 = tpu.matmul %639, %215, %cst_218 {dimension_numbers = #tpu.dot_dimension_numbers<[1], [0], [0], [1], [0, 0, 1, 1], [], []>} : vector<2x16xf32>, vector<16x128xf32>, vector<2x128xf32> -> vector<2x128xf32>
    %cst_219 = arith.constant -1.000000e+30 : f32
    %641 = vector.broadcast %cst_219 : f32 to vector<2x128xf32>
    %642 = arith.select %217, %640, %641 : vector<2x128xi1>, vector<2x128xf32>
    %cst_220 = arith.constant dense<0xFF800000> : vector<2xf32>
    %643 = vector.multi_reduction <maximumf>, %642, %cst_220 [1] : vector<2x128xf32> to vector<2xf32>
    %644 = vector.shape_cast %643 : vector<2xf32> to vector<2x1xf32>
    %645 = vector.broadcast %644 : vector<2x1xf32> to vector<2x128xf32>
    %646 = arith.subf %640, %645 : vector<2x128xf32>
    %647 = math.exp %646 : vector<2x128xf32>
    %cst_221 = arith.constant 0.000000e+00 : f32
    %648 = vector.broadcast %cst_221 : f32 to vector<2x128xf32>
    %649 = arith.select %217, %647, %648 : vector<2x128xi1>, vector<2x128xf32>
    %cst_222 = arith.constant dense<0.000000e+00> : vector<2xf32>
    %650 = vector.multi_reduction <add>, %649, %cst_222 [1] : vector<2x128xf32> to vector<2xf32>
    %651 = vector.shape_cast %650 : vector<2xf32> to vector<2x1xf32>
    %cst_223 = arith.constant 1.000000e-16 : f32
    %652 = vector.broadcast %cst_223 : f32 to vector<2x1xf32>
    %653 = arith.addf %651, %652 : vector<2x1xf32>
    %654 = vector.broadcast %653 : vector<2x1xf32> to vector<2x128xf32>
    %655 = arith.divf %649, %654 : vector<2x128xf32>
    %cst_224 = arith.constant dense<0.000000e+00> : vector<2x16xf32>
    %656 = tpu.matmul %655, %215, %cst_224 {dimension_numbers = #tpu.dot_dimension_numbers<[1], [1], [0], [0], [0, 0, 1, 0], [], []>} : vector<2x128xf32>, vector<16x128xf32>, vector<2x16xf32> -> vector<2x16xf32>
    %cst_225 = arith.constant 0.000000e+00 : f32
    %657 = vector.broadcast %cst_225 : f32 to vector<2x96xf32>
    %658 = tpu.concatenate %639, %656, %657 in 1 : vector<2x16xf32>, vector<2x16xf32>, vector<2x96xf32> -> vector<2x128xf32>
    %c0_226 = arith.constant 0 : index
    %c0_227 = arith.constant 0 : index
    %659 = vector.load %arg20[%c0_226, %c0_227] : memref<2x128xf32, #tpu.memory_space<vmem>>, vector<2x128xf32>
    tpu.vector_store %arg20[%c0_226, %c0_227], %658 {strides = array<i32>} : memref<2x128xf32, #tpu.memory_space<vmem>>, vector<2x128xf32>,
    return
  }
}

</mosaic_0001>

<llo_original>
// kernel: tpu_custom_call.1
$region0: #{tpu_custom_call.1}
  #allocation0 [shape = 'u32[]', space=smem, size = 0x4, offset = 0x4, fixed_abs, tag = 'smem constant byte address 0x4 - core index']
  #allocation1 [shape = 'u32[144,128]{1,0:T(1,128)}', space=vmem, size = 0x12000, scoped, tag = 'internal scratch']
  %s0 = inlined_call_operand.hbm [shape: f32[16,128], index: 0, kind: input, shape index: {}]
  %s1 = inlined_call_operand.vmem [shape: bf16[128,256], index: 1, kind: input, shape index: {}]
  %s2 = inlined_call_operand.hbm [shape: bf16[256,128], index: 2, kind: input, shape index: {}]
  %s3 = inlined_call_operand.hbm [shape: f32[6,256], index: 3, kind: input, shape index: {}]
  %s4 = inlined_call_operand.hbm [shape: f32[2,128], index: 4, kind: input, shape index: {}]
  %s5 = inlined_call_operand.vmem [shape: bf16[3,16,32], index: 5, kind: input, shape index: {}]
  %s6 = inlined_call_operand.vmem [shape: bf16[3,16,16], index: 6, kind: input, shape index: {}]
  %s7 = inlined_call_operand.vmem [shape: f32[3,16,1], index: 7, kind: input, shape index: {}]
  %s8 = inlined_call_operand.hbm [shape: bf16[3,16,16], index: 8, kind: input, shape index: {}]
  %s9 = inlined_call_operand.vmem [shape: f32[3,16,1], index: 9, kind: input, shape index: {}]
  %s10 = inlined_call_operand.vmem [shape: f32[3,16,1], index: 10, kind: input, shape index: {}]
  %s11 = inlined_call_operand.vmem [shape: f32[3,16,1], index: 11, kind: input, shape index: {}]
  %s12 = inlined_call_operand.vmem [shape: f32[32,64], index: 12, kind: input, shape index: {}]
  %s13 = inlined_call_operand.vmem [shape: f32[16,64], index: 13, kind: input, shape index: {}]
  %s14 = inlined_call_operand.vmem [shape: f32[1,64], index: 14, kind: input, shape index: {}]
  %s15 = inlined_call_operand.vmem [shape: f32[1,64], index: 15, kind: input, shape index: {}]
  %s16 = inlined_call_operand.hbm [shape: f32[16,64], index: 16, kind: input, shape index: {}]
  %s17 = inlined_call_operand.hbm [shape: f32[16,64], index: 17, kind: input, shape index: {}]
  %s18 = inlined_call_operand.vmem [shape: f32[1,64], index: 18, kind: input, shape index: {}]
  %s19 = inlined_call_operand.vmem [shape: f32[1,64], index: 19, kind: input, shape index: {}]
  %s20 = inlined_call_operand.hbm [shape: f32[2,128], index: 20, kind: output, shape index: {}]
  %s21 = sld [smem:[#allocation0]]
  $region118: #{tpu_custom_call.1} parent=0
    _
  %s23 = ssub.s32 1, %s21
  %s24 = scalar_select 0, %s23, %s21
  $region1: #{tpu_custom_call.1} parent=0
    #allocation2 [shape = 'u8[8192]{0}', space=vmem, size = 0x2000, scoped, tag = 'input window, operand 0, single buffered']
    #allocation3 [shape = 's32[1]{0}', space=sflag, size = 0x4, scoped, tag = 'scoped memory for tpu_custom_call.1']
    #allocation4 [shape = 's32[1]{0}', space=sflag, size = 0x4, scoped, tag = 'scoped memory for tpu_custom_call.1']
    #allocation5 [shape = 'u8[65536]{0}', space=vmem, size = 0x10000, scoped, tag = 'input window, operand 2, single buffered']
    #allocation6 [shape = 's32[1]{0}', space=sflag, size = 0x4, scoped, tag = 'scoped memory for tpu_custom_call.1']
    #allocation7 [shape = 'u8[8192]{0}', space=vmem, size = 0x2000, scoped, tag = 'input window, operand 3, single buffered']
    #allocation8 [shape = 'u8[1024]{0}', space=vmem, size = 0x400, scoped, tag = 'input window, operand 4, single buffered']
    #allocation9 [shape = 's32[1]{0}', space=sflag, size = 0x4, scoped, tag = 'scoped memory for tpu_custom_call.1']
    #allocation10 [shape = 'u8[12288]{0}', space=vmem, size = 0x3000, scoped, tag = 'input window, operand 8, single buffered']
    #allocation11 [shape = 'u8[8192]{0}', space=vmem, size = 0x2000, scoped, tag = 'input window, operand 16, single buffered']
    #allocation12 [shape = 's32[1]{0}', space=sflag, size = 0x4, scoped, tag = 'scoped memory for tpu_custom_call.1']
    #allocation13 [shape = 'u8[8192]{0}', space=vmem, size = 0x2000, scoped, tag = 'input window, operand 17, single buffered']
    #allocation14 [shape = 'u8[1024]{0}', space=vmem, size = 0x400, scoped, tag = 'output window, operand 0, single buffered']
    %25 = vsyncpa [#allocation3], 0
    %26 = vsyncpa [#allocation6], 0
    %27 = vsyncpa [#allocation9], 0
    %28 = vsyncpa [#allocation12], 0
    %29 = vsyncpa [#allocation4], 0
    // Predicated region
    $region2: #{tpu_custom_call.1} parent=1 // pred_check
      _
    $region3: #{tpu_custom_call.1} parent=1 // pred_check_branch
      %31 = sbr.rel (0) target = $region5
    $region4: #{tpu_custom_call.1} parent=1 // pred_region
      %s33 = ssub.s32 256, 256
      %34 = vsyncadd [#allocation3], %s33
      %s35 = sshll.u32 [#allocation2], 4
      %s36 = int_to_ptr.vmem [resolvable:$true] %s35
      %41 = dma.hbm_to_vmem [thread:$0]  %s0, 256, %s36, [#allocation3], 128, 128, 8
    $region5: #{tpu_custom_call.1} parent=1 // pred_fallthru
      _
    // Predicated region
    $region6: #{tpu_custom_call.1} parent=1 // pred_check
      _
    $region7: #{tpu_custom_call.1} parent=1 // pred_check_branch
      %43 = sbr.rel (0) target = $region9
    $region8: #{tpu_custom_call.1} parent=1 // pred_region
      _
    $region9: #{tpu_custom_call.1} parent=1 // pred_fallthru
      _
    // Predicated region
    $region10: #{tpu_custom_call.1} parent=1 // pred_check
      _
    $region11: #{tpu_custom_call.1} parent=1 // pred_check_branch
      %45 = sbr.rel (0) target = $region13
    $region12: #{tpu_custom_call.1} parent=1 // pred_region
      %s47 = ssub.s32 2048, 2048
      %48 = vsyncadd [#allocation6], %s47
      %s49 = sshll.u32 [#allocation5], 4
      %s50 = int_to_ptr.vmem [resolvable:$true] %s49
      %55 = dma.hbm_to_vmem [thread:$0]  %s2, 2048, %s50, [#allocation6], 64, 64, 4
    $region13: #{tpu_custom_call.1} parent=1 // pred_fallthru
      _
    // Predicated region
    $region14: #{tpu_custom_call.1} parent=1 // pred_check
      _
    $region15: #{tpu_custom_call.1} parent=1 // pred_check_branch
      %57 = sbr.rel (0) target = $region17
    $region16: #{tpu_custom_call.1} parent=1 // pred_region
      %s59 = ssub.s32 256, 256
      %60 = vsyncadd [#allocation6], %s59
      %s62 = sshll.u32 [#allocation7], 4
      %s63 = int_to_ptr.vmem [resolvable:$true] %s62
      %65 = dma.hbm_to_vmem [thread:$0]  %s3, 256, %s63, [#allocation6]
    $region17: #{tpu_custom_call.1} parent=1 // pred_fallthru
      _
    // Predicated region
    $region18: #{tpu_custom_call.1} parent=1 // pred_check
      _
    $region19: #{tpu_custom_call.1} parent=1 // pred_check_branch
      %67 = sbr.rel (0) target = $region21
    $region20: #{tpu_custom_call.1} parent=1 // pred_region
      %s69 = ssub.s32 32, 32
      %70 = vsyncadd [#allocation9], %s69
      %s72 = sshll.u32 [#allocation8], 4
      %s73 = int_to_ptr.vmem [resolvable:$true] %s72
      %75 = dma.hbm_to_vmem [thread:$0]  %s4, 32, %s73, [#allocation9]
    $region21: #{tpu_custom_call.1} parent=1 // pred_fallthru
      _
    // Predicated region
    $region22: #{tpu_custom_call.1} parent=1 // pred_check
      _
    $region23: #{tpu_custom_call.1} parent=1 // pred_check_branch
      %77 = sbr.rel (0) target = $region25
    $region24: #{tpu_custom_call.1} parent=1 // pred_region
      _
    $region25: #{tpu_custom_call.1} parent=1 // pred_fallthru
      _
    // Predicated region
    $region26: #{tpu_custom_call.1} parent=1 // pred_check
      _
    $region27: #{tpu_custom_call.1} parent=1 // pred_check_branch
      %79 = sbr.rel (0) target = $region29
    $region28: #{tpu_custom_call.1} parent=1 // pred_region
      _
    $region29: #{tpu_custom_call.1} parent=1 // pred_fallthru
      _
    // Predicated region
    $region30: #{tpu_custom_call.1} parent=1 // pred_check
      _
    $region31: #{tpu_custom_call.1} parent=1 // pred_check_branch
      %81 = sbr.rel (0) target = $region33
    $region32: #{tpu_custom_call.1} parent=1 // pred_region
      _
    $region33: #{tpu_custom_call.1} parent=1 // pred_fallthru
      _
    // Predicated region
    $region34: #{tpu_custom_call.1} parent=1 // pred_check
      _
    $region35: #{tpu_custom_call.1} parent=1 // pred_check_branch
      %83 = sbr.rel (0) target = $region37
    $region36: #{tpu_custom_call.1} parent=1 // pred_region
      %s85 = ssub.s32 384, 384
      %86 = vsyncadd [#allocation9], %s85
      %s87 = sshll.u32 [#allocation10], 4
      %s88 = int_to_ptr.vmem [resolvable:$true] %s87
      %93 = dma.hbm_to_vmem [thread:$0]  %s8, 384, %s88, [#allocation9], 64, 64, 4
    $region37: #{tpu_custom_call.1} parent=1 // pred_fallthru
      _
    // Predicated region
    $region38: #{tpu_custom_call.1} parent=1 // pred_check
      _
    $region39: #{tpu_custom_call.1} parent=1 // pred_check_branch
      %95 = sbr.rel (0) target = $region41
    $region40: #{tpu_custom_call.1} parent=1 // pred_region
      _
    $region41: #{tpu_custom_call.1} parent=1 // pred_fallthru
      _
    // Predicated region
    $region42: #{tpu_custom_call.1} parent=1 // pred_check
      _
    $region43: #{tpu_custom_call.1} parent=1 // pred_check_branch
      %97 = sbr.rel (0) target = $region45
    $region44: #{tpu_custom_call.1} parent=1 // pred_region
      _
    $region45: #{tpu_custom_call.1} parent=1 // pred_fallthru
      _
    // Predicated region
    $region46: #{tpu_custom_call.1} parent=1 // pred_check
      _
    $region47: #{tpu_custom_call.1} parent=1 // pred_check_branch
      %99 = sbr.rel (0) target = $region49
    $region48: #{tpu_custom_call.1} parent=1 // pred_region
      _
    $region49: #{tpu_custom_call.1} parent=1 // pred_fallthru
      _
    // Predicated region
    $region50: #{tpu_custom_call.1} parent=1 // pred_check
      _
    $region51: #{tpu_custom_call.1} parent=1 // pred_check_branch
      %101 = sbr.rel (0) target = $region53
    $region52: #{tpu_custom_call.1} parent=1 // pred_region
      _
    $region53: #{tpu_custom_call.1} parent=1 // pred_fallthru
      _
    // Predicated region
    $region54: #{tpu_custom_call.1} parent=1 // pred_check
      _
    $region55: #{tpu_custom_call.1} parent=1 // pred_check_branch
      %103 = sbr.rel (0) target = $region57
    $region56: #{tpu_custom_call.1} parent=1 // pred_region
      _
    $region57: #{tpu_custom_call.1} parent=1 // pred_fallthru
      _
    // Predicated region
    $region58: #{tpu_custom_call.1} parent=1 // pred_check
      _
    $region59: #{tpu_custom_call.1} parent=1 // pred_check_branch
      %105 = sbr.rel (0) target = $region61
    $region60: #{tpu_custom_call.1} parent=1 // pred_region
      _
    $region61: #{tpu_custom_call.1} parent=1 // pred_fallthru
      _
    // Predicated region
    $region62: #{tpu_custom_call.1} parent=1 // pred_check
      _
    $region63: #{tpu_custom_call.1} parent=1 // pred_check_branch
      %107 = sbr.rel (0) target = $region65
    $region64: #{tpu_custom_call.1} parent=1 // pred_region
      _
    $region65: #{tpu_custom_call.1} parent=1 // pred_fallthru
      _
    // Predicated region
    $region66: #{tpu_custom_call.1} parent=1 // pred_check
      _
    $region67: #{tpu_custom_call.1} parent=1 // pred_check_branch
      %109 = sbr.rel (0) target = $region69
    $region68: #{tpu_custom_call.1} parent=1 // pred_region
      %s111 = ssub.s32 256, 256
      %112 = vsyncadd [#allocation12], %s111
      %s113 = sshll.u32 [#allocation11], 4
      %s114 = int_to_ptr.vmem [resolvable:$true] %s113
      %119 = dma.hbm_to_vmem [thread:$0]  %s16, 256, %s114, [#allocation12], 128, 128, 8
    $region69: #{tpu_custom_call.1} parent=1 // pred_fallthru
      _
    // Predicated region
    $region70: #{tpu_custom_call.1} parent=1 // pred_check
      _
    $region71: #{tpu_custom_call.1} parent=1 // pred_check_branch
      %121 = sbr.rel (0) target = $region73
    $region72: #{tpu_custom_call.1} parent=1 // pred_region
      %s123 = ssub.s32 256, 256
      %124 = vsyncadd [#allocation12], %s123
      %s125 = sshll.u32 [#allocation13], 4
      %s126 = int_to_ptr.vmem [resolvable:$true] %s125
      %131 = dma.hbm_to_vmem [thread:$0]  %s17, 256, %s126, [#allocation12], 128, 128, 8
    $region73: #{tpu_custom_call.1} parent=1 // pred_fallthru
      _
    // Predicated region
    $region74: #{tpu_custom_call.1} parent=1 // pred_check
      _
    $region75: #{tpu_custom_call.1} parent=1 // pred_check_branch
      %133 = sbr.rel (0) target = $region77
    $region76: #{tpu_custom_call.1} parent=1 // pred_region
      _
    $region77: #{tpu_custom_call.1} parent=1 // pred_fallthru
      _
    // Predicated region
    $region78: #{tpu_custom_call.1} parent=1 // pred_check
      _
    $region79: #{tpu_custom_call.1} parent=1 // pred_check_branch
      %135 = sbr.rel (0) target = $region81
    $region80: #{tpu_custom_call.1} parent=1 // pred_region
      _
    $region81: #{tpu_custom_call.1} parent=1 // pred_fallthru
      _
    // Predicated region
    $region82: #{tpu_custom_call.1} parent=1 // pred_check
      _
    $region83: #{tpu_custom_call.1} parent=1 // pred_check_branch
      %137 = sbr.rel (0) target = $region85
    $region84: #{tpu_custom_call.1} parent=1 // pred_region
      %138 = dma.done [#allocation3], 256
    $region85: #{tpu_custom_call.1} parent=1 // pred_fallthru
      _
    // Predicated region
    $region86: #{tpu_custom_call.1} parent=1 // pred_check
      _
    $region87: #{tpu_custom_call.1} parent=1 // pred_check_branch
      %140 = sbr.rel (0) target = $region89
    $region88: #{tpu_custom_call.1} parent=1 // pred_region
      %141 = dma.done [#allocation6], 2048
    $region89: #{tpu_custom_call.1} parent=1 // pred_fallthru
      _
    // Predicated region
    $region90: #{tpu_custom_call.1} parent=1 // pred_check
      _
    $region91: #{tpu_custom_call.1} parent=1 // pred_check_branch
      %143 = sbr.rel (0) target = $region93
    $region92: #{tpu_custom_call.1} parent=1 // pred_region
      %144 = dma.done [#allocation6], 256
    $region93: #{tpu_custom_call.1} parent=1 // pred_fallthru
      _
    // Predicated region
    $region94: #{tpu_custom_call.1} parent=1 // pred_check
      _
    $region95: #{tpu_custom_call.1} parent=1 // pred_check_branch
      %146 = sbr.rel (0) target = $region97
    $region96: #{tpu_custom_call.1} parent=1 // pred_region
      %147 = dma.done [#allocation9], 32
    $region97: #{tpu_custom_call.1} parent=1 // pred_fallthru
      _
    // Predicated region
    $region98: #{tpu_custom_call.1} parent=1 // pred_check
      _
    $region99: #{tpu_custom_call.1} parent=1 // pred_check_branch
      %149 = sbr.rel (0) target = $region101
    $region100: #{tpu_custom_call.1} parent=1 // pred_region
      %150 = dma.done [#allocation9], 384
    $region101: #{tpu_custom_call.1} parent=1 // pred_fallthru
      _
    // Predicated region
    $region102: #{tpu_custom_call.1} parent=1 // pred_check
      _
    $region103: #{tpu_custom_call.1} parent=1 // pred_check_branch
      %152 = sbr.rel (0) target = $region105
    $region104: #{tpu_custom_call.1} parent=1 // pred_region
      %153 = dma.done [#allocation12], 256
    $region105: #{tpu_custom_call.1} parent=1 // pred_fallthru
      _
    // Predicated region
    $region106: #{tpu_custom_call.1} parent=1 // pred_check
      _
    $region107: #{tpu_custom_call.1} parent=1 // pred_check_branch
      %155 = sbr.rel (0) target = $region109
    $region108: #{tpu_custom_call.1} parent=1 // pred_region
      %156 = dma.done [#allocation12], 256
    $region109: #{tpu_custom_call.1} parent=1 // pred_fallthru
      _
    %v158 = vld [vmem:[#allocation8] sm:$0x3]
    %vm159 = vcmask 1041408
    %v160 = vsel %vm159, %v158, 0.0
    %v161 = vrot.slane %v160, 4
    %v162 = vadd.f32 %v160, %v161
    %v163 = vrot.slane %v162, 2
    %v164 = vadd.f32 %v162, %v163
    %v165 = vrot.slane %v164, 1
    %v166 = vadd.f32 %v164, %v165
    %v167 = vld [vmem:[#allocation2] sm:$0xff]
    %v168 = vld [vmem:[#allocation2 + $0x8] sm:$0xff]
    %v169 = vld [vmem:[%s1] sm:$0xff]
    %v170 = vld [vmem:[%s1 + $0x8] sm:$0xff]
    %v171 = vld [vmem:[%s1 + $0x10] sm:$0xff]
    %v172 = vld [vmem:[%s1 + $0x18] sm:$0xff]
    %v173 = vld [vmem:[%s1 + $0x20] sm:$0xff]
    %v174 = vld [vmem:[%s1 + $0x28] sm:$0xff]
    %v175 = vld [vmem:[%s1 + $0x30] sm:$0xff]
    %v176 = vld [vmem:[%s1 + $0x38] sm:$0xff]
    %v177 = vld [vmem:[%s1 + $0x40] sm:$0xff]
    %v178 = vld [vmem:[%s1 + $0x48] sm:$0xff]
    %v179 = vld [vmem:[%s1 + $0x50] sm:$0xff]
    %v180 = vld [vmem:[%s1 + $0x58] sm:$0xff]
    %v181 = vld [vmem:[%s1 + $0x60] sm:$0xff]
    %v182 = vld [vmem:[%s1 + $0x68] sm:$0xff]
    %v183 = vld [vmem:[%s1 + $0x70] sm:$0xff]
    %v184 = vld [vmem:[%s1 + $0x78] sm:$0xff]
    %v185 = vld [vmem:[#allocation5] sm:$0xf]
    %v186 = vld [vmem:[#allocation5 + $0x4] sm:$0xf]
    %v187 = vld [vmem:[#allocation5 + $0x8] sm:$0xf]
    %v188 = vld [vmem:[#allocation5 + $0xc] sm:$0xf]
    %v189 = vld [vmem:[#allocation5 + $0x10] sm:$0xf]
    %v190 = vld [vmem:[#allocation5 + $0x14] sm:$0xf]
    %v191 = vld [vmem:[#allocation5 + $0x18] sm:$0xf]
    %v192 = vld [vmem:[#allocation5 + $0x1c] sm:$0xf]
    %v193 = vld [vmem:[#allocation5 + $0x20] sm:$0xf]
    %v194 = vld [vmem:[#allocation5 + $0x24] sm:$0xf]
    %v195 = vld [vmem:[#allocation5 + $0x28] sm:$0xf]
    %v196 = vld [vmem:[#allocation5 + $0x2c] sm:$0xf]
    %v197 = vld [vmem:[#allocation5 + $0x30] sm:$0xf]
    %v198 = vld [vmem:[#allocation5 + $0x34] sm:$0xf]
    %v199 = vld [vmem:[#allocation5 + $0x38] sm:$0xf]
    %v200 = vld [vmem:[#allocation5 + $0x3c] sm:$0xf]
    %v201 = vld [vmem:[#allocation5 + $0x40] sm:$0xf]
    %v202 = vld [vmem:[#allocation5 + $0x44] sm:$0xf]
    %v203 = vld [vmem:[#allocation5 + $0x48] sm:$0xf]
    %v204 = vld [vmem:[#allocation5 + $0x4c] sm:$0xf]
    %v205 = vld [vmem:[#allocation5 + $0x50] sm:$0xf]
    %v206 = vld [vmem:[#allocation5 + $0x54] sm:$0xf]
    %v207 = vld [vmem:[#allocation5 + $0x58] sm:$0xf]
    %v208 = vld [vmem:[#allocation5 + $0x5c] sm:$0xf]
    %v209 = vld [vmem:[#allocation5 + $0x60] sm:$0xf]
    %v210 = vld [vmem:[#allocation5 + $0x64] sm:$0xf]
    %v211 = vld [vmem:[#allocation5 + $0x68] sm:$0xf]
    %v212 = vld [vmem:[#allocation5 + $0x6c] sm:$0xf]
    %v213 = vld [vmem:[#allocation5 + $0x70] sm:$0xf]
    %v214 = vld [vmem:[#allocation5 + $0x74] sm:$0xf]
    %v215 = vld [vmem:[#allocation5 + $0x78] sm:$0xf]
    %v216 = vld [vmem:[#allocation5 + $0x7c] sm:$0xf]
    %v217 = vld [vmem:[#allocation7] sm:$0x3f]
    %v218 = vld [vmem:[#allocation7 + $0x8] sm:$0x3f]
    %v219 = vpack.c.bf16 %v168, %v167
    %v236 = vunpack.c.l.b16 %v169
    %v237 = vunpack.c.h.b16 %v169
    %v238 = vunpack.c.l.b16 %v170
    %v239 = vunpack.c.h.b16 %v170
    %v240 = vunpack.c.l.b16 %v171
    %v241 = vunpack.c.h.b16 %v171
    %v242 = vunpack.c.l.b16 %v172
    %v243 = vunpack.c.h.b16 %v172
    %v244 = vunpack.c.l.b16 %v173
    %v245 = vunpack.c.h.b16 %v173
    %v246 = vunpack.c.l.b16 %v174
    %v247 = vunpack.c.h.b16 %v174
    %v248 = vunpack.c.l.b16 %v175
    %v249 = vunpack.c.h.b16 %v175
    %v250 = vunpack.c.l.b16 %v176
    %v251 = vunpack.c.h.b16 %v176
    %v252 = vunpack.c.l.b16 %v177
    %v253 = vunpack.c.h.b16 %v177
    %v254 = vunpack.c.l.b16 %v178
    %v255 = vunpack.c.h.b16 %v178
    %v256 = vunpack.c.l.b16 %v179
    %v257 = vunpack.c.h.b16 %v179
    %v258 = vunpack.c.l.b16 %v180
    %v259 = vunpack.c.h.b16 %v180
    %v260 = vunpack.c.l.b16 %v181
    %v261 = vunpack.c.h.b16 %v181
    %v262 = vunpack.c.l.b16 %v182
    %v263 = vunpack.c.h.b16 %v182
    %v264 = vunpack.c.l.b16 %v183
    %v265 = vunpack.c.h.b16 %v183
    %v266 = vunpack.c.l.b16 %v184
    %v267 = vunpack.c.h.b16 %v184
    %v268 = vpack.c.b16 %v238, %v236
    %v269 = vpack.c.b16 %v239, %v237
    %v270 = vpack.c.b16 %v242, %v240
    %v271 = vpack.c.b16 %v243, %v241
    %v272 = vpack.c.b16 %v246, %v244
    %v273 = vpack.c.b16 %v247, %v245
    %v274 = vpack.c.b16 %v250, %v248
    %v275 = vpack.c.b16 %v251, %v249
    %v276 = vpack.c.b16 %v254, %v252
    %v277 = vpack.c.b16 %v255, %v253
    %v278 = vpack.c.b16 %v258, %v256
    %v279 = vpack.c.b16 %v259, %v257
    %v280 = vpack.c.b16 %v262, %v260
    %v281 = vpack.c.b16 %v263, %v261
    %v282 = vpack.c.b16 %v266, %v264
    %v283 = vpack.c.b16 %v267, %v265
    %300 = vmatprep.subr.bf16.mxu0 %v283
    %301 = vmatpush1.bf16.msra.mxu0 %v282
    %302 = vmatprep.subr.bf16.mxu0 %v281
    %303 = vmatpush1.bf16.msra.mxu0 %v280
    %304 = vmatprep.subr.bf16.mxu0 %v279
    %305 = vmatpush1.bf16.msra.mxu0 %v278
    %306 = vmatprep.subr.bf16.mxu0 %v277
    %307 = vmatpush1.bf16.msra.mxu0 %v276
    %308 = vmatprep.subr.bf16.mxu0 %v275
    %309 = vmatpush1.bf16.msra.mxu0 %v274
    %310 = vmatprep.subr.bf16.mxu0 %v273
    %311 = vmatpush1.bf16.msra.mxu0 %v272
    %312 = vmatprep.subr.bf16.mxu0 %v271
    %313 = vmatpush1.bf16.msra.mxu0 %v270
    %314 = vmatprep.subr.bf16.mxu0 %v269
    %315 = vmatpush1.bf16.msra.mxu0 %v268
    %316 = vmatprep.subr.bf16.mxu0 0
    %317 = vmatpush2.bf16.msra.mxu0 0
    %318 = vmatprep.subr.bf16.mxu0 0
    %319 = vmatpush2.bf16.msra.mxu0 0
    %320 = vmatprep.subr.bf16.mxu0 0
    %321 = vmatpush2.bf16.msra.mxu0 0
    %322 = vmatprep.subr.bf16.mxu0 0
    %323 = vmatpush2.bf16.msra.mxu0 0
    %324 = vmatprep.subr.bf16.mxu0 0
    %325 = vmatpush2.bf16.msra.mxu0 0
    %326 = vmatprep.subr.bf16.mxu0 0
    %327 = vmatpush2.bf16.msra.mxu0 0
    %328 = vmatprep.subr.bf16.mxu0 0
    %329 = vmatpush2.bf16.msra.mxu0 0
    %330 = vmatprep.subr.bf16.mxu0 0
    %331 = vmatpush2.bf16.msra.mxu0 0
    %332 = vmatprep.mubr.bf16.mxu0 0
    %333 = vmatmul.mubr.bf16.gmra.mxu0 %v219
    %v334 = vpop.f32.mrf.mxu0
    %v335 = vadd.f32 0.0, %v334
    %v336 = vpop.f32.mrf.mxu0
    %v337 = vadd.f32 0.0, %v336
    %v338 = vpop.f32.mrf.mxu0
    %v339 = vadd.f32 0.0, %v338
    %v340 = vpop.f32.mrf.mxu0
    %v341 = vadd.f32 0.0, %v340
    %342 = vdwg.mxu0
    %v343 = vlaneseq
    %v344 = vshrl.u32 %v343, 7
    %v345 = vsub.s32 0, %v344
    %v346 = vrot.slane %v217, %v345
    %v347 = vlaneseq
    %v348 = vshrl.u32 %v347, 7
    %v349 = vsub.s32 0, %v348
    %v350 = vrot.slane %v218, %v349
    %v351 = vmul.f32 %v335, %v346
    %v352 = vmul.f32 %v337, %v350
    %v353 = vmul.f32 %v339, %v346
    %v354 = vmul.f32 %v341, %v350
    %v355 = vlaneseq
    %v356 = vshrl.u32 %v355, 7
    %v357 = vsub.s32 1, %v356
    %v358 = vrot.slane %v217, %v357
    %v359 = vlaneseq
    %v360 = vshrl.u32 %v359, 7
    %v361 = vsub.s32 1, %v360
    %v362 = vrot.slane %v218, %v361
    %v363 = vmul.f32 %v335, %v358
    %v364 = vmul.f32 %v337, %v362
    %v365 = vmul.f32 %v339, %v358
    %v366 = vmul.f32 %v341, %v362
    %v367 = vpack.c.bf16 %v353, %v351
    %v368 = vpack.c.bf16 %v354, %v352
    %v369 = vpack.c.bf16 %v365, %v363
    %v370 = vpack.c.bf16 %v366, %v364
    %v403 = vunpack.c.l.b16 %v185
    %v404 = vunpack.c.l.b16 %v186
    %v405 = vunpack.c.l.b16 %v187
    %v406 = vunpack.c.l.b16 %v188
    %v407 = vunpack.c.l.b16 %v189
    %v408 = vunpack.c.l.b16 %v190
    %v409 = vunpack.c.l.b16 %v191
    %v410 = vunpack.c.l.b16 %v192
    %v411 = vunpack.c.l.b16 %v193
    %v412 = vunpack.c.l.b16 %v194
    %v413 = vunpack.c.l.b16 %v195
    %v414 = vunpack.c.l.b16 %v196
    %v415 = vunpack.c.l.b16 %v197
    %v416 = vunpack.c.l.b16 %v198
    %v417 = vunpack.c.l.b16 %v199
    %v418 = vunpack.c.l.b16 %v200
    %v419 = vunpack.c.l.b16 %v201
    %v420 = vunpack.c.l.b16 %v202
    %v421 = vunpack.c.l.b16 %v203
    %v422 = vunpack.c.l.b16 %v204
    %v423 = vunpack.c.l.b16 %v205
    %v424 = vunpack.c.l.b16 %v206
    %v425 = vunpack.c.l.b16 %v207
    %v426 = vunpack.c.l.b16 %v208
    %v427 = vunpack.c.l.b16 %v209
    %v428 = vunpack.c.l.b16 %v210
    %v429 = vunpack.c.l.b16 %v211
    %v430 = vunpack.c.l.b16 %v212
    %v431 = vunpack.c.l.b16 %v213
    %v432 = vunpack.c.l.b16 %v214
    %v433 = vunpack.c.l.b16 %v215
    %v434 = vunpack.c.l.b16 %v216
    %v435 = vpack.c.b16 %v404, %v403
    %v436 = vpack.c.b16 %v406, %v405
    %v437 = vpack.c.b16 %v408, %v407
    %v438 = vpack.c.b16 %v410, %v409
    %v439 = vpack.c.b16 %v412, %v411
    %v440 = vpack.c.b16 %v414, %v413
    %v441 = vpack.c.b16 %v416, %v415
    %v442 = vpack.c.b16 %v418, %v417
    %v443 = vpack.c.b16 %v420, %v419
    %v444 = vpack.c.b16 %v422, %v421
    %v445 = vpack.c.b16 %v424, %v423
    %v446 = vpack.c.b16 %v426, %v425
    %v447 = vpack.c.b16 %v428, %v427
    %v448 = vpack.c.b16 %v430, %v429
    %v449 = vpack.c.b16 %v432, %v431
    %v450 = vpack.c.b16 %v434, %v433
    %467 = vmatprep.subr.bf16.mxu0 0
    %468 = vmatpush1.bf16.msra.mxu0 %v442
    %469 = vmatprep.subr.bf16.mxu0 0
    %470 = vmatpush1.bf16.msra.mxu0 %v441
    %471 = vmatprep.subr.bf16.mxu0 0
    %472 = vmatpush1.bf16.msra.mxu0 %v440
    %473 = vmatprep.subr.bf16.mxu0 0
    %474 = vmatpush1.bf16.msra.mxu0 %v439
    %475 = vmatprep.subr.bf16.mxu0 0
    %476 = vmatpush1.bf16.msra.mxu0 %v438
    %477 = vmatprep.subr.bf16.mxu0 0
    %478 = vmatpush1.bf16.msra.mxu0 %v437
    %479 = vmatprep.subr.bf16.mxu0 0
    %480 = vmatpush1.bf16.msra.mxu0 %v436
    %481 = vmatprep.subr.bf16.mxu0 0
    %482 = vmatpush1.bf16.msra.mxu0 %v435
    %483 = vmatprep.subr.bf16.mxu0 0
    %484 = vmatpush2.bf16.msra.mxu0 %v450
    %485 = vmatprep.subr.bf16.mxu0 0
    %486 = vmatpush2.bf16.msra.mxu0 %v449
    %487 = vmatprep.subr.bf16.mxu0 0
    %488 = vmatpush2.bf16.msra.mxu0 %v448
    %489 = vmatprep.subr.bf16.mxu0 0
    %490 = vmatpush2.bf16.msra.mxu0 %v447
    %491 = vmatprep.subr.bf16.mxu0 0
    %492 = vmatpush2.bf16.msra.mxu0 %v446
    %493 = vmatprep.subr.bf16.mxu0 0
    %494 = vmatpush2.bf16.msra.mxu0 %v445
    %495 = vmatprep.subr.bf16.mxu0 0
    %496 = vmatpush2.bf16.msra.mxu0 %v444
    %497 = vmatprep.subr.bf16.mxu0 0
    %498 = vmatpush2.bf16.msra.mxu0 %v443
    %499 = vmatprep.mubr.bf16.mxu0 %v368
    %500 = vmatmul.mubr.bf16.gmra.mxu0 %v367
    %v501 = vpop.f32.mrf.mxu0
    %v502 = vadd.f32 0.0, %v501
    %v503 = vpop.f32.mrf.mxu0
    %v504 = vpop.f32.mrf.mxu0
    %v505 = vadd.f32 0.0, %v504
    %v506 = vpop.f32.mrf.mxu0
    %507 = vmatprep.mubr.bf16.mxu0 %v370
    %508 = vmatmul.mubr.bf16.gmra.mxu0 %v369
    %v509 = vpop.f32.mrf.mxu0
    %v510 = vadd.f32 0.0, %v509
    %v511 = vpop.f32.mrf.mxu0
    %v512 = vpop.f32.mrf.mxu0
    %v513 = vadd.f32 0.0, %v512
    %v514 = vpop.f32.mrf.mxu0
    %515 = vdwg.mxu0
    %v516 = vld [vmem:[%s5] sm:$0xf]
    %v517 = vld [vmem:[%s5 + $0x4] sm:$0xf]
    %v518 = vpack.c.bf16 %v505, %v502
    %v519 = vpack.c.bf16 %v513, %v510
    %v520 = vld [vmem:[%s6] sm:$0xf]
    %v521 = vld [vmem:[%s6 + $0x4] sm:$0xf]
    %v524 = vunpack.c.l.b16 %v520
    %v525 = vunpack.c.l.b16 %v521
    %v526 = vpack.c.b16 %v525, %v524
    %vm527 = vcmask 130048
    %v529 = vsel %vm527, %v526, 0
    %531 = vmatprep.subr.bf16.mxu0 0
    %532 = vmatpush1.bf16.msra.mxu0 0
    %533 = vmatprep.subr.bf16.mxu0 0
    %534 = vmatpush1.bf16.msra.mxu0 0
    %535 = vmatprep.subr.bf16.mxu0 0
    %536 = vmatpush1.bf16.msra.mxu0 0
    %537 = vmatprep.subr.bf16.mxu0 0
    %538 = vmatpush1.bf16.msra.mxu0 0
    %539 = vmatprep.subr.bf16.mxu0 0
    %540 = vmatpush1.bf16.msra.mxu0 0
    %541 = vmatprep.subr.bf16.mxu0 0
    %542 = vmatpush1.bf16.msra.mxu0 0
    %543 = vmatprep.subr.bf16.mxu0 0
    %544 = vmatpush1.bf16.msra.mxu0 0
    %545 = vmatprep.subr.bf16.mxu0 0
    %546 = vmatpush1.bf16.msra.mxu0 %v219
    %547 = vmatprep.subr.bf16.mxu0 0
    %548 = vmatpush2.bf16.msra.mxu0 0
    %549 = vmatprep.subr.bf16.mxu0 0
    %550 = vmatpush2.bf16.msra.mxu0 0
    %551 = vmatprep.subr.bf16.mxu0 0
    %552 = vmatpush2.bf16.msra.mxu0 0
    %553 = vmatprep.subr.bf16.mxu0 0
    %554 = vmatpush2.bf16.msra.mxu0 0
    %555 = vmatprep.subr.bf16.mxu0 0
    %556 = vmatpush2.bf16.msra.mxu0 0
    %557 = vmatprep.subr.bf16.mxu0 0
    %558 = vmatpush2.bf16.msra.mxu0 0
    %559 = vmatprep.subr.bf16.mxu0 0
    %560 = vmatpush2.bf16.msra.mxu0 0
    %561 = vmatprep.subr.bf16.mxu0 0
    %562 = vmatpush2.bf16.msra.mxu0 0
    %563 = vmatprep.mubr.bf16.mxu0 0
    %564 = vmatmul.mubr.bf16.gmra.mxu0 %v529
    %v565 = vpop.f32.mrf.mxu0
    %v566 = vadd.f32 0.0, %v565
    %v567 = vpop.f32.mrf.mxu0
    %v568 = vpop.f32.mrf.mxu0
    %v569 = vadd.f32 0.0, %v568
    %v570 = vpop.f32.mrf.mxu0
    %571 = vdwg.mxu0
    %v574 = vunpack.c.l.b16 %v516
    %v575 = vunpack.c.l.b16 %v517
    %v576 = vpack.c.b16 %v575, %v574
    %vm577 = vcmask 261120
    %v579 = vsel %vm577, %v576, 0
    %581 = vmatprep.subr.bf16.mxu0 0
    %582 = vmatpush1.bf16.msra.mxu0 0
    %583 = vmatprep.subr.bf16.mxu0 0
    %584 = vmatpush1.bf16.msra.mxu0 0
    %585 = vmatprep.subr.bf16.mxu0 0
    %586 = vmatpush1.bf16.msra.mxu0 0
    %587 = vmatprep.subr.bf16.mxu0 0
    %588 = vmatpush1.bf16.msra.mxu0 0
    %589 = vmatprep.subr.bf16.mxu0 0
    %590 = vmatpush1.bf16.msra.mxu0 0
    %591 = vmatprep.subr.bf16.mxu0 0
    %592 = vmatpush1.bf16.msra.mxu0 0
    %593 = vmatprep.subr.bf16.mxu0 0
    %594 = vmatpush1.bf16.msra.mxu0 %v519
    %595 = vmatprep.subr.bf16.mxu0 0
    %596 = vmatpush1.bf16.msra.mxu0 %v518
    %597 = vmatprep.subr.bf16.mxu0 0
    %598 = vmatpush2.bf16.msra.mxu0 0
    %599 = vmatprep.subr.bf16.mxu0 0
    %600 = vmatpush2.bf16.msra.mxu0 0
    %601 = vmatprep.subr.bf16.mxu0 0
    %602 = vmatpush2.bf16.msra.mxu0 0
    %603 = vmatprep.subr.bf16.mxu0 0
    %604 = vmatpush2.bf16.msra.mxu0 0
    %605 = vmatprep.subr.bf16.mxu0 0
    %606 = vmatpush2.bf16.msra.mxu0 0
    %607 = vmatprep.subr.bf16.mxu0 0
    %608 = vmatpush2.bf16.msra.mxu0 0
    %609 = vmatprep.subr.bf16.mxu0 0
    %610 = vmatpush2.bf16.msra.mxu0 0
    %611 = vmatprep.subr.bf16.mxu0 0
    %612 = vmatpush2.bf16.msra.mxu0 0
    %613 = vmatprep.mubr.bf16.mxu0 0
    %614 = vmatmul.mubr.bf16.gmra.mxu0 %v579
    %v615 = vpop.f32.mrf.mxu0
    %v616 = vadd.f32 %v566, %v615
    %v617 = vpop.f32.mrf.mxu0
    %v618 = vpop.f32.mrf.mxu0
    %v619 = vadd.f32 %v569, %v618
    %v620 = vpop.f32.mrf.mxu0
    %621 = vdwg.mxu0
    %v622 = vld [vmem:[%s7] sm:$0xff]
    %v623 = vld [vmem:[%s7 + $0x8] sm:$0xff]
    %625 = vset.pattern.permute.xlu0 0
    %626 = vperm.xlu0 %625, %v622
    %v627 = vpop.permute.xlu0 %626
    %630 = vset.pattern.permute.xlu0 0
    %631 = vperm.xlu0 %630, %v623
    %v632 = vpop.permute.xlu0 %631
    %v634 = vadd.f32 %v616, %v627
    %v635 = vadd.f32 %v619, %v632
    %vm636 = vcmp.gt.f32.partialorder %v634, 0.0
    %vm637 = vcmp.gt.f32.partialorder %v635, 0.0
    %v638 = vmul.f32 %v634, 0.01
    %v639 = vmul.f32 %v635, 0.01
    %v640 = vsel %vm636, %v634, %v638
    %v641 = vsel %vm637, %v635, %v639
    %v642 = vld [vmem:[#allocation10] sm:$0xf]
    %v643 = vld [vmem:[#allocation10 + $0x4] sm:$0xf]
    %v644 = vpack.c.bf16 %v641, %v640
    %v645 = vld [vmem:[%s9] sm:$0xff]
    %v646 = vld [vmem:[%s9 + $0x8] sm:$0xff]
    %648 = vset.pattern.permute.xlu0 0
    %649 = vperm.xlu0 %648, %v645
    %v650 = vpop.permute.xlu0 %649
    %653 = vset.pattern.permute.xlu0 0
    %654 = vperm.xlu0 %653, %v646
    %v655 = vpop.permute.xlu0 %654
    %v659 = vunpack.c.l.b16 %v642
    %v660 = vunpack.c.l.b16 %v643
    %v661 = vpack.c.b16 %v660, %v659
    %v663 = vsel %vm527, %v661, 0
    %665 = vmatprep.subr.bf16.mxu0 0
    %666 = vmatpush1.bf16.msra.mxu0 0
    %667 = vmatprep.subr.bf16.mxu0 0
    %668 = vmatpush1.bf16.msra.mxu0 0
    %669 = vmatprep.subr.bf16.mxu0 0
    %670 = vmatpush1.bf16.msra.mxu0 0
    %671 = vmatprep.subr.bf16.mxu0 0
    %672 = vmatpush1.bf16.msra.mxu0 0
    %673 = vmatprep.subr.bf16.mxu0 0
    %674 = vmatpush1.bf16.msra.mxu0 0
    %675 = vmatprep.subr.bf16.mxu0 0
    %676 = vmatpush1.bf16.msra.mxu0 0
    %677 = vmatprep.subr.bf16.mxu0 0
    %678 = vmatpush1.bf16.msra.mxu0 0
    %679 = vmatprep.subr.bf16.mxu0 0
    %680 = vmatpush1.bf16.msra.mxu0 %v644
    %681 = vmatprep.subr.bf16.mxu0 0
    %682 = vmatpush2.bf16.msra.mxu0 0
    %683 = vmatprep.subr.bf16.mxu0 0
    %684 = vmatpush2.bf16.msra.mxu0 0
    %685 = vmatprep.subr.bf16.mxu0 0
    %686 = vmatpush2.bf16.msra.mxu0 0
    %687 = vmatprep.subr.bf16.mxu0 0
    %688 = vmatpush2.bf16.msra.mxu0 0
    %689 = vmatprep.subr.bf16.mxu0 0
    %690 = vmatpush2.bf16.msra.mxu0 0
    %691 = vmatprep.subr.bf16.mxu0 0
    %692 = vmatpush2.bf16.msra.mxu0 0
    %693 = vmatprep.subr.bf16.mxu0 0
    %694 = vmatpush2.bf16.msra.mxu0 0
    %695 = vmatprep.subr.bf16.mxu0 0
    %696 = vmatpush2.bf16.msra.mxu0 0
    %697 = vmatprep.mubr.bf16.mxu0 0
    %698 = vmatmul.mubr.bf16.gmra.mxu0 %v663
    %v699 = vpop.f32.mrf.mxu0
    %v700 = vadd.f32 %v650, %v699
    %v701 = vpop.f32.mrf.mxu0
    %v702 = vpop.f32.mrf.mxu0
    %v703 = vadd.f32 %v655, %v702
    %v704 = vpop.f32.mrf.mxu0
    %705 = vdwg.mxu0
    %vm706 = vcmp.gt.f32.partialorder %v700, 0.0
    %vm707 = vcmp.gt.f32.partialorder %v703, 0.0
    %v708 = vmul.f32 %v700, 0.01
    %v709 = vmul.f32 %v703, 0.01
    %v710 = vsel %vm706, %v700, %v708
    %v711 = vsel %vm707, %v703, %v709
    %v712 = vmul.f32 %v710, %v166
    %v713 = vmul.f32 %v711, %v166
    %714 = vadd.xlane.f32.xlu0 %v712
    %v715 = vpop.xlane.xlu0 %714
    %716 = vadd.xlane.f32.xlu0 %v713
    %v717 = vpop.xlane.xlu0 %716
    %v718 = vmul.f32 %v715, 0.0078125
    %v719 = vmul.f32 %v717, 0.0078125
    %v720 = vsub.f32 %v710, %v718
    %v721 = vsub.f32 %v711, %v719
    %v722 = vmul.f32 %v720, %v720
    %v723 = vmul.f32 %v721, %v721
    %v724 = vmul.f32 %v722, %v166
    %v725 = vmul.f32 %v723, %v166
    %726 = vadd.xlane.f32.xlu0 %v724
    %v727 = vpop.xlane.xlu0 %726
    %728 = vadd.xlane.f32.xlu0 %v725
    %v729 = vpop.xlane.xlu0 %728
    %v730 = vmul.f32 %v727, 0.0078125
    %v731 = vmul.f32 %v729, 0.0078125
    %v732 = vadd.f32 %v730, 1e-05
    %v733 = vadd.f32 %v731, 1e-05
    %v734 = vrsqrt.pop %v732
    %v735 = vrsqrt.pop %v733
    %v736 = vmul.f32 %v720, %v734
    %v737 = vmul.f32 %v721, %v735
    %v738 = vld [vmem:[%s10] sm:$0xff]
    %v739 = vld [vmem:[%s10 + $0x8] sm:$0xff]
    %741 = vset.pattern.permute.xlu0 0
    %742 = vperm.xlu0 %741, %v738
    %v743 = vpop.permute.xlu0 %742
    %746 = vset.pattern.permute.xlu0 0
    %747 = vperm.xlu0 %746, %v739
    %v748 = vpop.permute.xlu0 %747
    %v750 = vmul.f32 %v736, %v743
    %v751 = vmul.f32 %v737, %v748
    %v752 = vld [vmem:[%s11] sm:$0xff]
    %v753 = vld [vmem:[%s11 + $0x8] sm:$0xff]
    %755 = vset.pattern.permute.xlu0 0
    %756 = vperm.xlu0 %755, %v752
    %v757 = vpop.permute.xlu0 %756
    %760 = vset.pattern.permute.xlu0 0
    %761 = vperm.xlu0 %760, %v753
    %v762 = vpop.permute.xlu0 %761
    %v764 = vadd.f32 %v750, %v757
    %v765 = vadd.f32 %v751, %v762
    %v766 = vpack.c.bf16 %v765, %v764
    %767 = vmatprep.subr.bf16.mxu0 %v283
    %768 = vmatpush1.bf16.msra.mxu0 %v282
    %769 = vmatprep.subr.bf16.mxu0 %v281
    %770 = vmatpush1.bf16.msra.mxu0 %v280
    %771 = vmatprep.subr.bf16.mxu0 %v279
    %772 = vmatpush1.bf16.msra.mxu0 %v278
    %773 = vmatprep.subr.bf16.mxu0 %v277
    %774 = vmatpush1.bf16.msra.mxu0 %v276
    %775 = vmatprep.subr.bf16.mxu0 %v275
    %776 = vmatpush1.bf16.msra.mxu0 %v274
    %777 = vmatprep.subr.bf16.mxu0 %v273
    %778 = vmatpush1.bf16.msra.mxu0 %v272
    %779 = vmatprep.subr.bf16.mxu0 %v271
    %780 = vmatpush1.bf16.msra.mxu0 %v270
    %781 = vmatprep.subr.bf16.mxu0 %v269
    %782 = vmatpush1.bf16.msra.mxu0 %v268
    %783 = vmatprep.subr.bf16.mxu0 0
    %784 = vmatpush2.bf16.msra.mxu0 0
    %785 = vmatprep.subr.bf16.mxu0 0
    %786 = vmatpush2.bf16.msra.mxu0 0
    %787 = vmatprep.subr.bf16.mxu0 0
    %788 = vmatpush2.bf16.msra.mxu0 0
    %789 = vmatprep.subr.bf16.mxu0 0
    %790 = vmatpush2.bf16.msra.mxu0 0
    %791 = vmatprep.subr.bf16.mxu0 0
    %792 = vmatpush2.bf16.msra.mxu0 0
    %793 = vmatprep.subr.bf16.mxu0 0
    %794 = vmatpush2.bf16.msra.mxu0 0
    %795 = vmatprep.subr.bf16.mxu0 0
    %796 = vmatpush2.bf16.msra.mxu0 0
    %797 = vmatprep.subr.bf16.mxu0 0
    %798 = vmatpush2.bf16.msra.mxu0 0
    %799 = vmatprep.mubr.bf16.mxu0 0
    %800 = vmatmul.mubr.bf16.gmra.mxu0 %v766
    %v801 = vpop.f32.mrf.mxu0
    %v802 = vadd.f32 0.0, %v801
    %v803 = vpop.f32.mrf.mxu0
    %v804 = vadd.f32 0.0, %v803
    %v805 = vpop.f32.mrf.mxu0
    %v806 = vadd.f32 0.0, %v805
    %v807 = vpop.f32.mrf.mxu0
    %v808 = vadd.f32 0.0, %v807
    %809 = vdwg.mxu0
    %v810 = vlaneseq
    %v811 = vshrl.u32 %v810, 7
    %v812 = vsub.s32 2, %v811
    %v813 = vrot.slane %v217, %v812
    %v814 = vlaneseq
    %v815 = vshrl.u32 %v814, 7
    %v816 = vsub.s32 2, %v815
    %v817 = vrot.slane %v218, %v816
    %v818 = vmul.f32 %v802, %v813
    %v819 = vmul.f32 %v804, %v817
    %v820 = vmul.f32 %v806, %v813
    %v821 = vmul.f32 %v808, %v817
    %v822 = vlaneseq
    %v823 = vshrl.u32 %v822, 7
    %v824 = vsub.s32 3, %v823
    %v825 = vrot.slane %v217, %v824
    %v826 = vlaneseq
    %v827 = vshrl.u32 %v826, 7
    %v828 = vsub.s32 3, %v827
    %v829 = vrot.slane %v218, %v828
    %v830 = vmul.f32 %v802, %v825
    %v831 = vmul.f32 %v804, %v829
    %v832 = vmul.f32 %v806, %v825
    %v833 = vmul.f32 %v808, %v829
    %v834 = vpack.c.bf16 %v820, %v818
    %v835 = vpack.c.bf16 %v821, %v819
    %v836 = vpack.c.bf16 %v832, %v830
    %v837 = vpack.c.bf16 %v833, %v831
    %838 = vmatprep.subr.bf16.mxu0 0
    %839 = vmatpush1.bf16.msra.mxu0 %v442
    %840 = vmatprep.subr.bf16.mxu0 0
    %841 = vmatpush1.bf16.msra.mxu0 %v441
    %842 = vmatprep.subr.bf16.mxu0 0
    %843 = vmatpush1.bf16.msra.mxu0 %v440
    %844 = vmatprep.subr.bf16.mxu0 0
    %845 = vmatpush1.bf16.msra.mxu0 %v439
    %846 = vmatprep.subr.bf16.mxu0 0
    %847 = vmatpush1.bf16.msra.mxu0 %v438
    %848 = vmatprep.subr.bf16.mxu0 0
    %849 = vmatpush1.bf16.msra.mxu0 %v437
    %850 = vmatprep.subr.bf16.mxu0 0
    %851 = vmatpush1.bf16.msra.mxu0 %v436
    %852 = vmatprep.subr.bf16.mxu0 0
    %853 = vmatpush1.bf16.msra.mxu0 %v435
    %854 = vmatprep.subr.bf16.mxu0 0
    %855 = vmatpush2.bf16.msra.mxu0 %v450
    %856 = vmatprep.subr.bf16.mxu0 0
    %857 = vmatpush2.bf16.msra.mxu0 %v449
    %858 = vmatprep.subr.bf16.mxu0 0
    %859 = vmatpush2.bf16.msra.mxu0 %v448
    %860 = vmatprep.subr.bf16.mxu0 0
    %861 = vmatpush2.bf16.msra.mxu0 %v447
    %862 = vmatprep.subr.bf16.mxu0 0
    %863 = vmatpush2.bf16.msra.mxu0 %v446
    %864 = vmatprep.subr.bf16.mxu0 0
    %865 = vmatpush2.bf16.msra.mxu0 %v445
    %866 = vmatprep.subr.bf16.mxu0 0
    %867 = vmatpush2.bf16.msra.mxu0 %v444
    %868 = vmatprep.subr.bf16.mxu0 0
    %869 = vmatpush2.bf16.msra.mxu0 %v443
    %870 = vmatprep.mubr.bf16.mxu0 %v835
    %871 = vmatmul.mubr.bf16.gmra.mxu0 %v834
    %v872 = vpop.f32.mrf.mxu0
    %v873 = vadd.f32 0.0, %v872
    %v874 = vpop.f32.mrf.mxu0
    %v875 = vpop.f32.mrf.mxu0
    %v876 = vadd.f32 0.0, %v875
    %v877 = vpop.f32.mrf.mxu0
    %878 = vmatprep.mubr.bf16.mxu0 %v837
    %879 = vmatmul.mubr.bf16.gmra.mxu0 %v836
    %v880 = vpop.f32.mrf.mxu0
    %v881 = vadd.f32 0.0, %v880
    %v882 = vpop.f32.mrf.mxu0
    %v883 = vpop.f32.mrf.mxu0
    %v884 = vadd.f32 0.0, %v883
    %v885 = vpop.f32.mrf.mxu0
    %886 = vdwg.mxu0
    %s887 = scalar_lea.vmem %s5, 8
    %v888 = vld [vmem:[%s887] sm:$0xf]
    %v889 = vld [vmem:[%s887 + $0x4] sm:$0xf]
    %v890 = vpack.c.bf16 %v876, %v873
    %v891 = vpack.c.bf16 %v884, %v881
    %s892 = scalar_lea.vmem %s6, 8
    %v893 = vld [vmem:[%s892] sm:$0xf]
    %v894 = vld [vmem:[%s892 + $0x4] sm:$0xf]
    %v897 = vunpack.c.l.b16 %v893
    %v898 = vunpack.c.l.b16 %v894
    %v899 = vpack.c.b16 %v898, %v897
    %v901 = vsel %vm527, %v899, 0
    %903 = vmatprep.subr.bf16.mxu0 0
    %904 = vmatpush1.bf16.msra.mxu0 0
    %905 = vmatprep.subr.bf16.mxu0 0
    %906 = vmatpush1.bf16.msra.mxu0 0
    %907 = vmatprep.subr.bf16.mxu0 0
    %908 = vmatpush1.bf16.msra.mxu0 0
    %909 = vmatprep.subr.bf16.mxu0 0
    %910 = vmatpush1.bf16.msra.mxu0 0
    %911 = vmatprep.subr.bf16.mxu0 0
    %912 = vmatpush1.bf16.msra.mxu0 0
    %913 = vmatprep.subr.bf16.mxu0 0
    %914 = vmatpush1.bf16.msra.mxu0 0
    %915 = vmatprep.subr.bf16.mxu0 0
    %916 = vmatpush1.bf16.msra.mxu0 0
    %917 = vmatprep.subr.bf16.mxu0 0
    %918 = vmatpush1.bf16.msra.mxu0 %v766
    %919 = vmatprep.subr.bf16.mxu0 0
    %920 = vmatpush2.bf16.msra.mxu0 0
    %921 = vmatprep.subr.bf16.mxu0 0
    %922 = vmatpush2.bf16.msra.mxu0 0
    %923 = vmatprep.subr.bf16.mxu0 0
    %924 = vmatpush2.bf16.msra.mxu0 0
    %925 = vmatprep.subr.bf16.mxu0 0
    %926 = vmatpush2.bf16.msra.mxu0 0
    %927 = vmatprep.subr.bf16.mxu0 0
    %928 = vmatpush2.bf16.msra.mxu0 0
    %929 = vmatprep.subr.bf16.mxu0 0
    %930 = vmatpush2.bf16.msra.mxu0 0
    %931 = vmatprep.subr.bf16.mxu0 0
    %932 = vmatpush2.bf16.msra.mxu0 0
    %933 = vmatprep.subr.bf16.mxu0 0
    %934 = vmatpush2.bf16.msra.mxu0 0
    %935 = vmatprep.mubr.bf16.mxu0 0
    %936 = vmatmul.mubr.bf16.gmra.mxu0 %v901
    %v937 = vpop.f32.mrf.mxu0
    %v938 = vadd.f32 0.0, %v937
    %v939 = vpop.f32.mrf.mxu0
    %v940 = vpop.f32.mrf.mxu0
    %v941 = vadd.f32 0.0, %v940
    %v942 = vpop.f32.mrf.mxu0
    %943 = vdwg.mxu0
    %v946 = vunpack.c.l.b16 %v888
    %v947 = vunpack.c.l.b16 %v889
    %v948 = vpack.c.b16 %v947, %v946
    %v950 = vsel %vm577, %v948, 0
    %952 = vmatprep.subr.bf16.mxu0 0
    %953 = vmatpush1.bf16.msra.mxu0 0
    %954 = vmatprep.subr.bf16.mxu0 0
    %955 = vmatpush1.bf16.msra.mxu0 0
    %956 = vmatprep.subr.bf16.mxu0 0
    %957 = vmatpush1.bf16.msra.mxu0 0
    %958 = vmatprep.subr.bf16.mxu0 0
    %959 = vmatpush1.bf16.msra.mxu0 0
    %960 = vmatprep.subr.bf16.mxu0 0
    %961 = vmatpush1.bf16.msra.mxu0 0
    %962 = vmatprep.subr.bf16.mxu0 0
    %963 = vmatpush1.bf16.msra.mxu0 0
    %964 = vmatprep.subr.bf16.mxu0 0
    %965 = vmatpush1.bf16.msra.mxu0 %v891
    %966 = vmatprep.subr.bf16.mxu0 0
    %967 = vmatpush1.bf16.msra.mxu0 %v890
    %968 = vmatprep.subr.bf16.mxu0 0
    %969 = vmatpush2.bf16.msra.mxu0 0
    %970 = vmatprep.subr.bf16.mxu0 0
    %971 = vmatpush2.bf16.msra.mxu0 0
    %972 = vmatprep.subr.bf16.mxu0 0
    %973 = vmatpush2.bf16.msra.mxu0 0
    %974 = vmatprep.subr.bf16.mxu0 0
    %975 = vmatpush2.bf16.msra.mxu0 0
    %976 = vmatprep.subr.bf16.mxu0 0
    %977 = vmatpush2.bf16.msra.mxu0 0
    %978 = vmatprep.subr.bf16.mxu0 0
    %979 = vmatpush2.bf16.msra.mxu0 0
    %980 = vmatprep.subr.bf16.mxu0 0
    %981 = vmatpush2.bf16.msra.mxu0 0
    %982 = vmatprep.subr.bf16.mxu0 0
    %983 = vmatpush2.bf16.msra.mxu0 0
    %984 = vmatprep.mubr.bf16.mxu0 0
    %985 = vmatmul.mubr.bf16.gmra.mxu0 %v950
    %v986 = vpop.f32.mrf.mxu0
    %v987 = vadd.f32 %v938, %v986
    %v988 = vpop.f32.mrf.mxu0
    %v989 = vpop.f32.mrf.mxu0
    %v990 = vadd.f32 %v941, %v989
    %v991 = vpop.f32.mrf.mxu0
    %992 = vdwg.mxu0
    %s993 = scalar_lea.vmem %s7, 16
    %v994 = vld [vmem:[%s993] sm:$0xff]
    %v995 = vld [vmem:[%s993 + $0x8] sm:$0xff]
    %997 = vset.pattern.permute.xlu0 0
    %998 = vperm.xlu0 %997, %v994
    %v999 = vpop.permute.xlu0 %998
    %1002 = vset.pattern.permute.xlu0 0
    %1003 = vperm.xlu0 %1002, %v995
    %v1004 = vpop.permute.xlu0 %1003
    %v1006 = vadd.f32 %v987, %v999
    %v1007 = vadd.f32 %v990, %v1004
    %vm1008 = vcmp.gt.f32.partialorder %v1006, 0.0
    %vm1009 = vcmp.gt.f32.partialorder %v1007, 0.0
    %v1010 = vmul.f32 %v1006, 0.01
    %v1011 = vmul.f32 %v1007, 0.01
    %v1012 = vsel %vm1008, %v1006, %v1010
    %v1013 = vsel %vm1009, %v1007, %v1011
    %s1014 = scalar_lea.vmem [#allocation10], 8
    %v1015 = vld [vmem:[%s1014] sm:$0xf]
    %v1016 = vld [vmem:[%s1014 + $0x4] sm:$0xf]
    %v1017 = vpack.c.bf16 %v1013, %v1012
    %s1018 = scalar_lea.vmem %s9, 16
    %v1019 = vld [vmem:[%s1018] sm:$0xff]
    %v1020 = vld [vmem:[%s1018 + $0x8] sm:$0xff]
    %1022 = vset.pattern.permute.xlu0 0
    %1023 = vperm.xlu0 %1022, %v1019
    %v1024 = vpop.permute.xlu0 %1023
    %1027 = vset.pattern.permute.xlu0 0
    %1028 = vperm.xlu0 %1027, %v1020
    %v1029 = vpop.permute.xlu0 %1028
    %v1033 = vunpack.c.l.b16 %v1015
    %v1034 = vunpack.c.l.b16 %v1016
    %v1035 = vpack.c.b16 %v1034, %v1033
    %v1037 = vsel %vm527, %v1035, 0
    %1039 = vmatprep.subr.bf16.mxu0 0
    %1040 = vmatpush1.bf16.msra.mxu0 0
    %1041 = vmatprep.subr.bf16.mxu0 0
    %1042 = vmatpush1.bf16.msra.mxu0 0
    %1043 = vmatprep.subr.bf16.mxu0 0
    %1044 = vmatpush1.bf16.msra.mxu0 0
    %1045 = vmatprep.subr.bf16.mxu0 0
    %1046 = vmatpush1.bf16.msra.mxu0 0
    %1047 = vmatprep.subr.bf16.mxu0 0
    %1048 = vmatpush1.bf16.msra.mxu0 0
    %1049 = vmatprep.subr.bf16.mxu0 0
    %1050 = vmatpush1.bf16.msra.mxu0 0
    %1051 = vmatprep.subr.bf16.mxu0 0
    %1052 = vmatpush1.bf16.msra.mxu0 0
    %1053 = vmatprep.subr.bf16.mxu0 0
    %1054 = vmatpush1.bf16.msra.mxu0 %v1017
    %1055 = vmatprep.subr.bf16.mxu0 0
    %1056 = vmatpush2.bf16.msra.mxu0 0
    %1057 = vmatprep.subr.bf16.mxu0 0
    %1058 = vmatpush2.bf16.msra.mxu0 0
    %1059 = vmatprep.subr.bf16.mxu0 0
    %1060 = vmatpush2.bf16.msra.mxu0 0
    %1061 = vmatprep.subr.bf16.mxu0 0
    %1062 = vmatpush2.bf16.msra.mxu0 0
    %1063 = vmatprep.subr.bf16.mxu0 0
    %1064 = vmatpush2.bf16.msra.mxu0 0
    %1065 = vmatprep.subr.bf16.mxu0 0
    %1066 = vmatpush2.bf16.msra.mxu0 0
    %1067 = vmatprep.subr.bf16.mxu0 0
    %1068 = vmatpush2.bf16.msra.mxu0 0
    %1069 = vmatprep.subr.bf16.mxu0 0
    %1070 = vmatpush2.bf16.msra.mxu0 0
    %1071 = vmatprep.mubr.bf16.mxu0 0
    %1072 = vmatmul.mubr.bf16.gmra.mxu0 %v1037
    %v1073 = vpop.f32.mrf.mxu0
    %v1074 = vadd.f32 %v1024, %v1073
    %v1075 = vpop.f32.mrf.mxu0
    %v1076 = vpop.f32.mrf.mxu0
    %v1077 = vadd.f32 %v1029, %v1076
    %v1078 = vpop.f32.mrf.mxu0
    %1079 = vdwg.mxu0
    %vm1080 = vcmp.gt.f32.partialorder %v1074, 0.0
    %vm1081 = vcmp.gt.f32.partialorder %v1077, 0.0
    %v1082 = vmul.f32 %v1074, 0.01
    %v1083 = vmul.f32 %v1077, 0.01
    %v1084 = vsel %vm1080, %v1074, %v1082
    %v1085 = vsel %vm1081, %v1077, %v1083
    %v1086 = vmul.f32 %v1084, %v166
    %v1087 = vmul.f32 %v1085, %v166
    %1088 = vadd.xlane.f32.xlu0 %v1086
    %v1089 = vpop.xlane.xlu0 %1088
    %1090 = vadd.xlane.f32.xlu0 %v1087
    %v1091 = vpop.xlane.xlu0 %1090
    %v1092 = vmul.f32 %v1089, 0.0078125
    %v1093 = vmul.f32 %v1091, 0.0078125
    %v1094 = vsub.f32 %v1084, %v1092
    %v1095 = vsub.f32 %v1085, %v1093
    %v1096 = vmul.f32 %v1094, %v1094
    %v1097 = vmul.f32 %v1095, %v1095
    %v1098 = vmul.f32 %v1096, %v166
    %v1099 = vmul.f32 %v1097, %v166
    %1100 = vadd.xlane.f32.xlu0 %v1098
    %v1101 = vpop.xlane.xlu0 %1100
    %1102 = vadd.xlane.f32.xlu0 %v1099
    %v1103 = vpop.xlane.xlu0 %1102
    %v1104 = vmul.f32 %v1101, 0.0078125
    %v1105 = vmul.f32 %v1103, 0.0078125
    %v1106 = vadd.f32 %v1104, 1e-05
    %v1107 = vadd.f32 %v1105, 1e-05
    %v1108 = vrsqrt.pop %v1106
    %v1109 = vrsqrt.pop %v1107
    %v1110 = vmul.f32 %v1094, %v1108
    %v1111 = vmul.f32 %v1095, %v1109
    %s1112 = scalar_lea.vmem %s10, 16
    %v1113 = vld [vmem:[%s1112] sm:$0xff]
    %v1114 = vld [vmem:[%s1112 + $0x8] sm:$0xff]
    %1116 = vset.pattern.permute.xlu0 0
    %1117 = vperm.xlu0 %1116, %v1113
    %v1118 = vpop.permute.xlu0 %1117
    %1121 = vset.pattern.permute.xlu0 0
    %1122 = vperm.xlu0 %1121, %v1114
    %v1123 = vpop.permute.xlu0 %1122
    %v1125 = vmul.f32 %v1110, %v1118
    %v1126 = vmul.f32 %v1111, %v1123
    %s1127 = scalar_lea.vmem %s11, 16
    %v1128 = vld [vmem:[%s1127] sm:$0xff]
    %v1129 = vld [vmem:[%s1127 + $0x8] sm:$0xff]
    %1131 = vset.pattern.permute.xlu0 0
    %1132 = vperm.xlu0 %1131, %v1128
    %v1133 = vpop.permute.xlu0 %1132
    %1136 = vset.pattern.permute.xlu0 0
    %1137 = vperm.xlu0 %1136, %v1129
    %v1138 = vpop.permute.xlu0 %1137
    %v1140 = vadd.f32 %v1125, %v1133
    %v1141 = vadd.f32 %v1126, %v1138
    %v1142 = vmax.f32 %v764, %v1140
    %v1143 = vmax.f32 %v765, %v1141
    %v1144 = vpack.c.bf16 %v1141, %v1140
    %1145 = vmatprep.subr.bf16.mxu0 %v283
    %1146 = vmatpush1.bf16.msra.mxu0 %v282
    %1147 = vmatprep.subr.bf16.mxu0 %v281
    %1148 = vmatpush1.bf16.msra.mxu0 %v280
    %1149 = vmatprep.subr.bf16.mxu0 %v279
    %1150 = vmatpush1.bf16.msra.mxu0 %v278
    %1151 = vmatprep.subr.bf16.mxu0 %v277
    %1152 = vmatpush1.bf16.msra.mxu0 %v276
    %1153 = vmatprep.subr.bf16.mxu0 %v275
    %1154 = vmatpush1.bf16.msra.mxu0 %v274
    %1155 = vmatprep.subr.bf16.mxu0 %v273
    %1156 = vmatpush1.bf16.msra.mxu0 %v272
    %1157 = vmatprep.subr.bf16.mxu0 %v271
    %1158 = vmatpush1.bf16.msra.mxu0 %v270
    %1159 = vmatprep.subr.bf16.mxu0 %v269
    %1160 = vmatpush1.bf16.msra.mxu0 %v268
    %1161 = vmatprep.subr.bf16.mxu0 0
    %1162 = vmatpush2.bf16.msra.mxu0 0
    %1163 = vmatprep.subr.bf16.mxu0 0
    %1164 = vmatpush2.bf16.msra.mxu0 0
    %1165 = vmatprep.subr.bf16.mxu0 0
    %1166 = vmatpush2.bf16.msra.mxu0 0
    %1167 = vmatprep.subr.bf16.mxu0 0
    %1168 = vmatpush2.bf16.msra.mxu0 0
    %1169 = vmatprep.subr.bf16.mxu0 0
    %1170 = vmatpush2.bf16.msra.mxu0 0
    %1171 = vmatprep.subr.bf16.mxu0 0
    %1172 = vmatpush2.bf16.msra.mxu0 0
    %1173 = vmatprep.subr.bf16.mxu0 0
    %1174 = vmatpush2.bf16.msra.mxu0 0
    %1175 = vmatprep.subr.bf16.mxu0 0
    %1176 = vmatpush2.bf16.msra.mxu0 0
    %1177 = vmatprep.mubr.bf16.mxu0 0
    %1178 = vmatmul.mubr.bf16.gmra.mxu0 %v1144
    %v1179 = vpop.f32.mrf.mxu0
    %v1180 = vadd.f32 0.0, %v1179
    %v1181 = vpop.f32.mrf.mxu0
    %v1182 = vadd.f32 0.0, %v1181
    %v1183 = vpop.f32.mrf.mxu0
    %v1184 = vadd.f32 0.0, %v1183
    %v1185 = vpop.f32.mrf.mxu0
    %v1186 = vadd.f32 0.0, %v1185
    %1187 = vdwg.mxu0
    %v1188 = vlaneseq
    %v1189 = vshrl.u32 %v1188, 7
    %v1190 = vsub.s32 4, %v1189
    %v1191 = vrot.slane %v217, %v1190
    %v1192 = vlaneseq
    %v1193 = vshrl.u32 %v1192, 7
    %v1194 = vsub.s32 4, %v1193
    %v1195 = vrot.slane %v218, %v1194
    %v1196 = vmul.f32 %v1180, %v1191
    %v1197 = vmul.f32 %v1182, %v1195
    %v1198 = vmul.f32 %v1184, %v1191
    %v1199 = vmul.f32 %v1186, %v1195
    %v1200 = vlaneseq
    %v1201 = vshrl.u32 %v1200, 7
    %v1202 = vsub.s32 5, %v1201
    %v1203 = vrot.slane %v217, %v1202
    %v1204 = vlaneseq
    %v1205 = vshrl.u32 %v1204, 7
    %v1206 = vsub.s32 5, %v1205
    %v1207 = vrot.slane %v218, %v1206
    %v1208 = vmul.f32 %v1180, %v1203
    %v1209 = vmul.f32 %v1182, %v1207
    %v1210 = vmul.f32 %v1184, %v1203
    %v1211 = vmul.f32 %v1186, %v1207
    %v1212 = vpack.c.bf16 %v1198, %v1196
    %v1213 = vpack.c.bf16 %v1199, %v1197
    %v1214 = vpack.c.bf16 %v1210, %v1208
    %v1215 = vpack.c.bf16 %v1211, %v1209
    %1216 = vmatprep.subr.bf16.mxu0 0
    %1217 = vmatpush1.bf16.msra.mxu0 %v442
    %1218 = vmatprep.subr.bf16.mxu0 0
    %1219 = vmatpush1.bf16.msra.mxu0 %v441
    %1220 = vmatprep.subr.bf16.mxu0 0
    %1221 = vmatpush1.bf16.msra.mxu0 %v440
    %1222 = vmatprep.subr.bf16.mxu0 0
    %1223 = vmatpush1.bf16.msra.mxu0 %v439
    %1224 = vmatprep.subr.bf16.mxu0 0
    %1225 = vmatpush1.bf16.msra.mxu0 %v438
    %1226 = vmatprep.subr.bf16.mxu0 0
    %1227 = vmatpush1.bf16.msra.mxu0 %v437
    %1228 = vmatprep.subr.bf16.mxu0 0
    %1229 = vmatpush1.bf16.msra.mxu0 %v436
    %1230 = vmatprep.subr.bf16.mxu0 0
    %1231 = vmatpush1.bf16.msra.mxu0 %v435
    %1232 = vmatprep.subr.bf16.mxu0 0
    %1233 = vmatpush2.bf16.msra.mxu0 %v450
    %1234 = vmatprep.subr.bf16.mxu0 0
    %1235 = vmatpush2.bf16.msra.mxu0 %v449
    %1236 = vmatprep.subr.bf16.mxu0 0
    %1237 = vmatpush2.bf16.msra.mxu0 %v448
    %1238 = vmatprep.subr.bf16.mxu0 0
    %1239 = vmatpush2.bf16.msra.mxu0 %v447
    %1240 = vmatprep.subr.bf16.mxu0 0
    %1241 = vmatpush2.bf16.msra.mxu0 %v446
    %1242 = vmatprep.subr.bf16.mxu0 0
    %1243 = vmatpush2.bf16.msra.mxu0 %v445
    %1244 = vmatprep.subr.bf16.mxu0 0
    %1245 = vmatpush2.bf16.msra.mxu0 %v444
    %1246 = vmatprep.subr.bf16.mxu0 0
    %1247 = vmatpush2.bf16.msra.mxu0 %v443
    %1248 = vmatprep.mubr.bf16.mxu0 %v1213
    %1249 = vmatmul.mubr.bf16.gmra.mxu0 %v1212
    %v1250 = vpop.f32.mrf.mxu0
    %v1251 = vadd.f32 0.0, %v1250
    %v1252 = vpop.f32.mrf.mxu0
    %v1253 = vpop.f32.mrf.mxu0
    %v1254 = vadd.f32 0.0, %v1253
    %v1255 = vpop.f32.mrf.mxu0
    %1256 = vmatprep.mubr.bf16.mxu0 %v1215
    %1257 = vmatmul.mubr.bf16.gmra.mxu0 %v1214
    %v1258 = vpop.f32.mrf.mxu0
    %v1259 = vadd.f32 0.0, %v1258
    %v1260 = vpop.f32.mrf.mxu0
    %v1261 = vpop.f32.mrf.mxu0
    %v1262 = vadd.f32 0.0, %v1261
    %v1263 = vpop.f32.mrf.mxu0
    %1264 = vdwg.mxu0
    %s1265 = scalar_lea.vmem %s5, 16
    %v1266 = vld [vmem:[%s1265] sm:$0xf]
    %v1267 = vld [vmem:[%s1265 + $0x4] sm:$0xf]
    %v1268 = vpack.c.bf16 %v1254, %v1251
    %v1269 = vpack.c.bf16 %v1262, %v1259
    %s1270 = scalar_lea.vmem %s6, 16
    %v1271 = vld [vmem:[%s1270] sm:$0xf]
    %v1272 = vld [vmem:[%s1270 + $0x4] sm:$0xf]
    %v1275 = vunpack.c.l.b16 %v1271
    %v1276 = vunpack.c.l.b16 %v1272
    %v1277 = vpack.c.b16 %v1276, %v1275
    %v1279 = vsel %vm527, %v1277, 0
    %1281 = vmatprep.subr.bf16.mxu0 0
    %1282 = vmatpush1.bf16.msra.mxu0 0
    %1283 = vmatprep.subr.bf16.mxu0 0
    %1284 = vmatpush1.bf16.msra.mxu0 0
    %1285 = vmatprep.subr.bf16.mxu0 0
    %1286 = vmatpush1.bf16.msra.mxu0 0
    %1287 = vmatprep.subr.bf16.mxu0 0
    %1288 = vmatpush1.bf16.msra.mxu0 0
    %1289 = vmatprep.subr.bf16.mxu0 0
    %1290 = vmatpush1.bf16.msra.mxu0 0
    %1291 = vmatprep.subr.bf16.mxu0 0
    %1292 = vmatpush1.bf16.msra.mxu0 0
    %1293 = vmatprep.subr.bf16.mxu0 0
    %1294 = vmatpush1.bf16.msra.mxu0 0
    %1295 = vmatprep.subr.bf16.mxu0 0
    %1296 = vmatpush1.bf16.msra.mxu0 %v1144
    %1297 = vmatprep.subr.bf16.mxu0 0
    %1298 = vmatpush2.bf16.msra.mxu0 0
    %1299 = vmatprep.subr.bf16.mxu0 0
    %1300 = vmatpush2.bf16.msra.mxu0 0
    %1301 = vmatprep.subr.bf16.mxu0 0
    %1302 = vmatpush2.bf16.msra.mxu0 0
    %1303 = vmatprep.subr.bf16.mxu0 0
    %1304 = vmatpush2.bf16.msra.mxu0 0
    %1305 = vmatprep.subr.bf16.mxu0 0
    %1306 = vmatpush2.bf16.msra.mxu0 0
    %1307 = vmatprep.subr.bf16.mxu0 0
    %1308 = vmatpush2.bf16.msra.mxu0 0
    %1309 = vmatprep.subr.bf16.mxu0 0
    %1310 = vmatpush2.bf16.msra.mxu0 0
    %1311 = vmatprep.subr.bf16.mxu0 0
    %1312 = vmatpush2.bf16.msra.mxu0 0
    %1313 = vmatprep.mubr.bf16.mxu0 0
    %1314 = vmatmul.mubr.bf16.gmra.mxu0 %v1279
    %v1315 = vpop.f32.mrf.mxu0
    %v1316 = vadd.f32 0.0, %v1315
    %v1317 = vpop.f32.mrf.mxu0
    %v1318 = vpop.f32.mrf.mxu0
    %v1319 = vadd.f32 0.0, %v1318
    %v1320 = vpop.f32.mrf.mxu0
    %1321 = vdwg.mxu0
    %v1324 = vunpack.c.l.b16 %v1266
    %v1325 = vunpack.c.l.b16 %v1267
    %v1326 = vpack.c.b16 %v1325, %v1324
    %v1328 = vsel %vm577, %v1326, 0
    %1330 = vmatprep.subr.bf16.mxu0 0
    %1331 = vmatpush1.bf16.msra.mxu0 0
    %1332 = vmatprep.subr.bf16.mxu0 0
    %1333 = vmatpush1.bf16.msra.mxu0 0
    %1334 = vmatprep.subr.bf16.mxu0 0
    %1335 = vmatpush1.bf16.msra.mxu0 0
    %1336 = vmatprep.subr.bf16.mxu0 0
    %1337 = vmatpush1.bf16.msra.mxu0 0
    %1338 = vmatprep.subr.bf16.mxu0 0
    %1339 = vmatpush1.bf16.msra.mxu0 0
    %1340 = vmatprep.subr.bf16.mxu0 0
    %1341 = vmatpush1.bf16.msra.mxu0 0
    %1342 = vmatprep.subr.bf16.mxu0 0
    %1343 = vmatpush1.bf16.msra.mxu0 %v1269
    %1344 = vmatprep.subr.bf16.mxu0 0
    %1345 = vmatpush1.bf16.msra.mxu0 %v1268
    %1346 = vmatprep.subr.bf16.mxu0 0
    %1347 = vmatpush2.bf16.msra.mxu0 0
    %1348 = vmatprep.subr.bf16.mxu0 0
    %1349 = vmatpush2.bf16.msra.mxu0 0
    %1350 = vmatprep.subr.bf16.mxu0 0
    %1351 = vmatpush2.bf16.msra.mxu0 0
    %1352 = vmatprep.subr.bf16.mxu0 0
    %1353 = vmatpush2.bf16.msra.mxu0 0
    %1354 = vmatprep.subr.bf16.mxu0 0
    %1355 = vmatpush2.bf16.msra.mxu0 0
    %1356 = vmatprep.subr.bf16.mxu0 0
    %1357 = vmatpush2.bf16.msra.mxu0 0
    %1358 = vmatprep.subr.bf16.mxu0 0
    %1359 = vmatpush2.bf16.msra.mxu0 0
    %1360 = vmatprep.subr.bf16.mxu0 0
    %1361 = vmatpush2.bf16.msra.mxu0 0
    %1362 = vmatprep.mubr.bf16.mxu0 0
    %1363 = vmatmul.mubr.bf16.gmra.mxu0 %v1328
    %v1364 = vpop.f32.mrf.mxu0
    %v1365 = vadd.f32 %v1316, %v1364
    %v1366 = vpop.f32.mrf.mxu0
    %v1367 = vpop.f32.mrf.mxu0
    %v1368 = vadd.f32 %v1319, %v1367
    %v1369 = vpop.f32.mrf.mxu0
    %1370 = vdwg.mxu0
    %s1371 = scalar_lea.vmem %s7, 32
    %v1372 = vld [vmem:[%s1371] sm:$0xff]
    %v1373 = vld [vmem:[%s1371 + $0x8] sm:$0xff]
    %1375 = vset.pattern.permute.xlu0 0
    %1376 = vperm.xlu0 %1375, %v1372
    %v1377 = vpop.permute.xlu0 %1376
    %1380 = vset.pattern.permute.xlu0 0
    %1381 = vperm.xlu0 %1380, %v1373
    %v1382 = vpop.permute.xlu0 %1381
    %v1384 = vadd.f32 %v1365, %v1377
    %v1385 = vadd.f32 %v1368, %v1382
    %vm1386 = vcmp.gt.f32.partialorder %v1384, 0.0
    %vm1387 = vcmp.gt.f32.partialorder %v1385, 0.0
    %v1388 = vmul.f32 %v1384, 0.01
    %v1389 = vmul.f32 %v1385, 0.01
    %v1390 = vsel %vm1386, %v1384, %v1388
    %v1391 = vsel %vm1387, %v1385, %v1389
    %s1392 = scalar_lea.vmem [#allocation10], 16
    %v1393 = vld [vmem:[%s1392] sm:$0xf]
    %v1394 = vld [vmem:[%s1392 + $0x4] sm:$0xf]
    %v1395 = vpack.c.bf16 %v1391, %v1390
    %s1396 = scalar_lea.vmem %s9, 32
    %v1397 = vld [vmem:[%s1396] sm:$0xff]
    %v1398 = vld [vmem:[%s1396 + $0x8] sm:$0xff]
    %1400 = vset.pattern.permute.xlu0 0
    %1401 = vperm.xlu0 %1400, %v1397
    %v1402 = vpop.permute.xlu0 %1401
    %1405 = vset.pattern.permute.xlu0 0
    %1406 = vperm.xlu0 %1405, %v1398
    %v1407 = vpop.permute.xlu0 %1406
    %v1411 = vunpack.c.l.b16 %v1393
    %v1412 = vunpack.c.l.b16 %v1394
    %v1413 = vpack.c.b16 %v1412, %v1411
    %v1415 = vsel %vm527, %v1413, 0
    %1417 = vmatprep.subr.bf16.mxu0 0
    %1418 = vmatpush1.bf16.msra.mxu0 0
    %1419 = vmatprep.subr.bf16.mxu0 0
    %1420 = vmatpush1.bf16.msra.mxu0 0
    %1421 = vmatprep.subr.bf16.mxu0 0
    %1422 = vmatpush1.bf16.msra.mxu0 0
    %1423 = vmatprep.subr.bf16.mxu0 0
    %1424 = vmatpush1.bf16.msra.mxu0 0
    %1425 = vmatprep.subr.bf16.mxu0 0
    %1426 = vmatpush1.bf16.msra.mxu0 0
    %1427 = vmatprep.subr.bf16.mxu0 0
    %1428 = vmatpush1.bf16.msra.mxu0 0
    %1429 = vmatprep.subr.bf16.mxu0 0
    %1430 = vmatpush1.bf16.msra.mxu0 0
    %1431 = vmatprep.subr.bf16.mxu0 0
    %1432 = vmatpush1.bf16.msra.mxu0 %v1395
    %1433 = vmatprep.subr.bf16.mxu0 0
    %1434 = vmatpush2.bf16.msra.mxu0 0
    %1435 = vmatprep.subr.bf16.mxu0 0
    %1436 = vmatpush2.bf16.msra.mxu0 0
    %1437 = vmatprep.subr.bf16.mxu0 0
    %1438 = vmatpush2.bf16.msra.mxu0 0
    %1439 = vmatprep.subr.bf16.mxu0 0
    %1440 = vmatpush2.bf16.msra.mxu0 0
    %1441 = vmatprep.subr.bf16.mxu0 0
    %1442 = vmatpush2.bf16.msra.mxu0 0
    %1443 = vmatprep.subr.bf16.mxu0 0
    %1444 = vmatpush2.bf16.msra.mxu0 0
    %1445 = vmatprep.subr.bf16.mxu0 0
    %1446 = vmatpush2.bf16.msra.mxu0 0
    %1447 = vmatprep.subr.bf16.mxu0 0
    %1448 = vmatpush2.bf16.msra.mxu0 0
    %1449 = vmatprep.mubr.bf16.mxu0 0
    %1450 = vmatmul.mubr.bf16.gmra.mxu0 %v1415
    %v1451 = vpop.f32.mrf.mxu0
    %v1452 = vadd.f32 %v1402, %v1451
    %v1453 = vpop.f32.mrf.mxu0
    %v1454 = vpop.f32.mrf.mxu0
    %v1455 = vadd.f32 %v1407, %v1454
    %v1456 = vpop.f32.mrf.mxu0
    %1457 = vdwg.mxu0
    %vm1458 = vcmp.gt.f32.partialorder %v1452, 0.0
    %vm1459 = vcmp.gt.f32.partialorder %v1455, 0.0
    %v1460 = vmul.f32 %v1452, 0.01
    %v1461 = vmul.f32 %v1455, 0.01
    %v1462 = vsel %vm1458, %v1452, %v1460
    %v1463 = vsel %vm1459, %v1455, %v1461
    %v1464 = vmul.f32 %v1462, %v166
    %v1465 = vmul.f32 %v1463, %v166
    %1466 = vadd.xlane.f32.xlu0 %v1464
    %v1467 = vpop.xlane.xlu0 %1466
    %1468 = vadd.xlane.f32.xlu0 %v1465
    %v1469 = vpop.xlane.xlu0 %1468
    %v1470 = vmul.f32 %v1467, 0.0078125
    %v1471 = vmul.f32 %v1469, 0.0078125
    %v1472 = vsub.f32 %v1462, %v1470
    %v1473 = vsub.f32 %v1463, %v1471
    %v1474 = vmul.f32 %v1472, %v1472
    %v1475 = vmul.f32 %v1473, %v1473
    %v1476 = vmul.f32 %v1474, %v166
    %v1477 = vmul.f32 %v1475, %v166
    %1478 = vadd.xlane.f32.xlu0 %v1476
    %v1479 = vpop.xlane.xlu0 %1478
    %1480 = vadd.xlane.f32.xlu0 %v1477
    %v1481 = vpop.xlane.xlu0 %1480
    %v1482 = vmul.f32 %v1479, 0.0078125
    %v1483 = vmul.f32 %v1481, 0.0078125
    %v1484 = vadd.f32 %v1482, 1e-05
    %v1485 = vadd.f32 %v1483, 1e-05
    %v1486 = vrsqrt.pop %v1484
    %v1487 = vrsqrt.pop %v1485
    %v1488 = vmul.f32 %v1472, %v1486
    %v1489 = vmul.f32 %v1473, %v1487
    %s1490 = scalar_lea.vmem %s10, 32
    %v1491 = vld [vmem:[%s1490] sm:$0xff]
    %v1492 = vld [vmem:[%s1490 + $0x8] sm:$0xff]
    %1494 = vset.pattern.permute.xlu0 0
    %1495 = vperm.xlu0 %1494, %v1491
    %v1496 = vpop.permute.xlu0 %1495
    %1499 = vset.pattern.permute.xlu0 0
    %1500 = vperm.xlu0 %1499, %v1492
    %v1501 = vpop.permute.xlu0 %1500
    %v1503 = vmul.f32 %v1488, %v1496
    %v1504 = vmul.f32 %v1489, %v1501
    %s1505 = scalar_lea.vmem %s11, 32
    %v1506 = vld [vmem:[%s1505] sm:$0xff]
    %v1507 = vld [vmem:[%s1505 + $0x8] sm:$0xff]
    %1509 = vset.pattern.permute.xlu0 0
    %1510 = vperm.xlu0 %1509, %v1506
    %v1511 = vpop.permute.xlu0 %1510
    %1514 = vset.pattern.permute.xlu0 0
    %1515 = vperm.xlu0 %1514, %v1507
    %v1516 = vpop.permute.xlu0 %1515
    %v1518 = vadd.f32 %v1503, %v1511
    %v1519 = vadd.f32 %v1504, %v1516
    %v1520 = vmax.f32 %v1142, %v1518
    %v1521 = vmax.f32 %v1143, %v1519
    %vm1522 = vcmp.gt.f32.partialorder %v158, 0.5
    %v1523 = vld [vmem:[%s12] sm:$0xff]
    %v1524 = vld [vmem:[%s12 + $0x8] sm:$0xff]
    %v1525 = vld [vmem:[%s12 + $0x10] sm:$0xff]
    %v1526 = vld [vmem:[%s12 + $0x18] sm:$0xff]
    %v1527 = vld [vmem:[%s13] sm:$0xff]
    %v1528 = vld [vmem:[%s13 + $0x8] sm:$0xff]
    %v1529 = vld [vmem:[%s14] sm:$0x1]
    %v1530 = vld [vmem:[%s15] sm:$0x1]
    %v1531 = vld [vmem:[#allocation11] sm:$0xff]
    %v1532 = vld [vmem:[#allocation11 + $0x8] sm:$0xff]
    %v1533 = vld [vmem:[#allocation13] sm:$0xff]
    %v1534 = vld [vmem:[#allocation13 + $0x8] sm:$0xff]
    %v1535 = vld [vmem:[%s18] sm:$0x1]
    %v1536 = vld [vmem:[%s19] sm:$0x1]
    %v1538 = vsel %vm527, 0.0, 0
    %1540 = vmatprep.subr.mxu0 0.0
    %1541 = vmatpush1.msra.mxu0 0.0
    %1542 = vmatprep.subr.mxu0 0.0
    %1543 = vmatpush1.msra.mxu0 0.0
    %1544 = vmatprep.subr.mxu0 0.0
    %1545 = vmatpush1.msra.mxu0 0.0
    %1546 = vmatprep.subr.mxu0 0.0
    %1547 = vmatpush1.msra.mxu0 0.0
    %1548 = vmatprep.subr.mxu0 0.0
    %1549 = vmatpush1.msra.mxu0 0.0
    %1550 = vmatprep.subr.mxu0 0.0
    %1551 = vmatpush1.msra.mxu0 0.0
    %1552 = vmatprep.subr.mxu0 0.0
    %1553 = vmatpush1.msra.mxu0 0.0
    %1554 = vmatprep.subr.mxu0 0.0
    %1555 = vmatpush1.msra.mxu0 0.0
    %1556 = vmatprep.subr.mxu0 0.0
    %1557 = vmatpush1.msra.mxu0 0.0
    %1558 = vmatprep.subr.mxu0 0.0
    %1559 = vmatpush1.msra.mxu0 0.0
    %1560 = vmatprep.subr.mxu0 0.0
    %1561 = vmatpush1.msra.mxu0 0.0
    %1562 = vmatprep.subr.mxu0 0.0
    %1563 = vmatpush1.msra.mxu0 0.0
    %1564 = vmatprep.subr.mxu0 0.0
    %1565 = vmatpush1.msra.mxu0 0.0
    %1566 = vmatprep.subr.mxu0 0.0
    %1567 = vmatpush1.msra.mxu0 0.0
    %1568 = vmatprep.subr.mxu0 0.0
    %1569 = vmatpush1.msra.mxu0 %v1526
    %1570 = vmatprep.subr.mxu0 0.0
    %1571 = vmatpush1.msra.mxu0 %v1525
    %1572 = vmatprep.subr.mxu0 0.0
    %1573 = vmatpush2.msra.mxu0 0.0
    %1574 = vmatprep.subr.mxu0 0.0
    %1575 = vmatpush2.msra.mxu0 0.0
    %1576 = vmatprep.subr.mxu0 0.0
    %1577 = vmatpush2.msra.mxu0 0.0
    %1578 = vmatprep.subr.mxu0 0.0
    %1579 = vmatpush2.msra.mxu0 0.0
    %1580 = vmatprep.subr.mxu0 0.0
    %1581 = vmatpush2.msra.mxu0 0.0
    %1582 = vmatprep.subr.mxu0 0.0
    %1583 = vmatpush2.msra.mxu0 0.0
    %1584 = vmatprep.subr.mxu0 0.0
    %1585 = vmatpush2.msra.mxu0 0.0
    %1586 = vmatprep.subr.mxu0 0.0
    %1587 = vmatpush2.msra.mxu0 0.0
    %1588 = vmatprep.subr.mxu0 0.0
    %1589 = vmatpush2.msra.mxu0 0.0
    %1590 = vmatprep.subr.mxu0 0.0
    %1591 = vmatpush2.msra.mxu0 0.0
    %1592 = vmatprep.subr.mxu0 0.0
    %1593 = vmatpush2.msra.mxu0 0.0
    %1594 = vmatprep.subr.mxu0 0.0
    %1595 = vmatpush2.msra.mxu0 0.0
    %1596 = vmatprep.subr.mxu0 0.0
    %1597 = vmatpush2.msra.mxu0 0.0
    %1598 = vmatprep.subr.mxu0 0.0
    %1599 = vmatpush2.msra.mxu0 0.0
    %1600 = vmatprep.subr.mxu0 0.0
    %1601 = vmatpush2.msra.mxu0 0.0
    %1602 = vmatprep.subr.mxu0 0.0
    %1603 = vmatpush2.msra.mxu0 0.0
    %1604 = vmatprep.mubr.f32.mxu0 0.0
    %1605 = vmatmul.mubr.f32.gmra.mxu0 %v1538
    %v1606 = vpop.f32.mrf.mxu0
    %v1607 = vadd.f32 0.0, %v1606
    %v1608 = vpop.f32.mrf.mxu0
    %1609 = vdwg.mxu0
    %1610 = vmatprep.subr.mxu0 0.0
    %1611 = vmatpush1.msra.mxu0 0.0
    %1612 = vmatprep.subr.mxu0 0.0
    %1613 = vmatpush1.msra.mxu0 0.0
    %1614 = vmatprep.subr.mxu0 0.0
    %1615 = vmatpush1.msra.mxu0 0.0
    %1616 = vmatprep.subr.mxu0 0.0
    %1617 = vmatpush1.msra.mxu0 0.0
    %1618 = vmatprep.subr.mxu0 0.0
    %1619 = vmatpush1.msra.mxu0 0.0
    %1620 = vmatprep.subr.mxu0 0.0
    %1621 = vmatpush1.msra.mxu0 0.0
    %1622 = vmatprep.subr.mxu0 0.0
    %1623 = vmatpush1.msra.mxu0 0.0
    %1624 = vmatprep.subr.mxu0 0.0
    %1625 = vmatpush1.msra.mxu0 0.0
    %1626 = vmatprep.subr.mxu0 0.0
    %1627 = vmatpush1.msra.mxu0 0.0
    %1628 = vmatprep.subr.mxu0 0.0
    %1629 = vmatpush1.msra.mxu0 0.0
    %1630 = vmatprep.subr.mxu0 0.0
    %1631 = vmatpush1.msra.mxu0 0.0
    %1632 = vmatprep.subr.mxu0 0.0
    %1633 = vmatpush1.msra.mxu0 0.0
    %1634 = vmatprep.subr.mxu0 0.0
    %1635 = vmatpush1.msra.mxu0 0.0
    %1636 = vmatprep.subr.mxu0 0.0
    %1637 = vmatpush1.msra.mxu0 0.0
    %1638 = vmatprep.subr.mxu0 0.0
    %1639 = vmatpush1.msra.mxu0 %v1524
    %1640 = vmatprep.subr.mxu0 0.0
    %1641 = vmatpush1.msra.mxu0 %v1523
    %1642 = vmatprep.subr.mxu0 0.0
    %1643 = vmatpush2.msra.mxu0 0.0
    %1644 = vmatprep.subr.mxu0 0.0
    %1645 = vmatpush2.msra.mxu0 0.0
    %1646 = vmatprep.subr.mxu0 0.0
    %1647 = vmatpush2.msra.mxu0 0.0
    %1648 = vmatprep.subr.mxu0 0.0
    %1649 = vmatpush2.msra.mxu0 0.0
    %1650 = vmatprep.subr.mxu0 0.0
    %1651 = vmatpush2.msra.mxu0 0.0
    %1652 = vmatprep.subr.mxu0 0.0
    %1653 = vmatpush2.msra.mxu0 0.0
    %1654 = vmatprep.subr.mxu0 0.0
    %1655 = vmatpush2.msra.mxu0 0.0
    %1656 = vmatprep.subr.mxu0 0.0
    %1657 = vmatpush2.msra.mxu0 0.0
    %1658 = vmatprep.subr.mxu0 0.0
    %1659 = vmatpush2.msra.mxu0 0.0
    %1660 = vmatprep.subr.mxu0 0.0
    %1661 = vmatpush2.msra.mxu0 0.0
    %1662 = vmatprep.subr.mxu0 0.0
    %1663 = vmatpush2.msra.mxu0 0.0
    %1664 = vmatprep.subr.mxu0 0.0
    %1665 = vmatpush2.msra.mxu0 0.0
    %1666 = vmatprep.subr.mxu0 0.0
    %1667 = vmatpush2.msra.mxu0 0.0
    %1668 = vmatprep.subr.mxu0 0.0
    %1669 = vmatpush2.msra.mxu0 0.0
    %1670 = vmatprep.subr.mxu0 0.0
    %1671 = vmatpush2.msra.mxu0 0.0
    %1672 = vmatprep.subr.mxu0 0.0
    %1673 = vmatpush2.msra.mxu0 0.0
    %1674 = vmatprep.mubr.f32.mxu0 0.0
    %1675 = vmatmul.mubr.f32.gmra.mxu0 %v1538
    %v1676 = vpop.f32.mrf.mxu0
    %v1677 = vadd.f32 %v1607, %v1676
    %v1678 = vpop.f32.mrf.mxu0
    %1679 = vdwg.mxu0
    %v1681 = vlaneseq
    %v1682 = vshrl.u32 %v1681, 7
    %v1683 = vsub.s32 0, %v1682
    %v1684 = vrot.slane %v1529, %v1683
    %v1686 = vadd.f32 %v1677, %v1684
    %1687 = vmatprep.subr.mxu0 0.0
    %1688 = vmatpush1.msra.mxu0 0.0
    %1689 = vmatprep.subr.mxu0 0.0
    %1690 = vmatpush1.msra.mxu0 0.0
    %1691 = vmatprep.subr.mxu0 0.0
    %1692 = vmatpush1.msra.mxu0 0.0
    %1693 = vmatprep.subr.mxu0 0.0
    %1694 = vmatpush1.msra.mxu0 0.0
    %1695 = vmatprep.subr.mxu0 0.0
    %1696 = vmatpush1.msra.mxu0 0.0
    %1697 = vmatprep.subr.mxu0 0.0
    %1698 = vmatpush1.msra.mxu0 0.0
    %1699 = vmatprep.subr.mxu0 0.0
    %1700 = vmatpush1.msra.mxu0 0.0
    %1701 = vmatprep.subr.mxu0 0.0
    %1702 = vmatpush1.msra.mxu0 0.0
    %1703 = vmatprep.subr.mxu0 0.0
    %1704 = vmatpush1.msra.mxu0 0.0
    %1705 = vmatprep.subr.mxu0 0.0
    %1706 = vmatpush1.msra.mxu0 0.0
    %1707 = vmatprep.subr.mxu0 0.0
    %1708 = vmatpush1.msra.mxu0 0.0
    %1709 = vmatprep.subr.mxu0 0.0
    %1710 = vmatpush1.msra.mxu0 0.0
    %1711 = vmatprep.subr.mxu0 0.0
    %1712 = vmatpush1.msra.mxu0 0.0
    %1713 = vmatprep.subr.mxu0 0.0
    %1714 = vmatpush1.msra.mxu0 0.0
    %1715 = vmatprep.subr.mxu0 0.0
    %1716 = vmatpush1.msra.mxu0 %v1528
    %1717 = vmatprep.subr.mxu0 0.0
    %1718 = vmatpush1.msra.mxu0 %v1527
    %1719 = vmatprep.subr.mxu0 0.0
    %1720 = vmatpush2.msra.mxu0 0.0
    %1721 = vmatprep.subr.mxu0 0.0
    %1722 = vmatpush2.msra.mxu0 0.0
    %1723 = vmatprep.subr.mxu0 0.0
    %1724 = vmatpush2.msra.mxu0 0.0
    %1725 = vmatprep.subr.mxu0 0.0
    %1726 = vmatpush2.msra.mxu0 0.0
    %1727 = vmatprep.subr.mxu0 0.0
    %1728 = vmatpush2.msra.mxu0 0.0
    %1729 = vmatprep.subr.mxu0 0.0
    %1730 = vmatpush2.msra.mxu0 0.0
    %1731 = vmatprep.subr.mxu0 0.0
    %1732 = vmatpush2.msra.mxu0 0.0
    %1733 = vmatprep.subr.mxu0 0.0
    %1734 = vmatpush2.msra.mxu0 0.0
    %1735 = vmatprep.subr.mxu0 0.0
    %1736 = vmatpush2.msra.mxu0 0.0
    %1737 = vmatprep.subr.mxu0 0.0
    %1738 = vmatpush2.msra.mxu0 0.0
    %1739 = vmatprep.subr.mxu0 0.0
    %1740 = vmatpush2.msra.mxu0 0.0
    %1741 = vmatprep.subr.mxu0 0.0
    %1742 = vmatpush2.msra.mxu0 0.0
    %1743 = vmatprep.subr.mxu0 0.0
    %1744 = vmatpush2.msra.mxu0 0.0
    %1745 = vmatprep.subr.mxu0 0.0
    %1746 = vmatpush2.msra.mxu0 0.0
    %1747 = vmatprep.subr.mxu0 0.0
    %1748 = vmatpush2.msra.mxu0 0.0
    %1749 = vmatprep.subr.mxu0 0.0
    %1750 = vmatpush2.msra.mxu0 0.0
    %1751 = vmatprep.mubr.f32.mxu0 0.0
    %1752 = vmatmul.mubr.f32.gmra.mxu0 %v1538
    %v1753 = vpop.f32.mrf.mxu0
    %v1754 = vadd.f32 0.0, %v1753
    %v1755 = vpop.f32.mrf.mxu0
    %1756 = vdwg.mxu0
    %v1757 = vadd.f32 %v1686, %v1754
    %v1759 = vlaneseq
    %v1760 = vshrl.u32 %v1759, 7
    %v1761 = vsub.s32 0, %v1760
    %v1762 = vrot.slane %v1530, %v1761
    %v1764 = vadd.f32 %v1757, %v1762
    %v1765 = vxor.u32 %v1764, 2147483648
    %v1766 = vmul.f32 %v1765, 1.442695
    %v1767 = vpow.pop %v1766
    %v1768 = vadd.f32 %v1767, 1.0
    %v1769 = vrcp.pop %v1768
    %v1770 = vmul.f32 1.0, %v1769
    %v1771 = vtanh.pop %v1764
    %v1772 = vmul.f32 %v1770, 0.0
    %1774 = vrot.lane.b32.xlu0 %v1771, 96
    %v1775 = vpop.permute.xlu0 %1774
    %v1777 = vmul.f32 %v1770, %v1775
    %1779 = vrot.lane.b32.xlu0 %v1777, 16
    %v1780 = vpop.permute.xlu0 %1779
    %v1782 = vadd.f32 %v1772, %v1780
    %v1783 = vtanh.pop %v1782
    %1785 = vrot.lane.b32.xlu0 %v1783, 32
    %v1786 = vpop.permute.xlu0 %1785
    %v1788 = vmul.f32 %v1770, %v1786
    %v1790 = vlaneseq
    %v1791 = vshrl.u32 %v1790, 7
    %v1792 = vsub.s32 0, %v1791
    %v1793 = vrot.slane %v1535, %v1792
    %1796 = vrot.lane.b32.xlu0 %v1788, 80
    %v1797 = vpop.permute.xlu0 %1796
    %v1798 = vsel %vm527, %v1797, 0
    %1800 = vmatprep.subr.mxu0 0.0
    %1801 = vmatpush1.msra.mxu0 0.0
    %1802 = vmatprep.subr.mxu0 0.0
    %1803 = vmatpush1.msra.mxu0 0.0
    %1804 = vmatprep.subr.mxu0 0.0
    %1805 = vmatpush1.msra.mxu0 0.0
    %1806 = vmatprep.subr.mxu0 0.0
    %1807 = vmatpush1.msra.mxu0 0.0
    %1808 = vmatprep.subr.mxu0 0.0
    %1809 = vmatpush1.msra.mxu0 0.0
    %1810 = vmatprep.subr.mxu0 0.0
    %1811 = vmatpush1.msra.mxu0 0.0
    %1812 = vmatprep.subr.mxu0 0.0
    %1813 = vmatpush1.msra.mxu0 0.0
    %1814 = vmatprep.subr.mxu0 0.0
    %1815 = vmatpush1.msra.mxu0 0.0
    %1816 = vmatprep.subr.mxu0 0.0
    %1817 = vmatpush1.msra.mxu0 0.0
    %1818 = vmatprep.subr.mxu0 0.0
    %1819 = vmatpush1.msra.mxu0 0.0
    %1820 = vmatprep.subr.mxu0 0.0
    %1821 = vmatpush1.msra.mxu0 0.0
    %1822 = vmatprep.subr.mxu0 0.0
    %1823 = vmatpush1.msra.mxu0 0.0
    %1824 = vmatprep.subr.mxu0 0.0
    %1825 = vmatpush1.msra.mxu0 0.0
    %1826 = vmatprep.subr.mxu0 0.0
    %1827 = vmatpush1.msra.mxu0 0.0
    %1828 = vmatprep.subr.mxu0 0.0
    %1829 = vmatpush1.msra.mxu0 %v1532
    %1830 = vmatprep.subr.mxu0 0.0
    %1831 = vmatpush1.msra.mxu0 %v1531
    %1832 = vmatprep.subr.mxu0 0.0
    %1833 = vmatpush2.msra.mxu0 0.0
    %1834 = vmatprep.subr.mxu0 0.0
    %1835 = vmatpush2.msra.mxu0 0.0
    %1836 = vmatprep.subr.mxu0 0.0
    %1837 = vmatpush2.msra.mxu0 0.0
    %1838 = vmatprep.subr.mxu0 0.0
    %1839 = vmatpush2.msra.mxu0 0.0
    %1840 = vmatprep.subr.mxu0 0.0
    %1841 = vmatpush2.msra.mxu0 0.0
    %1842 = vmatprep.subr.mxu0 0.0
    %1843 = vmatpush2.msra.mxu0 0.0
    %1844 = vmatprep.subr.mxu0 0.0
    %1845 = vmatpush2.msra.mxu0 0.0
    %1846 = vmatprep.subr.mxu0 0.0
    %1847 = vmatpush2.msra.mxu0 0.0
    %1848 = vmatprep.subr.mxu0 0.0
    %1849 = vmatpush2.msra.mxu0 0.0
    %1850 = vmatprep.subr.mxu0 0.0
    %1851 = vmatpush2.msra.mxu0 0.0
    %1852 = vmatprep.subr.mxu0 0.0
    %1853 = vmatpush2.msra.mxu0 0.0
    %1854 = vmatprep.subr.mxu0 0.0
    %1855 = vmatpush2.msra.mxu0 0.0
    %1856 = vmatprep.subr.mxu0 0.0
    %1857 = vmatpush2.msra.mxu0 0.0
    %1858 = vmatprep.subr.mxu0 0.0
    %1859 = vmatpush2.msra.mxu0 0.0
    %1860 = vmatprep.subr.mxu0 0.0
    %1861 = vmatpush2.msra.mxu0 0.0
    %1862 = vmatprep.subr.mxu0 0.0
    %1863 = vmatpush2.msra.mxu0 0.0
    %1864 = vmatprep.mubr.f32.mxu0 0.0
    %1865 = vmatmul.mubr.f32.gmra.mxu0 %v1798
    %v1866 = vpop.f32.mrf.mxu0
    %v1867 = vadd.f32 %v1793, %v1866
    %v1868 = vpop.f32.mrf.mxu0
    %1869 = vdwg.mxu0
    %1870 = vmatprep.subr.mxu0 0.0
    %1871 = vmatpush1.msra.mxu0 0.0
    %1872 = vmatprep.subr.mxu0 0.0
    %1873 = vmatpush1.msra.mxu0 0.0
    %1874 = vmatprep.subr.mxu0 0.0
    %1875 = vmatpush1.msra.mxu0 0.0
    %1876 = vmatprep.subr.mxu0 0.0
    %1877 = vmatpush1.msra.mxu0 0.0
    %1878 = vmatprep.subr.mxu0 0.0
    %1879 = vmatpush1.msra.mxu0 0.0
    %1880 = vmatprep.subr.mxu0 0.0
    %1881 = vmatpush1.msra.mxu0 0.0
    %1882 = vmatprep.subr.mxu0 0.0
    %1883 = vmatpush1.msra.mxu0 0.0
    %1884 = vmatprep.subr.mxu0 0.0
    %1885 = vmatpush1.msra.mxu0 0.0
    %1886 = vmatprep.subr.mxu0 0.0
    %1887 = vmatpush1.msra.mxu0 0.0
    %1888 = vmatprep.subr.mxu0 0.0
    %1889 = vmatpush1.msra.mxu0 0.0
    %1890 = vmatprep.subr.mxu0 0.0
    %1891 = vmatpush1.msra.mxu0 0.0
    %1892 = vmatprep.subr.mxu0 0.0
    %1893 = vmatpush1.msra.mxu0 0.0
    %1894 = vmatprep.subr.mxu0 0.0
    %1895 = vmatpush1.msra.mxu0 0.0
    %1896 = vmatprep.subr.mxu0 0.0
    %1897 = vmatpush1.msra.mxu0 0.0
    %1898 = vmatprep.subr.mxu0 0.0
    %1899 = vmatpush1.msra.mxu0 %v1534
    %1900 = vmatprep.subr.mxu0 0.0
    %1901 = vmatpush1.msra.mxu0 %v1533
    %1902 = vmatprep.subr.mxu0 0.0
    %1903 = vmatpush2.msra.mxu0 0.0
    %1904 = vmatprep.subr.mxu0 0.0
    %1905 = vmatpush2.msra.mxu0 0.0
    %1906 = vmatprep.subr.mxu0 0.0
    %1907 = vmatpush2.msra.mxu0 0.0
    %1908 = vmatprep.subr.mxu0 0.0
    %1909 = vmatpush2.msra.mxu0 0.0
    %1910 = vmatprep.subr.mxu0 0.0
    %1911 = vmatpush2.msra.mxu0 0.0
    %1912 = vmatprep.subr.mxu0 0.0
    %1913 = vmatpush2.msra.mxu0 0.0
    %1914 = vmatprep.subr.mxu0 0.0
    %1915 = vmatpush2.msra.mxu0 0.0
    %1916 = vmatprep.subr.mxu0 0.0
    %1917 = vmatpush2.msra.mxu0 0.0
    %1918 = vmatprep.subr.mxu0 0.0
    %1919 = vmatpush2.msra.mxu0 0.0
    %1920 = vmatprep.subr.mxu0 0.0
    %1921 = vmatpush2.msra.mxu0 0.0
    %1922 = vmatprep.subr.mxu0 0.0
    %1923 = vmatpush2.msra.mxu0 0.0
    %1924 = vmatprep.subr.mxu0 0.0
    %1925 = vmatpush2.msra.mxu0 0.0
    %1926 = vmatprep.subr.mxu0 0.0
    %1927 = vmatpush2.msra.mxu0 0.0
    %1928 = vmatprep.subr.mxu0 0.0
    %1929 = vmatpush2.msra.mxu0 0.0
    %1930 = vmatprep.subr.mxu0 0.0
    %1931 = vmatpush2.msra.mxu0 0.0
    %1932 = vmatprep.subr.mxu0 0.0
    %1933 = vmatpush2.msra.mxu0 0.0
    %1934 = vmatprep.mubr.f32.mxu0 0.0
    %1935 = vmatmul.mubr.f32.gmra.mxu0 %v1538
    %v1936 = vpop.f32.mrf.mxu0
    %v1937 = vadd.f32 0.0, %v1936
    %v1938 = vpop.f32.mrf.mxu0
    %1939 = vdwg.mxu0
    %v1940 = vadd.f32 %v1867, %v1937
    %v1942 = vlaneseq
    %v1943 = vshrl.u32 %v1942, 7
    %v1944 = vsub.s32 0, %v1943
    %v1945 = vrot.slane %v1536, %v1944
    %v1947 = vadd.f32 %v1940, %v1945
    %v1948 = vxor.u32 %v1947, 2147483648
    %v1949 = vmul.f32 %v1948, 1.442695
    %v1950 = vpow.pop %v1949
    %v1951 = vadd.f32 %v1950, 1.0
    %v1952 = vrcp.pop %v1951
    %v1953 = vmul.f32 1.0, %v1952
    %v1954 = vtanh.pop %v1947
    %v1955 = vmul.f32 %v1953, 0.0
    %1957 = vrot.lane.b32.xlu0 %v1954, 96
    %v1958 = vpop.permute.xlu0 %1957
    %v1960 = vmul.f32 %v1953, %v1958
    %1962 = vrot.lane.b32.xlu0 %v1960, 16
    %v1963 = vpop.permute.xlu0 %1962
    %v1965 = vadd.f32 %v1955, %v1963
    %v1966 = vtanh.pop %v1965
    %1968 = vrot.lane.b32.xlu0 %v1966, 32
    %v1969 = vpop.permute.xlu0 %1968
    %v1971 = vmul.f32 %v1953, %v1969
    %1973 = vrot.lane.b32.xlu0 %v1971, 80
    %v1974 = vpop.permute.xlu0 %1973
    %v1975 = vsel %vm527, %v1974, 0
    %1977 = vmatprep.subr.mxu0 0.0
    %1978 = vmatpush1.msra.mxu0 0.0
    %1979 = vmatprep.subr.mxu0 0.0
    %1980 = vmatpush1.msra.mxu0 0.0
    %1981 = vmatprep.subr.mxu0 0.0
    %1982 = vmatpush1.msra.mxu0 0.0
    %1983 = vmatprep.subr.mxu0 0.0
    %1984 = vmatpush1.msra.mxu0 0.0
    %1985 = vmatprep.subr.mxu0 0.0
    %1986 = vmatpush1.msra.mxu0 0.0
    %1987 = vmatprep.subr.mxu0 0.0
    %1988 = vmatpush1.msra.mxu0 0.0
    %1989 = vmatprep.subr.mxu0 0.0
    %1990 = vmatpush1.msra.mxu0 0.0
    %1991 = vmatprep.subr.mxu0 0.0
    %1992 = vmatpush1.msra.mxu0 0.0
    %1993 = vmatprep.subr.mxu0 0.0
    %1994 = vmatpush1.msra.mxu0 0.0
    %1995 = vmatprep.subr.mxu0 0.0
    %1996 = vmatpush1.msra.mxu0 0.0
    %1997 = vmatprep.subr.mxu0 0.0
    %1998 = vmatpush1.msra.mxu0 0.0
    %1999 = vmatprep.subr.mxu0 0.0
    %2000 = vmatpush1.msra.mxu0 0.0
    %2001 = vmatprep.subr.mxu0 0.0
    %2002 = vmatpush1.msra.mxu0 0.0
    %2003 = vmatprep.subr.mxu0 0.0
    %2004 = vmatpush1.msra.mxu0 0.0
    %2005 = vmatprep.subr.mxu0 0.0
    %2006 = vmatpush1.msra.mxu0 %v1521
    %2007 = vmatprep.subr.mxu0 0.0
    %2008 = vmatpush1.msra.mxu0 %v1520
    %2009 = vmatprep.subr.mxu0 0.0
    %2010 = vmatpush2.msra.mxu0 0.0
    %2011 = vmatprep.subr.mxu0 0.0
    %2012 = vmatpush2.msra.mxu0 0.0
    %2013 = vmatprep.subr.mxu0 0.0
    %2014 = vmatpush2.msra.mxu0 0.0
    %2015 = vmatprep.subr.mxu0 0.0
    %2016 = vmatpush2.msra.mxu0 0.0
    %2017 = vmatprep.subr.mxu0 0.0
    %2018 = vmatpush2.msra.mxu0 0.0
    %2019 = vmatprep.subr.mxu0 0.0
    %2020 = vmatpush2.msra.mxu0 0.0
    %2021 = vmatprep.subr.mxu0 0.0
    %2022 = vmatpush2.msra.mxu0 0.0
    %2023 = vmatprep.subr.mxu0 0.0
    %2024 = vmatpush2.msra.mxu0 0.0
    %2025 = vmatprep.subr.mxu0 0.0
    %2026 = vmatpush2.msra.mxu0 0.0
    %2027 = vmatprep.subr.mxu0 0.0
    %2028 = vmatpush2.msra.mxu0 0.0
    %2029 = vmatprep.subr.mxu0 0.0
    %2030 = vmatpush2.msra.mxu0 0.0
    %2031 = vmatprep.subr.mxu0 0.0
    %2032 = vmatpush2.msra.mxu0 0.0
    %2033 = vmatprep.subr.mxu0 0.0
    %2034 = vmatpush2.msra.mxu0 0.0
    %2035 = vmatprep.subr.mxu0 0.0
    %2036 = vmatpush2.msra.mxu0 0.0
    %2037 = vmatprep.subr.mxu0 0.0
    %2038 = vmatpush2.msra.mxu0 0.0
    %2039 = vmatprep.subr.mxu0 0.0
    %2040 = vmatpush2.msra.mxu0 0.0
    %2041 = vmatprep.mubr.f32.mxu0 0.0
    %2042 = vmatmul.mubr.f32.gmra.mxu0 %v1975
    %v2043 = vpop.f32.mrf.mxu0
    %v2044 = vadd.f32 0.0, %v2043
    %v2045 = vpop.f32.mrf.mxu0
    %2046 = vdwg.mxu0
    %v2047 = vsel %vm1522, %v2044, -1e+30
    %v2048 = vsel %vm159, %v2047, -inf
    %2049 = vmax.xlane.f32.xlu0 %v2048
    %v2050 = vpop.xlane.xlu0 %2049
    %v2051 = vsub.f32 %v2044, %v2050
    %v2052 = vmul.f32 %v2051, 1.442695
    %v2053 = vpow.pop %v2052
    %v2054 = vsel %vm1522, %v2053, 0.0
    %v2055 = vsel %vm159, %v2054, 0.0
    %2056 = vadd.xlane.f32.xlu0 %v2055
    %v2057 = vpop.xlane.xlu0 %2056
    %v2058 = vadd.f32 %v2057, 1e-16
    %v2059 = vrcp.pop %v2058
    %v2060 = vmul.f32 %v2054, %v2059
    %2061 = vmatprep.subr.mxu0 0.0
    %2062 = vmatpush1.xpose.msra.mxu0 0.0
    %2063 = vmatprep.subr.mxu0 0.0
    %2064 = vmatpush1.xpose.msra.mxu0 0.0
    %2065 = vmatprep.subr.mxu0 0.0
    %2066 = vmatpush1.xpose.msra.mxu0 0.0
    %2067 = vmatprep.subr.mxu0 0.0
    %2068 = vmatpush1.xpose.msra.mxu0 0.0
    %2069 = vmatprep.subr.mxu0 0.0
    %2070 = vmatpush1.xpose.msra.mxu0 0.0
    %2071 = vmatprep.subr.mxu0 0.0
    %2072 = vmatpush1.xpose.msra.mxu0 0.0
    %2073 = vmatprep.subr.mxu0 0.0
    %2074 = vmatpush1.xpose.msra.mxu0 0.0
    %2075 = vmatprep.subr.mxu0 0.0
    %2076 = vmatpush1.xpose.msra.mxu0 0.0
    %2077 = vmatprep.subr.mxu0 0.0
    %2078 = vmatpush1.xpose.msra.mxu0 0.0
    %2079 = vmatprep.subr.mxu0 0.0
    %2080 = vmatpush1.xpose.msra.mxu0 0.0
    %2081 = vmatprep.subr.mxu0 0.0
    %2082 = vmatpush1.xpose.msra.mxu0 0.0
    %2083 = vmatprep.subr.mxu0 0.0
    %2084 = vmatpush1.xpose.msra.mxu0 0.0
    %2085 = vmatprep.subr.mxu0 0.0
    %2086 = vmatpush1.xpose.msra.mxu0 0.0
    %2087 = vmatprep.subr.mxu0 0.0
    %2088 = vmatpush1.xpose.msra.mxu0 0.0
    %2089 = vmatprep.subr.mxu0 0.0
    %2090 = vmatpush1.xpose.msra.mxu0 %v1521
    %2091 = vmatprep.subr.mxu0 0.0
    %2092 = vmatpush1.xpose.msra.mxu0 %v1520
    %2093 = vmatprep.subr.mxu0 0.0
    %2094 = vmatpush2.xpose.msra.mxu0 0.0
    %2095 = vmatprep.subr.mxu0 0.0
    %2096 = vmatpush2.xpose.msra.mxu0 0.0
    %2097 = vmatprep.subr.mxu0 0.0
    %2098 = vmatpush2.xpose.msra.mxu0 0.0
    %2099 = vmatprep.subr.mxu0 0.0
    %2100 = vmatpush2.xpose.msra.mxu0 0.0
    %2101 = vmatprep.subr.mxu0 0.0
    %2102 = vmatpush2.xpose.msra.mxu0 0.0
    %2103 = vmatprep.subr.mxu0 0.0
    %2104 = vmatpush2.xpose.msra.mxu0 0.0
    %2105 = vmatprep.subr.mxu0 0.0
    %2106 = vmatpush2.xpose.msra.mxu0 0.0
    %2107 = vmatprep.subr.mxu0 0.0
    %2108 = vmatpush2.xpose.msra.mxu0 0.0
    %2109 = vmatprep.subr.mxu0 0.0
    %2110 = vmatpush2.xpose.msra.mxu0 0.0
    %2111 = vmatprep.subr.mxu0 0.0
    %2112 = vmatpush2.xpose.msra.mxu0 0.0
    %2113 = vmatprep.subr.mxu0 0.0
    %2114 = vmatpush2.xpose.msra.mxu0 0.0
    %2115 = vmatprep.subr.mxu0 0.0
    %2116 = vmatpush2.xpose.msra.mxu0 0.0
    %2117 = vmatprep.subr.mxu0 0.0
    %2118 = vmatpush2.xpose.msra.mxu0 0.0
    %2119 = vmatprep.subr.mxu0 0.0
    %2120 = vmatpush2.xpose.msra.mxu0 0.0
    %2121 = vmatprep.subr.mxu0 0.0
    %2122 = vmatpush2.xpose.msra.mxu0 0.0
    %2123 = vmatprep.subr.mxu0 0.0
    %2124 = vmatpush2.xpose.msra.mxu0 0.0
    %2125 = vmatprep.mubr.f32.mxu0 0.0
    %2126 = vmatmul.mubr.f32.gmra.mxu0 %v2060
    %v2127 = vpop.f32.mrf.mxu0
    %v2128 = vadd.f32 0.0, %v2127
    %v2129 = vpop.f32.mrf.mxu0
    %2130 = vdwg.mxu0
    %v2132 = vsel %vm527, %v2128, 0
    %2134 = vmatprep.subr.mxu0 0.0
    %2135 = vmatpush1.msra.mxu0 0.0
    %2136 = vmatprep.subr.mxu0 0.0
    %2137 = vmatpush1.msra.mxu0 0.0
    %2138 = vmatprep.subr.mxu0 0.0
    %2139 = vmatpush1.msra.mxu0 0.0
    %2140 = vmatprep.subr.mxu0 0.0
    %2141 = vmatpush1.msra.mxu0 0.0
    %2142 = vmatprep.subr.mxu0 0.0
    %2143 = vmatpush1.msra.mxu0 0.0
    %2144 = vmatprep.subr.mxu0 0.0
    %2145 = vmatpush1.msra.mxu0 0.0
    %2146 = vmatprep.subr.mxu0 0.0
    %2147 = vmatpush1.msra.mxu0 0.0
    %2148 = vmatprep.subr.mxu0 0.0
    %2149 = vmatpush1.msra.mxu0 0.0
    %2150 = vmatprep.subr.mxu0 0.0
    %2151 = vmatpush1.msra.mxu0 0.0
    %2152 = vmatprep.subr.mxu0 0.0
    %2153 = vmatpush1.msra.mxu0 0.0
    %2154 = vmatprep.subr.mxu0 0.0
    %2155 = vmatpush1.msra.mxu0 0.0
    %2156 = vmatprep.subr.mxu0 0.0
    %2157 = vmatpush1.msra.mxu0 0.0
    %2158 = vmatprep.subr.mxu0 0.0
    %2159 = vmatpush1.msra.mxu0 0.0
    %2160 = vmatprep.subr.mxu0 0.0
    %2161 = vmatpush1.msra.mxu0 0.0
    %2162 = vmatprep.subr.mxu0 0.0
    %2163 = vmatpush1.msra.mxu0 %v1526
    %2164 = vmatprep.subr.mxu0 0.0
    %2165 = vmatpush1.msra.mxu0 %v1525
    %2166 = vmatprep.subr.mxu0 0.0
    %2167 = vmatpush2.msra.mxu0 0.0
    %2168 = vmatprep.subr.mxu0 0.0
    %2169 = vmatpush2.msra.mxu0 0.0
    %2170 = vmatprep.subr.mxu0 0.0
    %2171 = vmatpush2.msra.mxu0 0.0
    %2172 = vmatprep.subr.mxu0 0.0
    %2173 = vmatpush2.msra.mxu0 0.0
    %2174 = vmatprep.subr.mxu0 0.0
    %2175 = vmatpush2.msra.mxu0 0.0
    %2176 = vmatprep.subr.mxu0 0.0
    %2177 = vmatpush2.msra.mxu0 0.0
    %2178 = vmatprep.subr.mxu0 0.0
    %2179 = vmatpush2.msra.mxu0 0.0
    %2180 = vmatprep.subr.mxu0 0.0
    %2181 = vmatpush2.msra.mxu0 0.0
    %2182 = vmatprep.subr.mxu0 0.0
    %2183 = vmatpush2.msra.mxu0 0.0
    %2184 = vmatprep.subr.mxu0 0.0
    %2185 = vmatpush2.msra.mxu0 0.0
    %2186 = vmatprep.subr.mxu0 0.0
    %2187 = vmatpush2.msra.mxu0 0.0
    %2188 = vmatprep.subr.mxu0 0.0
    %2189 = vmatpush2.msra.mxu0 0.0
    %2190 = vmatprep.subr.mxu0 0.0
    %2191 = vmatpush2.msra.mxu0 0.0
    %2192 = vmatprep.subr.mxu0 0.0
    %2193 = vmatpush2.msra.mxu0 0.0
    %2194 = vmatprep.subr.mxu0 0.0
    %2195 = vmatpush2.msra.mxu0 0.0
    %2196 = vmatprep.subr.mxu0 0.0
    %2197 = vmatpush2.msra.mxu0 0.0
    %2198 = vmatprep.mubr.f32.mxu0 0.0
    %2199 = vmatmul.mubr.f32.gmra.mxu0 %v2132
    %v2200 = vpop.f32.mrf.mxu0
    %v2201 = vadd.f32 0.0, %v2200
    %v2202 = vpop.f32.mrf.mxu0
    %2203 = vdwg.mxu0
    %2204 = vmatprep.subr.mxu0 0.0
    %2205 = vmatpush1.msra.mxu0 0.0
    %2206 = vmatprep.subr.mxu0 0.0
    %2207 = vmatpush1.msra.mxu0 0.0
    %2208 = vmatprep.subr.mxu0 0.0
    %2209 = vmatpush1.msra.mxu0 0.0
    %2210 = vmatprep.subr.mxu0 0.0
    %2211 = vmatpush1.msra.mxu0 0.0
    %2212 = vmatprep.subr.mxu0 0.0
    %2213 = vmatpush1.msra.mxu0 0.0
    %2214 = vmatprep.subr.mxu0 0.0
    %2215 = vmatpush1.msra.mxu0 0.0
    %2216 = vmatprep.subr.mxu0 0.0
    %2217 = vmatpush1.msra.mxu0 0.0
    %2218 = vmatprep.subr.mxu0 0.0
    %2219 = vmatpush1.msra.mxu0 0.0
    %2220 = vmatprep.subr.mxu0 0.0
    %2221 = vmatpush1.msra.mxu0 0.0
    %2222 = vmatprep.subr.mxu0 0.0
    %2223 = vmatpush1.msra.mxu0 0.0
    %2224 = vmatprep.subr.mxu0 0.0
    %2225 = vmatpush1.msra.mxu0 0.0
    %2226 = vmatprep.subr.mxu0 0.0
    %2227 = vmatpush1.msra.mxu0 0.0
    %2228 = vmatprep.subr.mxu0 0.0
    %2229 = vmatpush1.msra.mxu0 0.0
    %2230 = vmatprep.subr.mxu0 0.0
    %2231 = vmatpush1.msra.mxu0 0.0
    %2232 = vmatprep.subr.mxu0 0.0
    %2233 = vmatpush1.msra.mxu0 %v1524
    %2234 = vmatprep.subr.mxu0 0.0
    %2235 = vmatpush1.msra.mxu0 %v1523
    %2236 = vmatprep.subr.mxu0 0.0
    %2237 = vmatpush2.msra.mxu0 0.0
    %2238 = vmatprep.subr.mxu0 0.0
    %2239 = vmatpush2.msra.mxu0 0.0
    %2240 = vmatprep.subr.mxu0 0.0
    %2241 = vmatpush2.msra.mxu0 0.0
    %2242 = vmatprep.subr.mxu0 0.0
    %2243 = vmatpush2.msra.mxu0 0.0
    %2244 = vmatprep.subr.mxu0 0.0
    %2245 = vmatpush2.msra.mxu0 0.0
    %2246 = vmatprep.subr.mxu0 0.0
    %2247 = vmatpush2.msra.mxu0 0.0
    %2248 = vmatprep.subr.mxu0 0.0
    %2249 = vmatpush2.msra.mxu0 0.0
    %2250 = vmatprep.subr.mxu0 0.0
    %2251 = vmatpush2.msra.mxu0 0.0
    %2252 = vmatprep.subr.mxu0 0.0
    %2253 = vmatpush2.msra.mxu0 0.0
    %2254 = vmatprep.subr.mxu0 0.0
    %2255 = vmatpush2.msra.mxu0 0.0
    %2256 = vmatprep.subr.mxu0 0.0
    %2257 = vmatpush2.msra.mxu0 0.0
    %2258 = vmatprep.subr.mxu0 0.0
    %2259 = vmatpush2.msra.mxu0 0.0
    %2260 = vmatprep.subr.mxu0 0.0
    %2261 = vmatpush2.msra.mxu0 0.0
    %2262 = vmatprep.subr.mxu0 0.0
    %2263 = vmatpush2.msra.mxu0 0.0
    %2264 = vmatprep.subr.mxu0 0.0
    %2265 = vmatpush2.msra.mxu0 0.0
    %2266 = vmatprep.subr.mxu0 0.0
    %2267 = vmatpush2.msra.mxu0 0.0
    %2268 = vmatprep.mubr.f32.mxu0 0.0
    %2269 = vmatmul.mubr.f32.gmra.mxu0 %v1975
    %v2270 = vpop.f32.mrf.mxu0
    %v2271 = vadd.f32 %v2201, %v2270
    %v2272 = vpop.f32.mrf.mxu0
    %2273 = vdwg.mxu0
    %v2274 = vadd.f32 %v2271, %v1684
    %2275 = vmatprep.subr.mxu0 0.0
    %2276 = vmatpush1.msra.mxu0 0.0
    %2277 = vmatprep.subr.mxu0 0.0
    %2278 = vmatpush1.msra.mxu0 0.0
    %2279 = vmatprep.subr.mxu0 0.0
    %2280 = vmatpush1.msra.mxu0 0.0
    %2281 = vmatprep.subr.mxu0 0.0
    %2282 = vmatpush1.msra.mxu0 0.0
    %2283 = vmatprep.subr.mxu0 0.0
    %2284 = vmatpush1.msra.mxu0 0.0
    %2285 = vmatprep.subr.mxu0 0.0
    %2286 = vmatpush1.msra.mxu0 0.0
    %2287 = vmatprep.subr.mxu0 0.0
    %2288 = vmatpush1.msra.mxu0 0.0
    %2289 = vmatprep.subr.mxu0 0.0
    %2290 = vmatpush1.msra.mxu0 0.0
    %2291 = vmatprep.subr.mxu0 0.0
    %2292 = vmatpush1.msra.mxu0 0.0
    %2293 = vmatprep.subr.mxu0 0.0
    %2294 = vmatpush1.msra.mxu0 0.0
    %2295 = vmatprep.subr.mxu0 0.0
    %2296 = vmatpush1.msra.mxu0 0.0
    %2297 = vmatprep.subr.mxu0 0.0
    %2298 = vmatpush1.msra.mxu0 0.0
    %2299 = vmatprep.subr.mxu0 0.0
    %2300 = vmatpush1.msra.mxu0 0.0
    %2301 = vmatprep.subr.mxu0 0.0
    %2302 = vmatpush1.msra.mxu0 0.0
    %2303 = vmatprep.subr.mxu0 0.0
    %2304 = vmatpush1.msra.mxu0 %v1528
    %2305 = vmatprep.subr.mxu0 0.0
    %2306 = vmatpush1.msra.mxu0 %v1527
    %2307 = vmatprep.subr.mxu0 0.0
    %2308 = vmatpush2.msra.mxu0 0.0
    %2309 = vmatprep.subr.mxu0 0.0
    %2310 = vmatpush2.msra.mxu0 0.0
    %2311 = vmatprep.subr.mxu0 0.0
    %2312 = vmatpush2.msra.mxu0 0.0
    %2313 = vmatprep.subr.mxu0 0.0
    %2314 = vmatpush2.msra.mxu0 0.0
    %2315 = vmatprep.subr.mxu0 0.0
    %2316 = vmatpush2.msra.mxu0 0.0
    %2317 = vmatprep.subr.mxu0 0.0
    %2318 = vmatpush2.msra.mxu0 0.0
    %2319 = vmatprep.subr.mxu0 0.0
    %2320 = vmatpush2.msra.mxu0 0.0
    %2321 = vmatprep.subr.mxu0 0.0
    %2322 = vmatpush2.msra.mxu0 0.0
    %2323 = vmatprep.subr.mxu0 0.0
    %2324 = vmatpush2.msra.mxu0 0.0
    %2325 = vmatprep.subr.mxu0 0.0
    %2326 = vmatpush2.msra.mxu0 0.0
    %2327 = vmatprep.subr.mxu0 0.0
    %2328 = vmatpush2.msra.mxu0 0.0
    %2329 = vmatprep.subr.mxu0 0.0
    %2330 = vmatpush2.msra.mxu0 0.0
    %2331 = vmatprep.subr.mxu0 0.0
    %2332 = vmatpush2.msra.mxu0 0.0
    %2333 = vmatprep.subr.mxu0 0.0
    %2334 = vmatpush2.msra.mxu0 0.0
    %2335 = vmatprep.subr.mxu0 0.0
    %2336 = vmatpush2.msra.mxu0 0.0
    %2337 = vmatprep.subr.mxu0 0.0
    %2338 = vmatpush2.msra.mxu0 0.0
    %2339 = vmatprep.mubr.f32.mxu0 0.0
    %2340 = vmatmul.mubr.f32.gmra.mxu0 %v1798
    %v2341 = vpop.f32.mrf.mxu0
    %v2342 = vadd.f32 0.0, %v2341
    %v2343 = vpop.f32.mrf.mxu0
    %2344 = vdwg.mxu0
    %v2345 = vadd.f32 %v2274, %v2342
    %v2346 = vadd.f32 %v2345, %v1762
    %v2347 = vxor.u32 %v2346, 2147483648
    %v2348 = vmul.f32 %v2347, 1.442695
    %v2349 = vpow.pop %v2348
    %v2350 = vadd.f32 %v2349, 1.0
    %v2351 = vrcp.pop %v2350
    %v2352 = vmul.f32 1.0, %v2351
    %v2353 = vtanh.pop %v2346
    %v2354 = vmul.f32 %v2352, %v1782
    %2356 = vrot.lane.b32.xlu0 %v2353, 96
    %v2357 = vpop.permute.xlu0 %2356
    %v2359 = vmul.f32 %v2352, %v2357
    %2361 = vrot.lane.b32.xlu0 %v2359, 16
    %v2362 = vpop.permute.xlu0 %2361
    %v2364 = vadd.f32 %v2354, %v2362
    %v2365 = vtanh.pop %v2364
    %2367 = vrot.lane.b32.xlu0 %v2365, 32
    %v2368 = vpop.permute.xlu0 %2367
    %v2370 = vmul.f32 %v2352, %v2368
    %2372 = vrot.lane.b32.xlu0 %v2370, 80
    %v2373 = vpop.permute.xlu0 %2372
    %v2374 = vsel %vm527, %v2373, 0
    %2376 = vmatprep.subr.mxu0 0.0
    %2377 = vmatpush1.msra.mxu0 0.0
    %2378 = vmatprep.subr.mxu0 0.0
    %2379 = vmatpush1.msra.mxu0 0.0
    %2380 = vmatprep.subr.mxu0 0.0
    %2381 = vmatpush1.msra.mxu0 0.0
    %2382 = vmatprep.subr.mxu0 0.0
    %2383 = vmatpush1.msra.mxu0 0.0
    %2384 = vmatprep.subr.mxu0 0.0
    %2385 = vmatpush1.msra.mxu0 0.0
    %2386 = vmatprep.subr.mxu0 0.0
    %2387 = vmatpush1.msra.mxu0 0.0
    %2388 = vmatprep.subr.mxu0 0.0
    %2389 = vmatpush1.msra.mxu0 0.0
    %2390 = vmatprep.subr.mxu0 0.0
    %2391 = vmatpush1.msra.mxu0 0.0
    %2392 = vmatprep.subr.mxu0 0.0
    %2393 = vmatpush1.msra.mxu0 0.0
    %2394 = vmatprep.subr.mxu0 0.0
    %2395 = vmatpush1.msra.mxu0 0.0
    %2396 = vmatprep.subr.mxu0 0.0
    %2397 = vmatpush1.msra.mxu0 0.0
    %2398 = vmatprep.subr.mxu0 0.0
    %2399 = vmatpush1.msra.mxu0 0.0
    %2400 = vmatprep.subr.mxu0 0.0
    %2401 = vmatpush1.msra.mxu0 0.0
    %2402 = vmatprep.subr.mxu0 0.0
    %2403 = vmatpush1.msra.mxu0 0.0
    %2404 = vmatprep.subr.mxu0 0.0
    %2405 = vmatpush1.msra.mxu0 %v1532
    %2406 = vmatprep.subr.mxu0 0.0
    %2407 = vmatpush1.msra.mxu0 %v1531
    %2408 = vmatprep.subr.mxu0 0.0
    %2409 = vmatpush2.msra.mxu0 0.0
    %2410 = vmatprep.subr.mxu0 0.0
    %2411 = vmatpush2.msra.mxu0 0.0
    %2412 = vmatprep.subr.mxu0 0.0
    %2413 = vmatpush2.msra.mxu0 0.0
    %2414 = vmatprep.subr.mxu0 0.0
    %2415 = vmatpush2.msra.mxu0 0.0
    %2416 = vmatprep.subr.mxu0 0.0
    %2417 = vmatpush2.msra.mxu0 0.0
    %2418 = vmatprep.subr.mxu0 0.0
    %2419 = vmatpush2.msra.mxu0 0.0
    %2420 = vmatprep.subr.mxu0 0.0
    %2421 = vmatpush2.msra.mxu0 0.0
    %2422 = vmatprep.subr.mxu0 0.0
    %2423 = vmatpush2.msra.mxu0 0.0
    %2424 = vmatprep.subr.mxu0 0.0
    %2425 = vmatpush2.msra.mxu0 0.0
    %2426 = vmatprep.subr.mxu0 0.0
    %2427 = vmatpush2.msra.mxu0 0.0
    %2428 = vmatprep.subr.mxu0 0.0
    %2429 = vmatpush2.msra.mxu0 0.0
    %2430 = vmatprep.subr.mxu0 0.0
    %2431 = vmatpush2.msra.mxu0 0.0
    %2432 = vmatprep.subr.mxu0 0.0
    %2433 = vmatpush2.msra.mxu0 0.0
    %2434 = vmatprep.subr.mxu0 0.0
    %2435 = vmatpush2.msra.mxu0 0.0
    %2436 = vmatprep.subr.mxu0 0.0
    %2437 = vmatpush2.msra.mxu0 0.0
    %2438 = vmatprep.subr.mxu0 0.0
    %2439 = vmatpush2.msra.mxu0 0.0
    %2440 = vmatprep.mubr.f32.mxu0 0.0
    %2441 = vmatmul.mubr.f32.gmra.mxu0 %v2374
    %v2442 = vpop.f32.mrf.mxu0
    %v2443 = vadd.f32 %v1793, %v2442
    %v2444 = vpop.f32.mrf.mxu0
    %2445 = vdwg.mxu0
    %2446 = vmatprep.subr.mxu0 0.0
    %2447 = vmatpush1.msra.mxu0 0.0
    %2448 = vmatprep.subr.mxu0 0.0
    %2449 = vmatpush1.msra.mxu0 0.0
    %2450 = vmatprep.subr.mxu0 0.0
    %2451 = vmatpush1.msra.mxu0 0.0
    %2452 = vmatprep.subr.mxu0 0.0
    %2453 = vmatpush1.msra.mxu0 0.0
    %2454 = vmatprep.subr.mxu0 0.0
    %2455 = vmatpush1.msra.mxu0 0.0
    %2456 = vmatprep.subr.mxu0 0.0
    %2457 = vmatpush1.msra.mxu0 0.0
    %2458 = vmatprep.subr.mxu0 0.0
    %2459 = vmatpush1.msra.mxu0 0.0
    %2460 = vmatprep.subr.mxu0 0.0
    %2461 = vmatpush1.msra.mxu0 0.0
    %2462 = vmatprep.subr.mxu0 0.0
    %2463 = vmatpush1.msra.mxu0 0.0
    %2464 = vmatprep.subr.mxu0 0.0
    %2465 = vmatpush1.msra.mxu0 0.0
    %2466 = vmatprep.subr.mxu0 0.0
    %2467 = vmatpush1.msra.mxu0 0.0
    %2468 = vmatprep.subr.mxu0 0.0
    %2469 = vmatpush1.msra.mxu0 0.0
    %2470 = vmatprep.subr.mxu0 0.0
    %2471 = vmatpush1.msra.mxu0 0.0
    %2472 = vmatprep.subr.mxu0 0.0
    %2473 = vmatpush1.msra.mxu0 0.0
    %2474 = vmatprep.subr.mxu0 0.0
    %2475 = vmatpush1.msra.mxu0 %v1534
    %2476 = vmatprep.subr.mxu0 0.0
    %2477 = vmatpush1.msra.mxu0 %v1533
    %2478 = vmatprep.subr.mxu0 0.0
    %2479 = vmatpush2.msra.mxu0 0.0
    %2480 = vmatprep.subr.mxu0 0.0
    %2481 = vmatpush2.msra.mxu0 0.0
    %2482 = vmatprep.subr.mxu0 0.0
    %2483 = vmatpush2.msra.mxu0 0.0
    %2484 = vmatprep.subr.mxu0 0.0
    %2485 = vmatpush2.msra.mxu0 0.0
    %2486 = vmatprep.subr.mxu0 0.0
    %2487 = vmatpush2.msra.mxu0 0.0
    %2488 = vmatprep.subr.mxu0 0.0
    %2489 = vmatpush2.msra.mxu0 0.0
    %2490 = vmatprep.subr.mxu0 0.0
    %2491 = vmatpush2.msra.mxu0 0.0
    %2492 = vmatprep.subr.mxu0 0.0
    %2493 = vmatpush2.msra.mxu0 0.0
    %2494 = vmatprep.subr.mxu0 0.0
    %2495 = vmatpush2.msra.mxu0 0.0
    %2496 = vmatprep.subr.mxu0 0.0
    %2497 = vmatpush2.msra.mxu0 0.0
    %2498 = vmatprep.subr.mxu0 0.0
    %2499 = vmatpush2.msra.mxu0 0.0
    %2500 = vmatprep.subr.mxu0 0.0
    %2501 = vmatpush2.msra.mxu0 0.0
    %2502 = vmatprep.subr.mxu0 0.0
    %2503 = vmatpush2.msra.mxu0 0.0
    %2504 = vmatprep.subr.mxu0 0.0
    %2505 = vmatpush2.msra.mxu0 0.0
    %2506 = vmatprep.subr.mxu0 0.0
    %2507 = vmatpush2.msra.mxu0 0.0
    %2508 = vmatprep.subr.mxu0 0.0
    %2509 = vmatpush2.msra.mxu0 0.0
    %2510 = vmatprep.mubr.f32.mxu0 0.0
    %2511 = vmatmul.mubr.f32.gmra.mxu0 %v1975
    %v2512 = vpop.f32.mrf.mxu0
    %v2513 = vadd.f32 0.0, %v2512
    %v2514 = vpop.f32.mrf.mxu0
    %2515 = vdwg.mxu0
    %v2516 = vadd.f32 %v2443, %v2513
    %v2517 = vadd.f32 %v2516, %v1945
    %v2518 = vxor.u32 %v2517, 2147483648
    %v2519 = vmul.f32 %v2518, 1.442695
    %v2520 = vpow.pop %v2519
    %v2521 = vadd.f32 %v2520, 1.0
    %v2522 = vrcp.pop %v2521
    %v2523 = vmul.f32 1.0, %v2522
    %v2524 = vtanh.pop %v2517
    %v2525 = vmul.f32 %v2523, %v1965
    %2527 = vrot.lane.b32.xlu0 %v2524, 96
    %v2528 = vpop.permute.xlu0 %2527
    %v2530 = vmul.f32 %v2523, %v2528
    %2532 = vrot.lane.b32.xlu0 %v2530, 16
    %v2533 = vpop.permute.xlu0 %2532
    %v2535 = vadd.f32 %v2525, %v2533
    %v2536 = vtanh.pop %v2535
    %2538 = vrot.lane.b32.xlu0 %v2536, 32
    %v2539 = vpop.permute.xlu0 %2538
    %v2541 = vmul.f32 %v2523, %v2539
    %2543 = vrot.lane.b32.xlu0 %v2541, 80
    %v2544 = vpop.permute.xlu0 %2543
    %v2545 = vsel %vm527, %v2544, 0
    %2547 = vmatprep.subr.mxu0 0.0
    %2548 = vmatpush1.msra.mxu0 0.0
    %2549 = vmatprep.subr.mxu0 0.0
    %2550 = vmatpush1.msra.mxu0 0.0
    %2551 = vmatprep.subr.mxu0 0.0
    %2552 = vmatpush1.msra.mxu0 0.0
    %2553 = vmatprep.subr.mxu0 0.0
    %2554 = vmatpush1.msra.mxu0 0.0
    %2555 = vmatprep.subr.mxu0 0.0
    %2556 = vmatpush1.msra.mxu0 0.0
    %2557 = vmatprep.subr.mxu0 0.0
    %2558 = vmatpush1.msra.mxu0 0.0
    %2559 = vmatprep.subr.mxu0 0.0
    %2560 = vmatpush1.msra.mxu0 0.0
    %2561 = vmatprep.subr.mxu0 0.0
    %2562 = vmatpush1.msra.mxu0 0.0
    %2563 = vmatprep.subr.mxu0 0.0
    %2564 = vmatpush1.msra.mxu0 0.0
    %2565 = vmatprep.subr.mxu0 0.0
    %2566 = vmatpush1.msra.mxu0 0.0
    %2567 = vmatprep.subr.mxu0 0.0
    %2568 = vmatpush1.msra.mxu0 0.0
    %2569 = vmatprep.subr.mxu0 0.0
    %2570 = vmatpush1.msra.mxu0 0.0
    %2571 = vmatprep.subr.mxu0 0.0
    %2572 = vmatpush1.msra.mxu0 0.0
    %2573 = vmatprep.subr.mxu0 0.0
    %2574 = vmatpush1.msra.mxu0 0.0
    %2575 = vmatprep.subr.mxu0 0.0
    %2576 = vmatpush1.msra.mxu0 %v1521
    %2577 = vmatprep.subr.mxu0 0.0
    %2578 = vmatpush1.msra.mxu0 %v1520
    %2579 = vmatprep.subr.mxu0 0.0
    %2580 = vmatpush2.msra.mxu0 0.0
    %2581 = vmatprep.subr.mxu0 0.0
    %2582 = vmatpush2.msra.mxu0 0.0
    %2583 = vmatprep.subr.mxu0 0.0
    %2584 = vmatpush2.msra.mxu0 0.0
    %2585 = vmatprep.subr.mxu0 0.0
    %2586 = vmatpush2.msra.mxu0 0.0
    %2587 = vmatprep.subr.mxu0 0.0
    %2588 = vmatpush2.msra.mxu0 0.0
    %2589 = vmatprep.subr.mxu0 0.0
    %2590 = vmatpush2.msra.mxu0 0.0
    %2591 = vmatprep.subr.mxu0 0.0
    %2592 = vmatpush2.msra.mxu0 0.0
    %2593 = vmatprep.subr.mxu0 0.0
    %2594 = vmatpush2.msra.mxu0 0.0
    %2595 = vmatprep.subr.mxu0 0.0
    %2596 = vmatpush2.msra.mxu0 0.0
    %2597 = vmatprep.subr.mxu0 0.0
    %2598 = vmatpush2.msra.mxu0 0.0
    %2599 = vmatprep.subr.mxu0 0.0
    %2600 = vmatpush2.msra.mxu0 0.0
    %2601 = vmatprep.subr.mxu0 0.0
    %2602 = vmatpush2.msra.mxu0 0.0
    %2603 = vmatprep.subr.mxu0 0.0
    %2604 = vmatpush2.msra.mxu0 0.0
    %2605 = vmatprep.subr.mxu0 0.0
    %2606 = vmatpush2.msra.mxu0 0.0
    %2607 = vmatprep.subr.mxu0 0.0
    %2608 = vmatpush2.msra.mxu0 0.0
    %2609 = vmatprep.subr.mxu0 0.0
    %2610 = vmatpush2.msra.mxu0 0.0
    %2611 = vmatprep.mubr.f32.mxu0 0.0
    %2612 = vmatmul.mubr.f32.gmra.mxu0 %v2545
    %v2613 = vpop.f32.mrf.mxu0
    %v2614 = vadd.f32 0.0, %v2613
    %v2615 = vpop.f32.mrf.mxu0
    %2616 = vdwg.mxu0
    %v2617 = vsel %vm1522, %v2614, -1e+30
    %v2618 = vsel %vm159, %v2617, -inf
    %2619 = vmax.xlane.f32.xlu0 %v2618
    %v2620 = vpop.xlane.xlu0 %2619
    %v2621 = vsub.f32 %v2614, %v2620
    %v2622 = vmul.f32 %v2621, 1.442695
    %v2623 = vpow.pop %v2622
    %v2624 = vsel %vm1522, %v2623, 0.0
    %v2625 = vsel %vm159, %v2624, 0.0
    %2626 = vadd.xlane.f32.xlu0 %v2625
    %v2627 = vpop.xlane.xlu0 %2626
    %v2628 = vadd.f32 %v2627, 1e-16
    %v2629 = vrcp.pop %v2628
    %v2630 = vmul.f32 %v2624, %v2629
    %2631 = vmatprep.subr.mxu0 0.0
    %2632 = vmatpush1.xpose.msra.mxu0 0.0
    %2633 = vmatprep.subr.mxu0 0.0
    %2634 = vmatpush1.xpose.msra.mxu0 0.0
    %2635 = vmatprep.subr.mxu0 0.0
    %2636 = vmatpush1.xpose.msra.mxu0 0.0
    %2637 = vmatprep.subr.mxu0 0.0
    %2638 = vmatpush1.xpose.msra.mxu0 0.0
    %2639 = vmatprep.subr.mxu0 0.0
    %2640 = vmatpush1.xpose.msra.mxu0 0.0
    %2641 = vmatprep.subr.mxu0 0.0
    %2642 = vmatpush1.xpose.msra.mxu0 0.0
    %2643 = vmatprep.subr.mxu0 0.0
    %2644 = vmatpush1.xpose.msra.mxu0 0.0
    %2645 = vmatprep.subr.mxu0 0.0
    %2646 = vmatpush1.xpose.msra.mxu0 0.0
    %2647 = vmatprep.subr.mxu0 0.0
    %2648 = vmatpush1.xpose.msra.mxu0 0.0
    %2649 = vmatprep.subr.mxu0 0.0
    %2650 = vmatpush1.xpose.msra.mxu0 0.0
    %2651 = vmatprep.subr.mxu0 0.0
    %2652 = vmatpush1.xpose.msra.mxu0 0.0
    %2653 = vmatprep.subr.mxu0 0.0
    %2654 = vmatpush1.xpose.msra.mxu0 0.0
    %2655 = vmatprep.subr.mxu0 0.0
    %2656 = vmatpush1.xpose.msra.mxu0 0.0
    %2657 = vmatprep.subr.mxu0 0.0
    %2658 = vmatpush1.xpose.msra.mxu0 0.0
    %2659 = vmatprep.subr.mxu0 0.0
    %2660 = vmatpush1.xpose.msra.mxu0 %v1521
    %2661 = vmatprep.subr.mxu0 0.0
    %2662 = vmatpush1.xpose.msra.mxu0 %v1520
    %2663 = vmatprep.subr.mxu0 0.0
    %2664 = vmatpush2.xpose.msra.mxu0 0.0
    %2665 = vmatprep.subr.mxu0 0.0
    %2666 = vmatpush2.xpose.msra.mxu0 0.0
    %2667 = vmatprep.subr.mxu0 0.0
    %2668 = vmatpush2.xpose.msra.mxu0 0.0
    %2669 = vmatprep.subr.mxu0 0.0
    %2670 = vmatpush2.xpose.msra.mxu0 0.0
    %2671 = vmatprep.subr.mxu0 0.0
    %2672 = vmatpush2.xpose.msra.mxu0 0.0
    %2673 = vmatprep.subr.mxu0 0.0
    %2674 = vmatpush2.xpose.msra.mxu0 0.0
    %2675 = vmatprep.subr.mxu0 0.0
    %2676 = vmatpush2.xpose.msra.mxu0 0.0
    %2677 = vmatprep.subr.mxu0 0.0
    %2678 = vmatpush2.xpose.msra.mxu0 0.0
    %2679 = vmatprep.subr.mxu0 0.0
    %2680 = vmatpush2.xpose.msra.mxu0 0.0
    %2681 = vmatprep.subr.mxu0 0.0
    %2682 = vmatpush2.xpose.msra.mxu0 0.0
    %2683 = vmatprep.subr.mxu0 0.0
    %2684 = vmatpush2.xpose.msra.mxu0 0.0
    %2685 = vmatprep.subr.mxu0 0.0
    %2686 = vmatpush2.xpose.msra.mxu0 0.0
    %2687 = vmatprep.subr.mxu0 0.0
    %2688 = vmatpush2.xpose.msra.mxu0 0.0
    %2689 = vmatprep.subr.mxu0 0.0
    %2690 = vmatpush2.xpose.msra.mxu0 0.0
    %2691 = vmatprep.subr.mxu0 0.0
    %2692 = vmatpush2.xpose.msra.mxu0 0.0
    %2693 = vmatprep.subr.mxu0 0.0
    %2694 = vmatpush2.xpose.msra.mxu0 0.0
    %2695 = vmatprep.mubr.f32.mxu0 0.0
    %2696 = vmatmul.mubr.f32.gmra.mxu0 %v2630
    %v2697 = vpop.f32.mrf.mxu0
    %v2698 = vadd.f32 0.0, %v2697
    %v2699 = vpop.f32.mrf.mxu0
    %2700 = vdwg.mxu0
    %v2702 = vsel %vm527, %v2698, 0
    %2704 = vmatprep.subr.mxu0 0.0
    %2705 = vmatpush1.msra.mxu0 0.0
    %2706 = vmatprep.subr.mxu0 0.0
    %2707 = vmatpush1.msra.mxu0 0.0
    %2708 = vmatprep.subr.mxu0 0.0
    %2709 = vmatpush1.msra.mxu0 0.0
    %2710 = vmatprep.subr.mxu0 0.0
    %2711 = vmatpush1.msra.mxu0 0.0
    %2712 = vmatprep.subr.mxu0 0.0
    %2713 = vmatpush1.msra.mxu0 0.0
    %2714 = vmatprep.subr.mxu0 0.0
    %2715 = vmatpush1.msra.mxu0 0.0
    %2716 = vmatprep.subr.mxu0 0.0
    %2717 = vmatpush1.msra.mxu0 0.0
    %2718 = vmatprep.subr.mxu0 0.0
    %2719 = vmatpush1.msra.mxu0 0.0
    %2720 = vmatprep.subr.mxu0 0.0
    %2721 = vmatpush1.msra.mxu0 0.0
    %2722 = vmatprep.subr.mxu0 0.0
    %2723 = vmatpush1.msra.mxu0 0.0
    %2724 = vmatprep.subr.mxu0 0.0
    %2725 = vmatpush1.msra.mxu0 0.0
    %2726 = vmatprep.subr.mxu0 0.0
    %2727 = vmatpush1.msra.mxu0 0.0
    %2728 = vmatprep.subr.mxu0 0.0
    %2729 = vmatpush1.msra.mxu0 0.0
    %2730 = vmatprep.subr.mxu0 0.0
    %2731 = vmatpush1.msra.mxu0 0.0
    %2732 = vmatprep.subr.mxu0 0.0
    %2733 = vmatpush1.msra.mxu0 %v1526
    %2734 = vmatprep.subr.mxu0 0.0
    %2735 = vmatpush1.msra.mxu0 %v1525
    %2736 = vmatprep.subr.mxu0 0.0
    %2737 = vmatpush2.msra.mxu0 0.0
    %2738 = vmatprep.subr.mxu0 0.0
    %2739 = vmatpush2.msra.mxu0 0.0
    %2740 = vmatprep.subr.mxu0 0.0
    %2741 = vmatpush2.msra.mxu0 0.0
    %2742 = vmatprep.subr.mxu0 0.0
    %2743 = vmatpush2.msra.mxu0 0.0
    %2744 = vmatprep.subr.mxu0 0.0
    %2745 = vmatpush2.msra.mxu0 0.0
    %2746 = vmatprep.subr.mxu0 0.0
    %2747 = vmatpush2.msra.mxu0 0.0
    %2748 = vmatprep.subr.mxu0 0.0
    %2749 = vmatpush2.msra.mxu0 0.0
    %2750 = vmatprep.subr.mxu0 0.0
    %2751 = vmatpush2.msra.mxu0 0.0
    %2752 = vmatprep.subr.mxu0 0.0
    %2753 = vmatpush2.msra.mxu0 0.0
    %2754 = vmatprep.subr.mxu0 0.0
    %2755 = vmatpush2.msra.mxu0 0.0
    %2756 = vmatprep.subr.mxu0 0.0
    %2757 = vmatpush2.msra.mxu0 0.0
    %2758 = vmatprep.subr.mxu0 0.0
    %2759 = vmatpush2.msra.mxu0 0.0
    %2760 = vmatprep.subr.mxu0 0.0
    %2761 = vmatpush2.msra.mxu0 0.0
    %2762 = vmatprep.subr.mxu0 0.0
    %2763 = vmatpush2.msra.mxu0 0.0
    %2764 = vmatprep.subr.mxu0 0.0
    %2765 = vmatpush2.msra.mxu0 0.0
    %2766 = vmatprep.subr.mxu0 0.0
    %2767 = vmatpush2.msra.mxu0 0.0
    %2768 = vmatprep.mubr.f32.mxu0 0.0
    %2769 = vmatmul.mubr.f32.gmra.mxu0 %v2702
    %v2770 = vpop.f32.mrf.mxu0
    %v2771 = vadd.f32 0.0, %v2770
    %v2772 = vpop.f32.mrf.mxu0
    %2773 = vdwg.mxu0
    %2774 = vmatprep.subr.mxu0 0.0
    %2775 = vmatpush1.msra.mxu0 0.0
    %2776 = vmatprep.subr.mxu0 0.0
    %2777 = vmatpush1.msra.mxu0 0.0
    %2778 = vmatprep.subr.mxu0 0.0
    %2779 = vmatpush1.msra.mxu0 0.0
    %2780 = vmatprep.subr.mxu0 0.0
    %2781 = vmatpush1.msra.mxu0 0.0
    %2782 = vmatprep.subr.mxu0 0.0
    %2783 = vmatpush1.msra.mxu0 0.0
    %2784 = vmatprep.subr.mxu0 0.0
    %2785 = vmatpush1.msra.mxu0 0.0
    %2786 = vmatprep.subr.mxu0 0.0
    %2787 = vmatpush1.msra.mxu0 0.0
    %2788 = vmatprep.subr.mxu0 0.0
    %2789 = vmatpush1.msra.mxu0 0.0
    %2790 = vmatprep.subr.mxu0 0.0
    %2791 = vmatpush1.msra.mxu0 0.0
    %2792 = vmatprep.subr.mxu0 0.0
    %2793 = vmatpush1.msra.mxu0 0.0
    %2794 = vmatprep.subr.mxu0 0.0
    %2795 = vmatpush1.msra.mxu0 0.0
    %2796 = vmatprep.subr.mxu0 0.0
    %2797 = vmatpush1.msra.mxu0 0.0
    %2798 = vmatprep.subr.mxu0 0.0
    %2799 = vmatpush1.msra.mxu0 0.0
    %2800 = vmatprep.subr.mxu0 0.0
    %2801 = vmatpush1.msra.mxu0 0.0
    %2802 = vmatprep.subr.mxu0 0.0
    %2803 = vmatpush1.msra.mxu0 %v1524
    %2804 = vmatprep.subr.mxu0 0.0
    %2805 = vmatpush1.msra.mxu0 %v1523
    %2806 = vmatprep.subr.mxu0 0.0
    %2807 = vmatpush2.msra.mxu0 0.0
    %2808 = vmatprep.subr.mxu0 0.0
    %2809 = vmatpush2.msra.mxu0 0.0
    %2810 = vmatprep.subr.mxu0 0.0
    %2811 = vmatpush2.msra.mxu0 0.0
    %2812 = vmatprep.subr.mxu0 0.0
    %2813 = vmatpush2.msra.mxu0 0.0
    %2814 = vmatprep.subr.mxu0 0.0
    %2815 = vmatpush2.msra.mxu0 0.0
    %2816 = vmatprep.subr.mxu0 0.0
    %2817 = vmatpush2.msra.mxu0 0.0
    %2818 = vmatprep.subr.mxu0 0.0
    %2819 = vmatpush2.msra.mxu0 0.0
    %2820 = vmatprep.subr.mxu0 0.0
    %2821 = vmatpush2.msra.mxu0 0.0
    %2822 = vmatprep.subr.mxu0 0.0
    %2823 = vmatpush2.msra.mxu0 0.0
    %2824 = vmatprep.subr.mxu0 0.0
    %2825 = vmatpush2.msra.mxu0 0.0
    %2826 = vmatprep.subr.mxu0 0.0
    %2827 = vmatpush2.msra.mxu0 0.0
    %2828 = vmatprep.subr.mxu0 0.0
    %2829 = vmatpush2.msra.mxu0 0.0
    %2830 = vmatprep.subr.mxu0 0.0
    %2831 = vmatpush2.msra.mxu0 0.0
    %2832 = vmatprep.subr.mxu0 0.0
    %2833 = vmatpush2.msra.mxu0 0.0
    %2834 = vmatprep.subr.mxu0 0.0
    %2835 = vmatpush2.msra.mxu0 0.0
    %2836 = vmatprep.subr.mxu0 0.0
    %2837 = vmatpush2.msra.mxu0 0.0
    %2838 = vmatprep.mubr.f32.mxu0 0.0
    %2839 = vmatmul.mubr.f32.gmra.mxu0 %v2545
    %v2840 = vpop.f32.mrf.mxu0
    %v2841 = vadd.f32 %v2771, %v2840
    %v2842 = vpop.f32.mrf.mxu0
    %2843 = vdwg.mxu0
    %v2844 = vadd.f32 %v2841, %v1684
    %2845 = vmatprep.subr.mxu0 0.0
    %2846 = vmatpush1.msra.mxu0 0.0
    %2847 = vmatprep.subr.mxu0 0.0
    %2848 = vmatpush1.msra.mxu0 0.0
    %2849 = vmatprep.subr.mxu0 0.0
    %2850 = vmatpush1.msra.mxu0 0.0
    %2851 = vmatprep.subr.mxu0 0.0
    %2852 = vmatpush1.msra.mxu0 0.0
    %2853 = vmatprep.subr.mxu0 0.0
    %2854 = vmatpush1.msra.mxu0 0.0
    %2855 = vmatprep.subr.mxu0 0.0
    %2856 = vmatpush1.msra.mxu0 0.0
    %2857 = vmatprep.subr.mxu0 0.0
    %2858 = vmatpush1.msra.mxu0 0.0
    %2859 = vmatprep.subr.mxu0 0.0
    %2860 = vmatpush1.msra.mxu0 0.0
    %2861 = vmatprep.subr.mxu0 0.0
    %2862 = vmatpush1.msra.mxu0 0.0
    %2863 = vmatprep.subr.mxu0 0.0
    %2864 = vmatpush1.msra.mxu0 0.0
    %2865 = vmatprep.subr.mxu0 0.0
    %2866 = vmatpush1.msra.mxu0 0.0
    %2867 = vmatprep.subr.mxu0 0.0
    %2868 = vmatpush1.msra.mxu0 0.0
    %2869 = vmatprep.subr.mxu0 0.0
    %2870 = vmatpush1.msra.mxu0 0.0
    %2871 = vmatprep.subr.mxu0 0.0
    %2872 = vmatpush1.msra.mxu0 0.0
    %2873 = vmatprep.subr.mxu0 0.0
    %2874 = vmatpush1.msra.mxu0 %v1528
    %2875 = vmatprep.subr.mxu0 0.0
    %2876 = vmatpush1.msra.mxu0 %v1527
    %2877 = vmatprep.subr.mxu0 0.0
    %2878 = vmatpush2.msra.mxu0 0.0
    %2879 = vmatprep.subr.mxu0 0.0
    %2880 = vmatpush2.msra.mxu0 0.0
    %2881 = vmatprep.subr.mxu0 0.0
    %2882 = vmatpush2.msra.mxu0 0.0
    %2883 = vmatprep.subr.mxu0 0.0
    %2884 = vmatpush2.msra.mxu0 0.0
    %2885 = vmatprep.subr.mxu0 0.0
    %2886 = vmatpush2.msra.mxu0 0.0
    %2887 = vmatprep.subr.mxu0 0.0
    %2888 = vmatpush2.msra.mxu0 0.0
    %2889 = vmatprep.subr.mxu0 0.0
    %2890 = vmatpush2.msra.mxu0 0.0
    %2891 = vmatprep.subr.mxu0 0.0
    %2892 = vmatpush2.msra.mxu0 0.0
    %2893 = vmatprep.subr.mxu0 0.0
    %2894 = vmatpush2.msra.mxu0 0.0
    %2895 = vmatprep.subr.mxu0 0.0
    %2896 = vmatpush2.msra.mxu0 0.0
    %2897 = vmatprep.subr.mxu0 0.0
    %2898 = vmatpush2.msra.mxu0 0.0
    %2899 = vmatprep.subr.mxu0 0.0
    %2900 = vmatpush2.msra.mxu0 0.0
    %2901 = vmatprep.subr.mxu0 0.0
    %2902 = vmatpush2.msra.mxu0 0.0
    %2903 = vmatprep.subr.mxu0 0.0
    %2904 = vmatpush2.msra.mxu0 0.0
    %2905 = vmatprep.subr.mxu0 0.0
    %2906 = vmatpush2.msra.mxu0 0.0
    %2907 = vmatprep.subr.mxu0 0.0
    %2908 = vmatpush2.msra.mxu0 0.0
    %2909 = vmatprep.mubr.f32.mxu0 0.0
    %2910 = vmatmul.mubr.f32.gmra.mxu0 %v2374
    %v2911 = vpop.f32.mrf.mxu0
    %v2912 = vadd.f32 0.0, %v2911
    %v2913 = vpop.f32.mrf.mxu0
    %2914 = vdwg.mxu0
    %v2915 = vadd.f32 %v2844, %v2912
    %v2916 = vadd.f32 %v2915, %v1762
    %v2917 = vxor.u32 %v2916, 2147483648
    %v2918 = vmul.f32 %v2917, 1.442695
    %v2919 = vpow.pop %v2918
    %v2920 = vadd.f32 %v2919, 1.0
    %v2921 = vrcp.pop %v2920
    %v2922 = vmul.f32 1.0, %v2921
    %v2923 = vtanh.pop %v2916
    %v2924 = vmul.f32 %v2922, %v2364
    %2926 = vrot.lane.b32.xlu0 %v2923, 96
    %v2927 = vpop.permute.xlu0 %2926
    %v2929 = vmul.f32 %v2922, %v2927
    %2931 = vrot.lane.b32.xlu0 %v2929, 16
    %v2932 = vpop.permute.xlu0 %2931
    %v2934 = vadd.f32 %v2924, %v2932
    %v2935 = vtanh.pop %v2934
    %2937 = vrot.lane.b32.xlu0 %v2935, 32
    %v2938 = vpop.permute.xlu0 %2937
    %v2940 = vmul.f32 %v2922, %v2938
    %2942 = vrot.lane.b32.xlu0 %v2940, 80
    %v2943 = vpop.permute.xlu0 %2942
    %v2944 = vsel %vm527, %v2943, 0
    %2946 = vmatprep.subr.mxu0 0.0
    %2947 = vmatpush1.msra.mxu0 0.0
    %2948 = vmatprep.subr.mxu0 0.0
    %2949 = vmatpush1.msra.mxu0 0.0
    %2950 = vmatprep.subr.mxu0 0.0
    %2951 = vmatpush1.msra.mxu0 0.0
    %2952 = vmatprep.subr.mxu0 0.0
    %2953 = vmatpush1.msra.mxu0 0.0
    %2954 = vmatprep.subr.mxu0 0.0
    %2955 = vmatpush1.msra.mxu0 0.0
    %2956 = vmatprep.subr.mxu0 0.0
    %2957 = vmatpush1.msra.mxu0 0.0
    %2958 = vmatprep.subr.mxu0 0.0
    %2959 = vmatpush1.msra.mxu0 0.0
    %2960 = vmatprep.subr.mxu0 0.0
    %2961 = vmatpush1.msra.mxu0 0.0
    %2962 = vmatprep.subr.mxu0 0.0
    %2963 = vmatpush1.msra.mxu0 0.0
    %2964 = vmatprep.subr.mxu0 0.0
    %2965 = vmatpush1.msra.mxu0 0.0
    %2966 = vmatprep.subr.mxu0 0.0
    %2967 = vmatpush1.msra.mxu0 0.0
    %2968 = vmatprep.subr.mxu0 0.0
    %2969 = vmatpush1.msra.mxu0 0.0
    %2970 = vmatprep.subr.mxu0 0.0
    %2971 = vmatpush1.msra.mxu0 0.0
    %2972 = vmatprep.subr.mxu0 0.0
    %2973 = vmatpush1.msra.mxu0 0.0
    %2974 = vmatprep.subr.mxu0 0.0
    %2975 = vmatpush1.msra.mxu0 %v1532
    %2976 = vmatprep.subr.mxu0 0.0
    %2977 = vmatpush1.msra.mxu0 %v1531
    %2978 = vmatprep.subr.mxu0 0.0
    %2979 = vmatpush2.msra.mxu0 0.0
    %2980 = vmatprep.subr.mxu0 0.0
    %2981 = vmatpush2.msra.mxu0 0.0
    %2982 = vmatprep.subr.mxu0 0.0
    %2983 = vmatpush2.msra.mxu0 0.0
    %2984 = vmatprep.subr.mxu0 0.0
    %2985 = vmatpush2.msra.mxu0 0.0
    %2986 = vmatprep.subr.mxu0 0.0
    %2987 = vmatpush2.msra.mxu0 0.0
    %2988 = vmatprep.subr.mxu0 0.0
    %2989 = vmatpush2.msra.mxu0 0.0
    %2990 = vmatprep.subr.mxu0 0.0
    %2991 = vmatpush2.msra.mxu0 0.0
    %2992 = vmatprep.subr.mxu0 0.0
    %2993 = vmatpush2.msra.mxu0 0.0
    %2994 = vmatprep.subr.mxu0 0.0
    %2995 = vmatpush2.msra.mxu0 0.0
    %2996 = vmatprep.subr.mxu0 0.0
    %2997 = vmatpush2.msra.mxu0 0.0
    %2998 = vmatprep.subr.mxu0 0.0
    %2999 = vmatpush2.msra.mxu0 0.0
    %3000 = vmatprep.subr.mxu0 0.0
    %3001 = vmatpush2.msra.mxu0 0.0
    %3002 = vmatprep.subr.mxu0 0.0
    %3003 = vmatpush2.msra.mxu0 0.0
    %3004 = vmatprep.subr.mxu0 0.0
    %3005 = vmatpush2.msra.mxu0 0.0
    %3006 = vmatprep.subr.mxu0 0.0
    %3007 = vmatpush2.msra.mxu0 0.0
    %3008 = vmatprep.subr.mxu0 0.0
    %3009 = vmatpush2.msra.mxu0 0.0
    %3010 = vmatprep.mubr.f32.mxu0 0.0
    %3011 = vmatmul.mubr.f32.gmra.mxu0 %v2944
    %v3012 = vpop.f32.mrf.mxu0
    %v3013 = vadd.f32 %v1793, %v3012
    %v3014 = vpop.f32.mrf.mxu0
    %3015 = vdwg.mxu0
    %3016 = vmatprep.subr.mxu0 0.0
    %3017 = vmatpush1.msra.mxu0 0.0
    %3018 = vmatprep.subr.mxu0 0.0
    %3019 = vmatpush1.msra.mxu0 0.0
    %3020 = vmatprep.subr.mxu0 0.0
    %3021 = vmatpush1.msra.mxu0 0.0
    %3022 = vmatprep.subr.mxu0 0.0
    %3023 = vmatpush1.msra.mxu0 0.0
    %3024 = vmatprep.subr.mxu0 0.0
    %3025 = vmatpush1.msra.mxu0 0.0
    %3026 = vmatprep.subr.mxu0 0.0
    %3027 = vmatpush1.msra.mxu0 0.0
    %3028 = vmatprep.subr.mxu0 0.0
    %3029 = vmatpush1.msra.mxu0 0.0
    %3030 = vmatprep.subr.mxu0 0.0
    %3031 = vmatpush1.msra.mxu0 0.0
    %3032 = vmatprep.subr.mxu0 0.0
    %3033 = vmatpush1.msra.mxu0 0.0
    %3034 = vmatprep.subr.mxu0 0.0
    %3035 = vmatpush1.msra.mxu0 0.0
    %3036 = vmatprep.subr.mxu0 0.0
    %3037 = vmatpush1.msra.mxu0 0.0
    %3038 = vmatprep.subr.mxu0 0.0
    %3039 = vmatpush1.msra.mxu0 0.0
    %3040 = vmatprep.subr.mxu0 0.0
    %3041 = vmatpush1.msra.mxu0 0.0
    %3042 = vmatprep.subr.mxu0 0.0
    %3043 = vmatpush1.msra.mxu0 0.0
    %3044 = vmatprep.subr.mxu0 0.0
    %3045 = vmatpush1.msra.mxu0 %v1534
    %3046 = vmatprep.subr.mxu0 0.0
    %3047 = vmatpush1.msra.mxu0 %v1533
    %3048 = vmatprep.subr.mxu0 0.0
    %3049 = vmatpush2.msra.mxu0 0.0
    %3050 = vmatprep.subr.mxu0 0.0
    %3051 = vmatpush2.msra.mxu0 0.0
    %3052 = vmatprep.subr.mxu0 0.0
    %3053 = vmatpush2.msra.mxu0 0.0
    %3054 = vmatprep.subr.mxu0 0.0
    %3055 = vmatpush2.msra.mxu0 0.0
    %3056 = vmatprep.subr.mxu0 0.0
    %3057 = vmatpush2.msra.mxu0 0.0
    %3058 = vmatprep.subr.mxu0 0.0
    %3059 = vmatpush2.msra.mxu0 0.0
    %3060 = vmatprep.subr.mxu0 0.0
    %3061 = vmatpush2.msra.mxu0 0.0
    %3062 = vmatprep.subr.mxu0 0.0
    %3063 = vmatpush2.msra.mxu0 0.0
    %3064 = vmatprep.subr.mxu0 0.0
    %3065 = vmatpush2.msra.mxu0 0.0
    %3066 = vmatprep.subr.mxu0 0.0
    %3067 = vmatpush2.msra.mxu0 0.0
    %3068 = vmatprep.subr.mxu0 0.0
    %3069 = vmatpush2.msra.mxu0 0.0
    %3070 = vmatprep.subr.mxu0 0.0
    %3071 = vmatpush2.msra.mxu0 0.0
    %3072 = vmatprep.subr.mxu0 0.0
    %3073 = vmatpush2.msra.mxu0 0.0
    %3074 = vmatprep.subr.mxu0 0.0
    %3075 = vmatpush2.msra.mxu0 0.0
    %3076 = vmatprep.subr.mxu0 0.0
    %3077 = vmatpush2.msra.mxu0 0.0
    %3078 = vmatprep.subr.mxu0 0.0
    %3079 = vmatpush2.msra.mxu0 0.0
    %3080 = vmatprep.mubr.f32.mxu0 0.0
    %3081 = vmatmul.mubr.f32.gmra.mxu0 %v2545
    %v3082 = vpop.f32.mrf.mxu0
    %v3083 = vadd.f32 0.0, %v3082
    %v3084 = vpop.f32.mrf.mxu0
    %3085 = vdwg.mxu0
    %v3086 = vadd.f32 %v3013, %v3083
    %v3087 = vadd.f32 %v3086, %v1945
    %v3088 = vxor.u32 %v3087, 2147483648
    %v3089 = vmul.f32 %v3088, 1.442695
    %v3090 = vpow.pop %v3089
    %v3091 = vadd.f32 %v3090, 1.0
    %v3092 = vrcp.pop %v3091
    %v3093 = vmul.f32 1.0, %v3092
    %v3094 = vtanh.pop %v3087
    %v3095 = vmul.f32 %v3093, %v2535
    %3097 = vrot.lane.b32.xlu0 %v3094, 96
    %v3098 = vpop.permute.xlu0 %3097
    %v3100 = vmul.f32 %v3093, %v3098
    %3102 = vrot.lane.b32.xlu0 %v3100, 16
    %v3103 = vpop.permute.xlu0 %3102
    %v3105 = vadd.f32 %v3095, %v3103
    %v3106 = vtanh.pop %v3105
    %3108 = vrot.lane.b32.xlu0 %v3106, 32
    %v3109 = vpop.permute.xlu0 %3108
    %v3111 = vmul.f32 %v3093, %v3109
    %3113 = vrot.lane.b32.xlu0 %v3111, 80
    %v3114 = vpop.permute.xlu0 %3113
    %v3115 = vsel %vm527, %v3114, 0
    %3117 = vmatprep.subr.mxu0 0.0
    %3118 = vmatpush1.msra.mxu0 0.0
    %3119 = vmatprep.subr.mxu0 0.0
    %3120 = vmatpush1.msra.mxu0 0.0
    %3121 = vmatprep.subr.mxu0 0.0
    %3122 = vmatpush1.msra.mxu0 0.0
    %3123 = vmatprep.subr.mxu0 0.0
    %3124 = vmatpush1.msra.mxu0 0.0
    %3125 = vmatprep.subr.mxu0 0.0
    %3126 = vmatpush1.msra.mxu0 0.0
    %3127 = vmatprep.subr.mxu0 0.0
    %3128 = vmatpush1.msra.mxu0 0.0
    %3129 = vmatprep.subr.mxu0 0.0
    %3130 = vmatpush1.msra.mxu0 0.0
    %3131 = vmatprep.subr.mxu0 0.0
    %3132 = vmatpush1.msra.mxu0 0.0
    %3133 = vmatprep.subr.mxu0 0.0
    %3134 = vmatpush1.msra.mxu0 0.0
    %3135 = vmatprep.subr.mxu0 0.0
    %3136 = vmatpush1.msra.mxu0 0.0
    %3137 = vmatprep.subr.mxu0 0.0
    %3138 = vmatpush1.msra.mxu0 0.0
    %3139 = vmatprep.subr.mxu0 0.0
    %3140 = vmatpush1.msra.mxu0 0.0
    %3141 = vmatprep.subr.mxu0 0.0
    %3142 = vmatpush1.msra.mxu0 0.0
    %3143 = vmatprep.subr.mxu0 0.0
    %3144 = vmatpush1.msra.mxu0 0.0
    %3145 = vmatprep.subr.mxu0 0.0
    %3146 = vmatpush1.msra.mxu0 %v1521
    %3147 = vmatprep.subr.mxu0 0.0
    %3148 = vmatpush1.msra.mxu0 %v1520
    %3149 = vmatprep.subr.mxu0 0.0
    %3150 = vmatpush2.msra.mxu0 0.0
    %3151 = vmatprep.subr.mxu0 0.0
    %3152 = vmatpush2.msra.mxu0 0.0
    %3153 = vmatprep.subr.mxu0 0.0
    %3154 = vmatpush2.msra.mxu0 0.0
    %3155 = vmatprep.subr.mxu0 0.0
    %3156 = vmatpush2.msra.mxu0 0.0
    %3157 = vmatprep.subr.mxu0 0.0
    %3158 = vmatpush2.msra.mxu0 0.0
    %3159 = vmatprep.subr.mxu0 0.0
    %3160 = vmatpush2.msra.mxu0 0.0
    %3161 = vmatprep.subr.mxu0 0.0
    %3162 = vmatpush2.msra.mxu0 0.0
    %3163 = vmatprep.subr.mxu0 0.0
    %3164 = vmatpush2.msra.mxu0 0.0
    %3165 = vmatprep.subr.mxu0 0.0
    %3166 = vmatpush2.msra.mxu0 0.0
    %3167 = vmatprep.subr.mxu0 0.0
    %3168 = vmatpush2.msra.mxu0 0.0
    %3169 = vmatprep.subr.mxu0 0.0
    %3170 = vmatpush2.msra.mxu0 0.0
    %3171 = vmatprep.subr.mxu0 0.0
    %3172 = vmatpush2.msra.mxu0 0.0
    %3173 = vmatprep.subr.mxu0 0.0
    %3174 = vmatpush2.msra.mxu0 0.0
    %3175 = vmatprep.subr.mxu0 0.0
    %3176 = vmatpush2.msra.mxu0 0.0
    %3177 = vmatprep.subr.mxu0 0.0
    %3178 = vmatpush2.msra.mxu0 0.0
    %3179 = vmatprep.subr.mxu0 0.0
    %3180 = vmatpush2.msra.mxu0 0.0
    %3181 = vmatprep.mubr.f32.mxu0 0.0
    %3182 = vmatmul.mubr.f32.gmra.mxu0 %v3115
    %v3183 = vpop.f32.mrf.mxu0
    %v3184 = vadd.f32 0.0, %v3183
    %v3185 = vpop.f32.mrf.mxu0
    %3186 = vdwg.mxu0
    %v3187 = vsel %vm1522, %v3184, -1e+30
    %v3188 = vsel %vm159, %v3187, -inf
    %3189 = vmax.xlane.f32.xlu0 %v3188
    %v3190 = vpop.xlane.xlu0 %3189
    %v3191 = vsub.f32 %v3184, %v3190
    %v3192 = vmul.f32 %v3191, 1.442695
    %v3193 = vpow.pop %v3192
    %v3194 = vsel %vm1522, %v3193, 0.0
    %v3195 = vsel %vm159, %v3194, 0.0
    %3196 = vadd.xlane.f32.xlu0 %v3195
    %v3197 = vpop.xlane.xlu0 %3196
    %v3198 = vadd.f32 %v3197, 1e-16
    %v3199 = vrcp.pop %v3198
    %v3200 = vmul.f32 %v3194, %v3199
    %3201 = vmatprep.subr.mxu0 0.0
    %3202 = vmatpush1.xpose.msra.mxu0 0.0
    %3203 = vmatprep.subr.mxu0 0.0
    %3204 = vmatpush1.xpose.msra.mxu0 0.0
    %3205 = vmatprep.subr.mxu0 0.0
    %3206 = vmatpush1.xpose.msra.mxu0 0.0
    %3207 = vmatprep.subr.mxu0 0.0
    %3208 = vmatpush1.xpose.msra.mxu0 0.0
    %3209 = vmatprep.subr.mxu0 0.0
    %3210 = vmatpush1.xpose.msra.mxu0 0.0
    %3211 = vmatprep.subr.mxu0 0.0
    %3212 = vmatpush1.xpose.msra.mxu0 0.0
    %3213 = vmatprep.subr.mxu0 0.0
    %3214 = vmatpush1.xpose.msra.mxu0 0.0
    %3215 = vmatprep.subr.mxu0 0.0
    %3216 = vmatpush1.xpose.msra.mxu0 0.0
    %3217 = vmatprep.subr.mxu0 0.0
    %3218 = vmatpush1.xpose.msra.mxu0 0.0
    %3219 = vmatprep.subr.mxu0 0.0
    %3220 = vmatpush1.xpose.msra.mxu0 0.0
    %3221 = vmatprep.subr.mxu0 0.0
    %3222 = vmatpush1.xpose.msra.mxu0 0.0
    %3223 = vmatprep.subr.mxu0 0.0
    %3224 = vmatpush1.xpose.msra.mxu0 0.0
    %3225 = vmatprep.subr.mxu0 0.0
    %3226 = vmatpush1.xpose.msra.mxu0 0.0
    %3227 = vmatprep.subr.mxu0 0.0
    %3228 = vmatpush1.xpose.msra.mxu0 0.0
    %3229 = vmatprep.subr.mxu0 0.0
    %3230 = vmatpush1.xpose.msra.mxu0 %v1521
    %3231 = vmatprep.subr.mxu0 0.0
    %3232 = vmatpush1.xpose.msra.mxu0 %v1520
    %3233 = vmatprep.subr.mxu0 0.0
    %3234 = vmatpush2.xpose.msra.mxu0 0.0
    %3235 = vmatprep.subr.mxu0 0.0
    %3236 = vmatpush2.xpose.msra.mxu0 0.0
    %3237 = vmatprep.subr.mxu0 0.0
    %3238 = vmatpush2.xpose.msra.mxu0 0.0
    %3239 = vmatprep.subr.mxu0 0.0
    %3240 = vmatpush2.xpose.msra.mxu0 0.0
    %3241 = vmatprep.subr.mxu0 0.0
    %3242 = vmatpush2.xpose.msra.mxu0 0.0
    %3243 = vmatprep.subr.mxu0 0.0
    %3244 = vmatpush2.xpose.msra.mxu0 0.0
    %3245 = vmatprep.subr.mxu0 0.0
    %3246 = vmatpush2.xpose.msra.mxu0 0.0
    %3247 = vmatprep.subr.mxu0 0.0
    %3248 = vmatpush2.xpose.msra.mxu0 0.0
    %3249 = vmatprep.subr.mxu0 0.0
    %3250 = vmatpush2.xpose.msra.mxu0 0.0
    %3251 = vmatprep.subr.mxu0 0.0
    %3252 = vmatpush2.xpose.msra.mxu0 0.0
    %3253 = vmatprep.subr.mxu0 0.0
    %3254 = vmatpush2.xpose.msra.mxu0 0.0
    %3255 = vmatprep.subr.mxu0 0.0
    %3256 = vmatpush2.xpose.msra.mxu0 0.0
    %3257 = vmatprep.subr.mxu0 0.0
    %3258 = vmatpush2.xpose.msra.mxu0 0.0
    %3259 = vmatprep.subr.mxu0 0.0
    %3260 = vmatpush2.xpose.msra.mxu0 0.0
    %3261 = vmatprep.subr.mxu0 0.0
    %3262 = vmatpush2.xpose.msra.mxu0 0.0
    %3263 = vmatprep.subr.mxu0 0.0
    %3264 = vmatpush2.xpose.msra.mxu0 0.0
    %3265 = vmatprep.mubr.f32.mxu0 0.0
    %3266 = vmatmul.mubr.f32.gmra.mxu0 %v3200
    %v3267 = vpop.f32.mrf.mxu0
    %v3268 = vadd.f32 0.0, %v3267
    %v3269 = vpop.f32.mrf.mxu0
    %3270 = vdwg.mxu0
    %v3272 = vsel %vm527, %v3268, 0
    %3274 = vmatprep.subr.mxu0 0.0
    %3275 = vmatpush1.msra.mxu0 0.0
    %3276 = vmatprep.subr.mxu0 0.0
    %3277 = vmatpush1.msra.mxu0 0.0
    %3278 = vmatprep.subr.mxu0 0.0
    %3279 = vmatpush1.msra.mxu0 0.0
    %3280 = vmatprep.subr.mxu0 0.0
    %3281 = vmatpush1.msra.mxu0 0.0
    %3282 = vmatprep.subr.mxu0 0.0
    %3283 = vmatpush1.msra.mxu0 0.0
    %3284 = vmatprep.subr.mxu0 0.0
    %3285 = vmatpush1.msra.mxu0 0.0
    %3286 = vmatprep.subr.mxu0 0.0
    %3287 = vmatpush1.msra.mxu0 0.0
    %3288 = vmatprep.subr.mxu0 0.0
    %3289 = vmatpush1.msra.mxu0 0.0
    %3290 = vmatprep.subr.mxu0 0.0
    %3291 = vmatpush1.msra.mxu0 0.0
    %3292 = vmatprep.subr.mxu0 0.0
    %3293 = vmatpush1.msra.mxu0 0.0
    %3294 = vmatprep.subr.mxu0 0.0
    %3295 = vmatpush1.msra.mxu0 0.0
    %3296 = vmatprep.subr.mxu0 0.0
    %3297 = vmatpush1.msra.mxu0 0.0
    %3298 = vmatprep.subr.mxu0 0.0
    %3299 = vmatpush1.msra.mxu0 0.0
    %3300 = vmatprep.subr.mxu0 0.0
    %3301 = vmatpush1.msra.mxu0 0.0
    %3302 = vmatprep.subr.mxu0 0.0
    %3303 = vmatpush1.msra.mxu0 %v1526
    %3304 = vmatprep.subr.mxu0 0.0
    %3305 = vmatpush1.msra.mxu0 %v1525
    %3306 = vmatprep.subr.mxu0 0.0
    %3307 = vmatpush2.msra.mxu0 0.0
    %3308 = vmatprep.subr.mxu0 0.0
    %3309 = vmatpush2.msra.mxu0 0.0
    %3310 = vmatprep.subr.mxu0 0.0
    %3311 = vmatpush2.msra.mxu0 0.0
    %3312 = vmatprep.subr.mxu0 0.0
    %3313 = vmatpush2.msra.mxu0 0.0
    %3314 = vmatprep.subr.mxu0 0.0
    %3315 = vmatpush2.msra.mxu0 0.0
    %3316 = vmatprep.subr.mxu0 0.0
    %3317 = vmatpush2.msra.mxu0 0.0
    %3318 = vmatprep.subr.mxu0 0.0
    %3319 = vmatpush2.msra.mxu0 0.0
    %3320 = vmatprep.subr.mxu0 0.0
    %3321 = vmatpush2.msra.mxu0 0.0
    %3322 = vmatprep.subr.mxu0 0.0
    %3323 = vmatpush2.msra.mxu0 0.0
    %3324 = vmatprep.subr.mxu0 0.0
    %3325 = vmatpush2.msra.mxu0 0.0
    %3326 = vmatprep.subr.mxu0 0.0
    %3327 = vmatpush2.msra.mxu0 0.0
    %3328 = vmatprep.subr.mxu0 0.0
    %3329 = vmatpush2.msra.mxu0 0.0
    %3330 = vmatprep.subr.mxu0 0.0
    %3331 = vmatpush2.msra.mxu0 0.0
    %3332 = vmatprep.subr.mxu0 0.0
    %3333 = vmatpush2.msra.mxu0 0.0
    %3334 = vmatprep.subr.mxu0 0.0
    %3335 = vmatpush2.msra.mxu0 0.0
    %3336 = vmatprep.subr.mxu0 0.0
    %3337 = vmatpush2.msra.mxu0 0.0
    %3338 = vmatprep.mubr.f32.mxu0 0.0
    %3339 = vmatmul.mubr.f32.gmra.mxu0 %v3272
    %v3340 = vpop.f32.mrf.mxu0
    %v3341 = vadd.f32 0.0, %v3340
    %v3342 = vpop.f32.mrf.mxu0
    %3343 = vdwg.mxu0
    %3344 = vmatprep.subr.mxu0 0.0
    %3345 = vmatpush1.msra.mxu0 0.0
    %3346 = vmatprep.subr.mxu0 0.0
    %3347 = vmatpush1.msra.mxu0 0.0
    %3348 = vmatprep.subr.mxu0 0.0
    %3349 = vmatpush1.msra.mxu0 0.0
    %3350 = vmatprep.subr.mxu0 0.0
    %3351 = vmatpush1.msra.mxu0 0.0
    %3352 = vmatprep.subr.mxu0 0.0
    %3353 = vmatpush1.msra.mxu0 0.0
    %3354 = vmatprep.subr.mxu0 0.0
    %3355 = vmatpush1.msra.mxu0 0.0
    %3356 = vmatprep.subr.mxu0 0.0
    %3357 = vmatpush1.msra.mxu0 0.0
    %3358 = vmatprep.subr.mxu0 0.0
    %3359 = vmatpush1.msra.mxu0 0.0
    %3360 = vmatprep.subr.mxu0 0.0
    %3361 = vmatpush1.msra.mxu0 0.0
    %3362 = vmatprep.subr.mxu0 0.0
    %3363 = vmatpush1.msra.mxu0 0.0
    %3364 = vmatprep.subr.mxu0 0.0
    %3365 = vmatpush1.msra.mxu0 0.0
    %3366 = vmatprep.subr.mxu0 0.0
    %3367 = vmatpush1.msra.mxu0 0.0
    %3368 = vmatprep.subr.mxu0 0.0
    %3369 = vmatpush1.msra.mxu0 0.0
    %3370 = vmatprep.subr.mxu0 0.0
    %3371 = vmatpush1.msra.mxu0 0.0
    %3372 = vmatprep.subr.mxu0 0.0
    %3373 = vmatpush1.msra.mxu0 %v1524
    %3374 = vmatprep.subr.mxu0 0.0
    %3375 = vmatpush1.msra.mxu0 %v1523
    %3376 = vmatprep.subr.mxu0 0.0
    %3377 = vmatpush2.msra.mxu0 0.0
    %3378 = vmatprep.subr.mxu0 0.0
    %3379 = vmatpush2.msra.mxu0 0.0
    %3380 = vmatprep.subr.mxu0 0.0
    %3381 = vmatpush2.msra.mxu0 0.0
    %3382 = vmatprep.subr.mxu0 0.0
    %3383 = vmatpush2.msra.mxu0 0.0
    %3384 = vmatprep.subr.mxu0 0.0
    %3385 = vmatpush2.msra.mxu0 0.0
    %3386 = vmatprep.subr.mxu0 0.0
    %3387 = vmatpush2.msra.mxu0 0.0
    %3388 = vmatprep.subr.mxu0 0.0
    %3389 = vmatpush2.msra.mxu0 0.0
    %3390 = vmatprep.subr.mxu0 0.0
    %3391 = vmatpush2.msra.mxu0 0.0
    %3392 = vmatprep.subr.mxu0 0.0
    %3393 = vmatpush2.msra.mxu0 0.0
    %3394 = vmatprep.subr.mxu0 0.0
    %3395 = vmatpush2.msra.mxu0 0.0
    %3396 = vmatprep.subr.mxu0 0.0
    %3397 = vmatpush2.msra.mxu0 0.0
    %3398 = vmatprep.subr.mxu0 0.0
    %3399 = vmatpush2.msra.mxu0 0.0
    %3400 = vmatprep.subr.mxu0 0.0
    %3401 = vmatpush2.msra.mxu0 0.0
    %3402 = vmatprep.subr.mxu0 0.0
    %3403 = vmatpush2.msra.mxu0 0.0
    %3404 = vmatprep.subr.mxu0 0.0
    %3405 = vmatpush2.msra.mxu0 0.0
    %3406 = vmatprep.subr.mxu0 0.0
    %3407 = vmatpush2.msra.mxu0 0.0
    %3408 = vmatprep.mubr.f32.mxu0 0.0
    %3409 = vmatmul.mubr.f32.gmra.mxu0 %v3115
    %v3410 = vpop.f32.mrf.mxu0
    %v3411 = vadd.f32 %v3341, %v3410
    %v3412 = vpop.f32.mrf.mxu0
    %3413 = vdwg.mxu0
    %v3414 = vadd.f32 %v3411, %v1684
    %3415 = vmatprep.subr.mxu0 0.0
    %3416 = vmatpush1.msra.mxu0 0.0
    %3417 = vmatprep.subr.mxu0 0.0
    %3418 = vmatpush1.msra.mxu0 0.0
    %3419 = vmatprep.subr.mxu0 0.0
    %3420 = vmatpush1.msra.mxu0 0.0
    %3421 = vmatprep.subr.mxu0 0.0
    %3422 = vmatpush1.msra.mxu0 0.0
    %3423 = vmatprep.subr.mxu0 0.0
    %3424 = vmatpush1.msra.mxu0 0.0
    %3425 = vmatprep.subr.mxu0 0.0
    %3426 = vmatpush1.msra.mxu0 0.0
    %3427 = vmatprep.subr.mxu0 0.0
    %3428 = vmatpush1.msra.mxu0 0.0
    %3429 = vmatprep.subr.mxu0 0.0
    %3430 = vmatpush1.msra.mxu0 0.0
    %3431 = vmatprep.subr.mxu0 0.0
    %3432 = vmatpush1.msra.mxu0 0.0
    %3433 = vmatprep.subr.mxu0 0.0
    %3434 = vmatpush1.msra.mxu0 0.0
    %3435 = vmatprep.subr.mxu0 0.0
    %3436 = vmatpush1.msra.mxu0 0.0
    %3437 = vmatprep.subr.mxu0 0.0
    %3438 = vmatpush1.msra.mxu0 0.0
    %3439 = vmatprep.subr.mxu0 0.0
    %3440 = vmatpush1.msra.mxu0 0.0
    %3441 = vmatprep.subr.mxu0 0.0
    %3442 = vmatpush1.msra.mxu0 0.0
    %3443 = vmatprep.subr.mxu0 0.0
    %3444 = vmatpush1.msra.mxu0 %v1528
    %3445 = vmatprep.subr.mxu0 0.0
    %3446 = vmatpush1.msra.mxu0 %v1527
    %3447 = vmatprep.subr.mxu0 0.0
    %3448 = vmatpush2.msra.mxu0 0.0
    %3449 = vmatprep.subr.mxu0 0.0
    %3450 = vmatpush2.msra.mxu0 0.0
    %3451 = vmatprep.subr.mxu0 0.0
    %3452 = vmatpush2.msra.mxu0 0.0
    %3453 = vmatprep.subr.mxu0 0.0
    %3454 = vmatpush2.msra.mxu0 0.0
    %3455 = vmatprep.subr.mxu0 0.0
    %3456 = vmatpush2.msra.mxu0 0.0
    %3457 = vmatprep.subr.mxu0 0.0
    %3458 = vmatpush2.msra.mxu0 0.0
    %3459 = vmatprep.subr.mxu0 0.0
    %3460 = vmatpush2.msra.mxu0 0.0
    %3461 = vmatprep.subr.mxu0 0.0
    %3462 = vmatpush2.msra.mxu0 0.0
    %3463 = vmatprep.subr.mxu0 0.0
    %3464 = vmatpush2.msra.mxu0 0.0
    %3465 = vmatprep.subr.mxu0 0.0
    %3466 = vmatpush2.msra.mxu0 0.0
    %3467 = vmatprep.subr.mxu0 0.0
    %3468 = vmatpush2.msra.mxu0 0.0
    %3469 = vmatprep.subr.mxu0 0.0
    %3470 = vmatpush2.msra.mxu0 0.0
    %3471 = vmatprep.subr.mxu0 0.0
    %3472 = vmatpush2.msra.mxu0 0.0
    %3473 = vmatprep.subr.mxu0 0.0
    %3474 = vmatpush2.msra.mxu0 0.0
    %3475 = vmatprep.subr.mxu0 0.0
    %3476 = vmatpush2.msra.mxu0 0.0
    %3477 = vmatprep.subr.mxu0 0.0
    %3478 = vmatpush2.msra.mxu0 0.0
    %3479 = vmatprep.mubr.f32.mxu0 0.0
    %3480 = vmatmul.mubr.f32.gmra.mxu0 %v2944
    %v3481 = vpop.f32.mrf.mxu0
    %v3482 = vadd.f32 0.0, %v3481
    %v3483 = vpop.f32.mrf.mxu0
    %3484 = vdwg.mxu0
    %v3485 = vadd.f32 %v3414, %v3482
    %v3486 = vadd.f32 %v3485, %v1762
    %v3487 = vxor.u32 %v3486, 2147483648
    %v3488 = vmul.f32 %v3487, 1.442695
    %v3489 = vpow.pop %v3488
    %v3490 = vadd.f32 %v3489, 1.0
    %v3491 = vrcp.pop %v3490
    %v3492 = vmul.f32 1.0, %v3491
    %v3493 = vtanh.pop %v3486
    %v3494 = vmul.f32 %v3492, %v2934
    %3496 = vrot.lane.b32.xlu0 %v3493, 96
    %v3497 = vpop.permute.xlu0 %3496
    %v3499 = vmul.f32 %v3492, %v3497
    %3501 = vrot.lane.b32.xlu0 %v3499, 16
    %v3502 = vpop.permute.xlu0 %3501
    %v3504 = vadd.f32 %v3494, %v3502
    %v3505 = vtanh.pop %v3504
    %3507 = vrot.lane.b32.xlu0 %v3505, 32
    %v3508 = vpop.permute.xlu0 %3507
    %v3510 = vmul.f32 %v3492, %v3508
    %3512 = vrot.lane.b32.xlu0 %v3510, 80
    %v3513 = vpop.permute.xlu0 %3512
    %v3514 = vsel %vm527, %v3513, 0
    %3516 = vmatprep.subr.mxu0 0.0
    %3517 = vmatpush1.msra.mxu0 0.0
    %3518 = vmatprep.subr.mxu0 0.0
    %3519 = vmatpush1.msra.mxu0 0.0
    %3520 = vmatprep.subr.mxu0 0.0
    %3521 = vmatpush1.msra.mxu0 0.0
    %3522 = vmatprep.subr.mxu0 0.0
    %3523 = vmatpush1.msra.mxu0 0.0
    %3524 = vmatprep.subr.mxu0 0.0
    %3525 = vmatpush1.msra.mxu0 0.0
    %3526 = vmatprep.subr.mxu0 0.0
    %3527 = vmatpush1.msra.mxu0 0.0
    %3528 = vmatprep.subr.mxu0 0.0
    %3529 = vmatpush1.msra.mxu0 0.0
    %3530 = vmatprep.subr.mxu0 0.0
    %3531 = vmatpush1.msra.mxu0 0.0
    %3532 = vmatprep.subr.mxu0 0.0
    %3533 = vmatpush1.msra.mxu0 0.0
    %3534 = vmatprep.subr.mxu0 0.0
    %3535 = vmatpush1.msra.mxu0 0.0
    %3536 = vmatprep.subr.mxu0 0.0
    %3537 = vmatpush1.msra.mxu0 0.0
    %3538 = vmatprep.subr.mxu0 0.0
    %3539 = vmatpush1.msra.mxu0 0.0
    %3540 = vmatprep.subr.mxu0 0.0
    %3541 = vmatpush1.msra.mxu0 0.0
    %3542 = vmatprep.subr.mxu0 0.0
    %3543 = vmatpush1.msra.mxu0 0.0
    %3544 = vmatprep.subr.mxu0 0.0
    %3545 = vmatpush1.msra.mxu0 %v1532
    %3546 = vmatprep.subr.mxu0 0.0
    %3547 = vmatpush1.msra.mxu0 %v1531
    %3548 = vmatprep.subr.mxu0 0.0
    %3549 = vmatpush2.msra.mxu0 0.0
    %3550 = vmatprep.subr.mxu0 0.0
    %3551 = vmatpush2.msra.mxu0 0.0
    %3552 = vmatprep.subr.mxu0 0.0
    %3553 = vmatpush2.msra.mxu0 0.0
    %3554 = vmatprep.subr.mxu0 0.0
    %3555 = vmatpush2.msra.mxu0 0.0
    %3556 = vmatprep.subr.mxu0 0.0
    %3557 = vmatpush2.msra.mxu0 0.0
    %3558 = vmatprep.subr.mxu0 0.0
    %3559 = vmatpush2.msra.mxu0 0.0
    %3560 = vmatprep.subr.mxu0 0.0
    %3561 = vmatpush2.msra.mxu0 0.0
    %3562 = vmatprep.subr.mxu0 0.0
    %3563 = vmatpush2.msra.mxu0 0.0
    %3564 = vmatprep.subr.mxu0 0.0
    %3565 = vmatpush2.msra.mxu0 0.0
    %3566 = vmatprep.subr.mxu0 0.0
    %3567 = vmatpush2.msra.mxu0 0.0
    %3568 = vmatprep.subr.mxu0 0.0
    %3569 = vmatpush2.msra.mxu0 0.0
    %3570 = vmatprep.subr.mxu0 0.0
    %3571 = vmatpush2.msra.mxu0 0.0
    %3572 = vmatprep.subr.mxu0 0.0
    %3573 = vmatpush2.msra.mxu0 0.0
    %3574 = vmatprep.subr.mxu0 0.0
    %3575 = vmatpush2.msra.mxu0 0.0
    %3576 = vmatprep.subr.mxu0 0.0
    %3577 = vmatpush2.msra.mxu0 0.0
    %3578 = vmatprep.subr.mxu0 0.0
    %3579 = vmatpush2.msra.mxu0 0.0
    %3580 = vmatprep.mubr.f32.mxu0 0.0
    %3581 = vmatmul.mubr.f32.gmra.mxu0 %v3514
    %v3582 = vpop.f32.mrf.mxu0
    %v3583 = vadd.f32 %v1793, %v3582
    %v3584 = vpop.f32.mrf.mxu0
    %3585 = vdwg.mxu0
    %3586 = vmatprep.subr.mxu0 0.0
    %3587 = vmatpush1.msra.mxu0 0.0
    %3588 = vmatprep.subr.mxu0 0.0
    %3589 = vmatpush1.msra.mxu0 0.0
    %3590 = vmatprep.subr.mxu0 0.0
    %3591 = vmatpush1.msra.mxu0 0.0
    %3592 = vmatprep.subr.mxu0 0.0
    %3593 = vmatpush1.msra.mxu0 0.0
    %3594 = vmatprep.subr.mxu0 0.0
    %3595 = vmatpush1.msra.mxu0 0.0
    %3596 = vmatprep.subr.mxu0 0.0
    %3597 = vmatpush1.msra.mxu0 0.0
    %3598 = vmatprep.subr.mxu0 0.0
    %3599 = vmatpush1.msra.mxu0 0.0
    %3600 = vmatprep.subr.mxu0 0.0
    %3601 = vmatpush1.msra.mxu0 0.0
    %3602 = vmatprep.subr.mxu0 0.0
    %3603 = vmatpush1.msra.mxu0 0.0
    %3604 = vmatprep.subr.mxu0 0.0
    %3605 = vmatpush1.msra.mxu0 0.0
    %3606 = vmatprep.subr.mxu0 0.0
    %3607 = vmatpush1.msra.mxu0 0.0
    %3608 = vmatprep.subr.mxu0 0.0
    %3609 = vmatpush1.msra.mxu0 0.0
    %3610 = vmatprep.subr.mxu0 0.0
    %3611 = vmatpush1.msra.mxu0 0.0
    %3612 = vmatprep.subr.mxu0 0.0
    %3613 = vmatpush1.msra.mxu0 0.0
    %3614 = vmatprep.subr.mxu0 0.0
    %3615 = vmatpush1.msra.mxu0 %v1534
    %3616 = vmatprep.subr.mxu0 0.0
    %3617 = vmatpush1.msra.mxu0 %v1533
    %3618 = vmatprep.subr.mxu0 0.0
    %3619 = vmatpush2.msra.mxu0 0.0
    %3620 = vmatprep.subr.mxu0 0.0
    %3621 = vmatpush2.msra.mxu0 0.0
    %3622 = vmatprep.subr.mxu0 0.0
    %3623 = vmatpush2.msra.mxu0 0.0
    %3624 = vmatprep.subr.mxu0 0.0
    %3625 = vmatpush2.msra.mxu0 0.0
    %3626 = vmatprep.subr.mxu0 0.0
    %3627 = vmatpush2.msra.mxu0 0.0
    %3628 = vmatprep.subr.mxu0 0.0
    %3629 = vmatpush2.msra.mxu0 0.0
    %3630 = vmatprep.subr.mxu0 0.0
    %3631 = vmatpush2.msra.mxu0 0.0
    %3632 = vmatprep.subr.mxu0 0.0
    %3633 = vmatpush2.msra.mxu0 0.0
    %3634 = vmatprep.subr.mxu0 0.0
    %3635 = vmatpush2.msra.mxu0 0.0
    %3636 = vmatprep.subr.mxu0 0.0
    %3637 = vmatpush2.msra.mxu0 0.0
    %3638 = vmatprep.subr.mxu0 0.0
    %3639 = vmatpush2.msra.mxu0 0.0
    %3640 = vmatprep.subr.mxu0 0.0
    %3641 = vmatpush2.msra.mxu0 0.0
    %3642 = vmatprep.subr.mxu0 0.0
    %3643 = vmatpush2.msra.mxu0 0.0
    %3644 = vmatprep.subr.mxu0 0.0
    %3645 = vmatpush2.msra.mxu0 0.0
    %3646 = vmatprep.subr.mxu0 0.0
    %3647 = vmatpush2.msra.mxu0 0.0
    %3648 = vmatprep.subr.mxu0 0.0
    %3649 = vmatpush2.msra.mxu0 0.0
    %3650 = vmatprep.mubr.f32.mxu0 0.0
    %3651 = vmatmul.mubr.f32.gmra.mxu0 %v3115
    %v3652 = vpop.f32.mrf.mxu0
    %v3653 = vadd.f32 0.0, %v3652
    %v3654 = vpop.f32.mrf.mxu0
    %3655 = vdwg.mxu0
    %v3656 = vadd.f32 %v3583, %v3653
    %v3657 = vadd.f32 %v3656, %v1945
    %v3658 = vxor.u32 %v3657, 2147483648
    %v3659 = vmul.f32 %v3658, 1.442695
    %v3660 = vpow.pop %v3659
    %v3661 = vadd.f32 %v3660, 1.0
    %v3662 = vrcp.pop %v3661
    %v3663 = vmul.f32 1.0, %v3662
    %v3664 = vtanh.pop %v3657
    %v3665 = vmul.f32 %v3663, %v3105
    %3667 = vrot.lane.b32.xlu0 %v3664, 96
    %v3668 = vpop.permute.xlu0 %3667
    %v3670 = vmul.f32 %v3663, %v3668
    %3672 = vrot.lane.b32.xlu0 %v3670, 16
    %v3673 = vpop.permute.xlu0 %3672
    %v3675 = vadd.f32 %v3665, %v3673
    %v3676 = vtanh.pop %v3675
    %3678 = vrot.lane.b32.xlu0 %v3676, 32
    %v3679 = vpop.permute.xlu0 %3678
    %v3681 = vmul.f32 %v3663, %v3679
    %3683 = vrot.lane.b32.xlu0 %v3681, 80
    %v3684 = vpop.permute.xlu0 %3683
    %v3685 = vsel %vm527, %v3684, 0
    %3687 = vmatprep.subr.mxu0 0.0
    %3688 = vmatpush1.msra.mxu0 0.0
    %3689 = vmatprep.subr.mxu0 0.0
    %3690 = vmatpush1.msra.mxu0 0.0
    %3691 = vmatprep.subr.mxu0 0.0
    %3692 = vmatpush1.msra.mxu0 0.0
    %3693 = vmatprep.subr.mxu0 0.0
    %3694 = vmatpush1.msra.mxu0 0.0
    %3695 = vmatprep.subr.mxu0 0.0
    %3696 = vmatpush1.msra.mxu0 0.0
    %3697 = vmatprep.subr.mxu0 0.0
    %3698 = vmatpush1.msra.mxu0 0.0
    %3699 = vmatprep.subr.mxu0 0.0
    %3700 = vmatpush1.msra.mxu0 0.0
    %3701 = vmatprep.subr.mxu0 0.0
    %3702 = vmatpush1.msra.mxu0 0.0
    %3703 = vmatprep.subr.mxu0 0.0
    %3704 = vmatpush1.msra.mxu0 0.0
    %3705 = vmatprep.subr.mxu0 0.0
    %3706 = vmatpush1.msra.mxu0 0.0
    %3707 = vmatprep.subr.mxu0 0.0
    %3708 = vmatpush1.msra.mxu0 0.0
    %3709 = vmatprep.subr.mxu0 0.0
    %3710 = vmatpush1.msra.mxu0 0.0
    %3711 = vmatprep.subr.mxu0 0.0
    %3712 = vmatpush1.msra.mxu0 0.0
    %3713 = vmatprep.subr.mxu0 0.0
    %3714 = vmatpush1.msra.mxu0 0.0
    %3715 = vmatprep.subr.mxu0 0.0
    %3716 = vmatpush1.msra.mxu0 %v1521
    %3717 = vmatprep.subr.mxu0 0.0
    %3718 = vmatpush1.msra.mxu0 %v1520
    %3719 = vmatprep.subr.mxu0 0.0
    %3720 = vmatpush2.msra.mxu0 0.0
    %3721 = vmatprep.subr.mxu0 0.0
    %3722 = vmatpush2.msra.mxu0 0.0
    %3723 = vmatprep.subr.mxu0 0.0
    %3724 = vmatpush2.msra.mxu0 0.0
    %3725 = vmatprep.subr.mxu0 0.0
    %3726 = vmatpush2.msra.mxu0 0.0
    %3727 = vmatprep.subr.mxu0 0.0
    %3728 = vmatpush2.msra.mxu0 0.0
    %3729 = vmatprep.subr.mxu0 0.0
    %3730 = vmatpush2.msra.mxu0 0.0
    %3731 = vmatprep.subr.mxu0 0.0
    %3732 = vmatpush2.msra.mxu0 0.0
    %3733 = vmatprep.subr.mxu0 0.0
    %3734 = vmatpush2.msra.mxu0 0.0
    %3735 = vmatprep.subr.mxu0 0.0
    %3736 = vmatpush2.msra.mxu0 0.0
    %3737 = vmatprep.subr.mxu0 0.0
    %3738 = vmatpush2.msra.mxu0 0.0
    %3739 = vmatprep.subr.mxu0 0.0
    %3740 = vmatpush2.msra.mxu0 0.0
    %3741 = vmatprep.subr.mxu0 0.0
    %3742 = vmatpush2.msra.mxu0 0.0
    %3743 = vmatprep.subr.mxu0 0.0
    %3744 = vmatpush2.msra.mxu0 0.0
    %3745 = vmatprep.subr.mxu0 0.0
    %3746 = vmatpush2.msra.mxu0 0.0
    %3747 = vmatprep.subr.mxu0 0.0
    %3748 = vmatpush2.msra.mxu0 0.0
    %3749 = vmatprep.subr.mxu0 0.0
    %3750 = vmatpush2.msra.mxu0 0.0
    %3751 = vmatprep.mubr.f32.mxu0 0.0
    %3752 = vmatmul.mubr.f32.gmra.mxu0 %v3685
    %v3753 = vpop.f32.mrf.mxu0
    %v3754 = vadd.f32 0.0, %v3753
    %v3755 = vpop.f32.mrf.mxu0
    %3756 = vdwg.mxu0
    %v3757 = vsel %vm1522, %v3754, -1e+30
    %v3758 = vsel %vm159, %v3757, -inf
    %3759 = vmax.xlane.f32.xlu0 %v3758
    %v3760 = vpop.xlane.xlu0 %3759
    %v3761 = vsub.f32 %v3754, %v3760
    %v3762 = vmul.f32 %v3761, 1.442695
    %v3763 = vpow.pop %v3762
    %v3764 = vsel %vm1522, %v3763, 0.0
    %v3765 = vsel %vm159, %v3764, 0.0
    %3766 = vadd.xlane.f32.xlu0 %v3765
    %v3767 = vpop.xlane.xlu0 %3766
    %v3768 = vadd.f32 %v3767, 1e-16
    %v3769 = vrcp.pop %v3768
    %v3770 = vmul.f32 %v3764, %v3769
    %3771 = vmatprep.subr.mxu0 0.0
    %3772 = vmatpush1.xpose.msra.mxu0 0.0
    %3773 = vmatprep.subr.mxu0 0.0
    %3774 = vmatpush1.xpose.msra.mxu0 0.0
    %3775 = vmatprep.subr.mxu0 0.0
    %3776 = vmatpush1.xpose.msra.mxu0 0.0
    %3777 = vmatprep.subr.mxu0 0.0
    %3778 = vmatpush1.xpose.msra.mxu0 0.0
    %3779 = vmatprep.subr.mxu0 0.0
    %3780 = vmatpush1.xpose.msra.mxu0 0.0
    %3781 = vmatprep.subr.mxu0 0.0
    %3782 = vmatpush1.xpose.msra.mxu0 0.0
    %3783 = vmatprep.subr.mxu0 0.0
    %3784 = vmatpush1.xpose.msra.mxu0 0.0
    %3785 = vmatprep.subr.mxu0 0.0
    %3786 = vmatpush1.xpose.msra.mxu0 0.0
    %3787 = vmatprep.subr.mxu0 0.0
    %3788 = vmatpush1.xpose.msra.mxu0 0.0
    %3789 = vmatprep.subr.mxu0 0.0
    %3790 = vmatpush1.xpose.msra.mxu0 0.0
    %3791 = vmatprep.subr.mxu0 0.0
    %3792 = vmatpush1.xpose.msra.mxu0 0.0
    %3793 = vmatprep.subr.mxu0 0.0
    %3794 = vmatpush1.xpose.msra.mxu0 0.0
    %3795 = vmatprep.subr.mxu0 0.0
    %3796 = vmatpush1.xpose.msra.mxu0 0.0
    %3797 = vmatprep.subr.mxu0 0.0
    %3798 = vmatpush1.xpose.msra.mxu0 0.0
    %3799 = vmatprep.subr.mxu0 0.0
    %3800 = vmatpush1.xpose.msra.mxu0 %v1521
    %3801 = vmatprep.subr.mxu0 0.0
    %3802 = vmatpush1.xpose.msra.mxu0 %v1520
    %3803 = vmatprep.subr.mxu0 0.0
    %3804 = vmatpush2.xpose.msra.mxu0 0.0
    %3805 = vmatprep.subr.mxu0 0.0
    %3806 = vmatpush2.xpose.msra.mxu0 0.0
    %3807 = vmatprep.subr.mxu0 0.0
    %3808 = vmatpush2.xpose.msra.mxu0 0.0
    %3809 = vmatprep.subr.mxu0 0.0
    %3810 = vmatpush2.xpose.msra.mxu0 0.0
    %3811 = vmatprep.subr.mxu0 0.0
    %3812 = vmatpush2.xpose.msra.mxu0 0.0
    %3813 = vmatprep.subr.mxu0 0.0
    %3814 = vmatpush2.xpose.msra.mxu0 0.0
    %3815 = vmatprep.subr.mxu0 0.0
    %3816 = vmatpush2.xpose.msra.mxu0 0.0
    %3817 = vmatprep.subr.mxu0 0.0
    %3818 = vmatpush2.xpose.msra.mxu0 0.0
    %3819 = vmatprep.subr.mxu0 0.0
    %3820 = vmatpush2.xpose.msra.mxu0 0.0
    %3821 = vmatprep.subr.mxu0 0.0
    %3822 = vmatpush2.xpose.msra.mxu0 0.0
    %3823 = vmatprep.subr.mxu0 0.0
    %3824 = vmatpush2.xpose.msra.mxu0 0.0
    %3825 = vmatprep.subr.mxu0 0.0
    %3826 = vmatpush2.xpose.msra.mxu0 0.0
    %3827 = vmatprep.subr.mxu0 0.0
    %3828 = vmatpush2.xpose.msra.mxu0 0.0
    %3829 = vmatprep.subr.mxu0 0.0
    %3830 = vmatpush2.xpose.msra.mxu0 0.0
    %3831 = vmatprep.subr.mxu0 0.0
    %3832 = vmatpush2.xpose.msra.mxu0 0.0
    %3833 = vmatprep.subr.mxu0 0.0
    %3834 = vmatpush2.xpose.msra.mxu0 0.0
    %3835 = vmatprep.mubr.f32.mxu0 0.0
    %3836 = vmatmul.mubr.f32.gmra.mxu0 %v3770
    %v3837 = vpop.f32.mrf.mxu0
    %v3838 = vadd.f32 0.0, %v3837
    %v3839 = vpop.f32.mrf.mxu0
    %3840 = vdwg.mxu0
    %v3842 = vsel %vm527, %v3838, 0
    %3844 = vmatprep.subr.mxu0 0.0
    %3845 = vmatpush1.msra.mxu0 0.0
    %3846 = vmatprep.subr.mxu0 0.0
    %3847 = vmatpush1.msra.mxu0 0.0
    %3848 = vmatprep.subr.mxu0 0.0
    %3849 = vmatpush1.msra.mxu0 0.0
    %3850 = vmatprep.subr.mxu0 0.0
    %3851 = vmatpush1.msra.mxu0 0.0
    %3852 = vmatprep.subr.mxu0 0.0
    %3853 = vmatpush1.msra.mxu0 0.0
    %3854 = vmatprep.subr.mxu0 0.0
    %3855 = vmatpush1.msra.mxu0 0.0
    %3856 = vmatprep.subr.mxu0 0.0
    %3857 = vmatpush1.msra.mxu0 0.0
    %3858 = vmatprep.subr.mxu0 0.0
    %3859 = vmatpush1.msra.mxu0 0.0
    %3860 = vmatprep.subr.mxu0 0.0
    %3861 = vmatpush1.msra.mxu0 0.0
    %3862 = vmatprep.subr.mxu0 0.0
    %3863 = vmatpush1.msra.mxu0 0.0
    %3864 = vmatprep.subr.mxu0 0.0
    %3865 = vmatpush1.msra.mxu0 0.0
    %3866 = vmatprep.subr.mxu0 0.0
    %3867 = vmatpush1.msra.mxu0 0.0
    %3868 = vmatprep.subr.mxu0 0.0
    %3869 = vmatpush1.msra.mxu0 0.0
    %3870 = vmatprep.subr.mxu0 0.0
    %3871 = vmatpush1.msra.mxu0 0.0
    %3872 = vmatprep.subr.mxu0 0.0
    %3873 = vmatpush1.msra.mxu0 %v1526
    %3874 = vmatprep.subr.mxu0 0.0
    %3875 = vmatpush1.msra.mxu0 %v1525
    %3876 = vmatprep.subr.mxu0 0.0
    %3877 = vmatpush2.msra.mxu0 0.0
    %3878 = vmatprep.subr.mxu0 0.0
    %3879 = vmatpush2.msra.mxu0 0.0
    %3880 = vmatprep.subr.mxu0 0.0
    %3881 = vmatpush2.msra.mxu0 0.0
    %3882 = vmatprep.subr.mxu0 0.0
    %3883 = vmatpush2.msra.mxu0 0.0
    %3884 = vmatprep.subr.mxu0 0.0
    %3885 = vmatpush2.msra.mxu0 0.0
    %3886 = vmatprep.subr.mxu0 0.0
    %3887 = vmatpush2.msra.mxu0 0.0
    %3888 = vmatprep.subr.mxu0 0.0
    %3889 = vmatpush2.msra.mxu0 0.0
    %3890 = vmatprep.subr.mxu0 0.0
    %3891 = vmatpush2.msra.mxu0 0.0
    %3892 = vmatprep.subr.mxu0 0.0
    %3893 = vmatpush2.msra.mxu0 0.0
    %3894 = vmatprep.subr.mxu0 0.0
    %3895 = vmatpush2.msra.mxu0 0.0
    %3896 = vmatprep.subr.mxu0 0.0
    %3897 = vmatpush2.msra.mxu0 0.0
    %3898 = vmatprep.subr.mxu0 0.0
    %3899 = vmatpush2.msra.mxu0 0.0
    %3900 = vmatprep.subr.mxu0 0.0
    %3901 = vmatpush2.msra.mxu0 0.0
    %3902 = vmatprep.subr.mxu0 0.0
    %3903 = vmatpush2.msra.mxu0 0.0
    %3904 = vmatprep.subr.mxu0 0.0
    %3905 = vmatpush2.msra.mxu0 0.0
    %3906 = vmatprep.subr.mxu0 0.0
    %3907 = vmatpush2.msra.mxu0 0.0
    %3908 = vmatprep.mubr.f32.mxu0 0.0
    %3909 = vmatmul.mubr.f32.gmra.mxu0 %v3842
    %v3910 = vpop.f32.mrf.mxu0
    %v3911 = vadd.f32 0.0, %v3910
    %v3912 = vpop.f32.mrf.mxu0
    %3913 = vdwg.mxu0
    %3914 = vmatprep.subr.mxu0 0.0
    %3915 = vmatpush1.msra.mxu0 0.0
    %3916 = vmatprep.subr.mxu0 0.0
    %3917 = vmatpush1.msra.mxu0 0.0
    %3918 = vmatprep.subr.mxu0 0.0
    %3919 = vmatpush1.msra.mxu0 0.0
    %3920 = vmatprep.subr.mxu0 0.0
    %3921 = vmatpush1.msra.mxu0 0.0
    %3922 = vmatprep.subr.mxu0 0.0
    %3923 = vmatpush1.msra.mxu0 0.0
    %3924 = vmatprep.subr.mxu0 0.0
    %3925 = vmatpush1.msra.mxu0 0.0
    %3926 = vmatprep.subr.mxu0 0.0
    %3927 = vmatpush1.msra.mxu0 0.0
    %3928 = vmatprep.subr.mxu0 0.0
    %3929 = vmatpush1.msra.mxu0 0.0
    %3930 = vmatprep.subr.mxu0 0.0
    %3931 = vmatpush1.msra.mxu0 0.0
    %3932 = vmatprep.subr.mxu0 0.0
    %3933 = vmatpush1.msra.mxu0 0.0
    %3934 = vmatprep.subr.mxu0 0.0
    %3935 = vmatpush1.msra.mxu0 0.0
    %3936 = vmatprep.subr.mxu0 0.0
    %3937 = vmatpush1.msra.mxu0 0.0
    %3938 = vmatprep.subr.mxu0 0.0
    %3939 = vmatpush1.msra.mxu0 0.0
    %3940 = vmatprep.subr.mxu0 0.0
    %3941 = vmatpush1.msra.mxu0 0.0
    %3942 = vmatprep.subr.mxu0 0.0
    %3943 = vmatpush1.msra.mxu0 %v1524
    %3944 = vmatprep.subr.mxu0 0.0
    %3945 = vmatpush1.msra.mxu0 %v1523
    %3946 = vmatprep.subr.mxu0 0.0
    %3947 = vmatpush2.msra.mxu0 0.0
    %3948 = vmatprep.subr.mxu0 0.0
    %3949 = vmatpush2.msra.mxu0 0.0
    %3950 = vmatprep.subr.mxu0 0.0
    %3951 = vmatpush2.msra.mxu0 0.0
    %3952 = vmatprep.subr.mxu0 0.0
    %3953 = vmatpush2.msra.mxu0 0.0
    %3954 = vmatprep.subr.mxu0 0.0
    %3955 = vmatpush2.msra.mxu0 0.0
    %3956 = vmatprep.subr.mxu0 0.0
    %3957 = vmatpush2.msra.mxu0 0.0
    %3958 = vmatprep.subr.mxu0 0.0
    %3959 = vmatpush2.msra.mxu0 0.0
    %3960 = vmatprep.subr.mxu0 0.0
    %3961 = vmatpush2.msra.mxu0 0.0
    %3962 = vmatprep.subr.mxu0 0.0
    %3963 = vmatpush2.msra.mxu0 0.0
    %3964 = vmatprep.subr.mxu0 0.0
    %3965 = vmatpush2.msra.mxu0 0.0
    %3966 = vmatprep.subr.mxu0 0.0
    %3967 = vmatpush2.msra.mxu0 0.0
    %3968 = vmatprep.subr.mxu0 0.0
    %3969 = vmatpush2.msra.mxu0 0.0
    %3970 = vmatprep.subr.mxu0 0.0
    %3971 = vmatpush2.msra.mxu0 0.0
    %3972 = vmatprep.subr.mxu0 0.0
    %3973 = vmatpush2.msra.mxu0 0.0
    %3974 = vmatprep.subr.mxu0 0.0
    %3975 = vmatpush2.msra.mxu0 0.0
    %3976 = vmatprep.subr.mxu0 0.0
    %3977 = vmatpush2.msra.mxu0 0.0
    %3978 = vmatprep.mubr.f32.mxu0 0.0
    %3979 = vmatmul.mubr.f32.gmra.mxu0 %v3685
    %v3980 = vpop.f32.mrf.mxu0
    %v3981 = vadd.f32 %v3911, %v3980
    %v3982 = vpop.f32.mrf.mxu0
    %3983 = vdwg.mxu0
    %v3984 = vadd.f32 %v3981, %v1684
    %3985 = vmatprep.subr.mxu0 0.0
    %3986 = vmatpush1.msra.mxu0 0.0
    %3987 = vmatprep.subr.mxu0 0.0
    %3988 = vmatpush1.msra.mxu0 0.0
    %3989 = vmatprep.subr.mxu0 0.0
    %3990 = vmatpush1.msra.mxu0 0.0
    %3991 = vmatprep.subr.mxu0 0.0
    %3992 = vmatpush1.msra.mxu0 0.0
    %3993 = vmatprep.subr.mxu0 0.0
    %3994 = vmatpush1.msra.mxu0 0.0
    %3995 = vmatprep.subr.mxu0 0.0
    %3996 = vmatpush1.msra.mxu0 0.0
    %3997 = vmatprep.subr.mxu0 0.0
    %3998 = vmatpush1.msra.mxu0 0.0
    %3999 = vmatprep.subr.mxu0 0.0
    %4000 = vmatpush1.msra.mxu0 0.0
    %4001 = vmatprep.subr.mxu0 0.0
    %4002 = vmatpush1.msra.mxu0 0.0
    %4003 = vmatprep.subr.mxu0 0.0
    %4004 = vmatpush1.msra.mxu0 0.0
    %4005 = vmatprep.subr.mxu0 0.0
    %4006 = vmatpush1.msra.mxu0 0.0
    %4007 = vmatprep.subr.mxu0 0.0
    %4008 = vmatpush1.msra.mxu0 0.0
    %4009 = vmatprep.subr.mxu0 0.0
    %4010 = vmatpush1.msra.mxu0 0.0
    %4011 = vmatprep.subr.mxu0 0.0
    %4012 = vmatpush1.msra.mxu0 0.0
    %4013 = vmatprep.subr.mxu0 0.0
    %4014 = vmatpush1.msra.mxu0 %v1528
    %4015 = vmatprep.subr.mxu0 0.0
    %4016 = vmatpush1.msra.mxu0 %v1527
    %4017 = vmatprep.subr.mxu0 0.0
    %4018 = vmatpush2.msra.mxu0 0.0
    %4019 = vmatprep.subr.mxu0 0.0
    %4020 = vmatpush2.msra.mxu0 0.0
    %4021 = vmatprep.subr.mxu0 0.0
    %4022 = vmatpush2.msra.mxu0 0.0
    %4023 = vmatprep.subr.mxu0 0.0
    %4024 = vmatpush2.msra.mxu0 0.0
    %4025 = vmatprep.subr.mxu0 0.0
    %4026 = vmatpush2.msra.mxu0 0.0
    %4027 = vmatprep.subr.mxu0 0.0
    %4028 = vmatpush2.msra.mxu0 0.0
    %4029 = vmatprep.subr.mxu0 0.0
    %4030 = vmatpush2.msra.mxu0 0.0
    %4031 = vmatprep.subr.mxu0 0.0
    %4032 = vmatpush2.msra.mxu0 0.0
    %4033 = vmatprep.subr.mxu0 0.0
    %4034 = vmatpush2.msra.mxu0 0.0
    %4035 = vmatprep.subr.mxu0 0.0
    %4036 = vmatpush2.msra.mxu0 0.0
    %4037 = vmatprep.subr.mxu0 0.0
    %4038 = vmatpush2.msra.mxu0 0.0
    %4039 = vmatprep.subr.mxu0 0.0
    %4040 = vmatpush2.msra.mxu0 0.0
    %4041 = vmatprep.subr.mxu0 0.0
    %4042 = vmatpush2.msra.mxu0 0.0
    %4043 = vmatprep.subr.mxu0 0.0
    %4044 = vmatpush2.msra.mxu0 0.0
    %4045 = vmatprep.subr.mxu0 0.0
    %4046 = vmatpush2.msra.mxu0 0.0
    %4047 = vmatprep.subr.mxu0 0.0
    %4048 = vmatpush2.msra.mxu0 0.0
    %4049 = vmatprep.mubr.f32.mxu0 0.0
    %4050 = vmatmul.mubr.f32.gmra.mxu0 %v3514
    %v4051 = vpop.f32.mrf.mxu0
    %v4052 = vadd.f32 0.0, %v4051
    %v4053 = vpop.f32.mrf.mxu0
    %4054 = vdwg.mxu0
    %v4055 = vadd.f32 %v3984, %v4052
    %v4056 = vadd.f32 %v4055, %v1762
    %v4057 = vxor.u32 %v4056, 2147483648
    %v4058 = vmul.f32 %v4057, 1.442695
    %v4059 = vpow.pop %v4058
    %v4060 = vadd.f32 %v4059, 1.0
    %v4061 = vrcp.pop %v4060
    %v4062 = vmul.f32 1.0, %v4061
    %v4063 = vtanh.pop %v4056
    %v4064 = vmul.f32 %v4062, %v3504
    %4066 = vrot.lane.b32.xlu0 %v4063, 96
    %v4067 = vpop.permute.xlu0 %4066
    %v4069 = vmul.f32 %v4062, %v4067
    %4071 = vrot.lane.b32.xlu0 %v4069, 16
    %v4072 = vpop.permute.xlu0 %4071
    %v4074 = vadd.f32 %v4064, %v4072
    %v4075 = vtanh.pop %v4074
    %4077 = vrot.lane.b32.xlu0 %v4075, 32
    %v4078 = vpop.permute.xlu0 %4077
    %v4080 = vmul.f32 %v4062, %v4078
    %4082 = vrot.lane.b32.xlu0 %v4080, 80
    %v4083 = vpop.permute.xlu0 %4082
    %v4084 = vsel %vm527, %v4083, 0
    %4086 = vmatprep.subr.mxu0 0.0
    %4087 = vmatpush1.msra.mxu0 0.0
    %4088 = vmatprep.subr.mxu0 0.0
    %4089 = vmatpush1.msra.mxu0 0.0
    %4090 = vmatprep.subr.mxu0 0.0
    %4091 = vmatpush1.msra.mxu0 0.0
    %4092 = vmatprep.subr.mxu0 0.0
    %4093 = vmatpush1.msra.mxu0 0.0
    %4094 = vmatprep.subr.mxu0 0.0
    %4095 = vmatpush1.msra.mxu0 0.0
    %4096 = vmatprep.subr.mxu0 0.0
    %4097 = vmatpush1.msra.mxu0 0.0
    %4098 = vmatprep.subr.mxu0 0.0
    %4099 = vmatpush1.msra.mxu0 0.0
    %4100 = vmatprep.subr.mxu0 0.0
    %4101 = vmatpush1.msra.mxu0 0.0
    %4102 = vmatprep.subr.mxu0 0.0
    %4103 = vmatpush1.msra.mxu0 0.0
    %4104 = vmatprep.subr.mxu0 0.0
    %4105 = vmatpush1.msra.mxu0 0.0
    %4106 = vmatprep.subr.mxu0 0.0
    %4107 = vmatpush1.msra.mxu0 0.0
    %4108 = vmatprep.subr.mxu0 0.0
    %4109 = vmatpush1.msra.mxu0 0.0
    %4110 = vmatprep.subr.mxu0 0.0
    %4111 = vmatpush1.msra.mxu0 0.0
    %4112 = vmatprep.subr.mxu0 0.0
    %4113 = vmatpush1.msra.mxu0 0.0
    %4114 = vmatprep.subr.mxu0 0.0
    %4115 = vmatpush1.msra.mxu0 %v1532
    %4116 = vmatprep.subr.mxu0 0.0
    %4117 = vmatpush1.msra.mxu0 %v1531
    %4118 = vmatprep.subr.mxu0 0.0
    %4119 = vmatpush2.msra.mxu0 0.0
    %4120 = vmatprep.subr.mxu0 0.0
    %4121 = vmatpush2.msra.mxu0 0.0
    %4122 = vmatprep.subr.mxu0 0.0
    %4123 = vmatpush2.msra.mxu0 0.0
    %4124 = vmatprep.subr.mxu0 0.0
    %4125 = vmatpush2.msra.mxu0 0.0
    %4126 = vmatprep.subr.mxu0 0.0
    %4127 = vmatpush2.msra.mxu0 0.0
    %4128 = vmatprep.subr.mxu0 0.0
    %4129 = vmatpush2.msra.mxu0 0.0
    %4130 = vmatprep.subr.mxu0 0.0
    %4131 = vmatpush2.msra.mxu0 0.0
    %4132 = vmatprep.subr.mxu0 0.0
    %4133 = vmatpush2.msra.mxu0 0.0
    %4134 = vmatprep.subr.mxu0 0.0
    %4135 = vmatpush2.msra.mxu0 0.0
    %4136 = vmatprep.subr.mxu0 0.0
    %4137 = vmatpush2.msra.mxu0 0.0
    %4138 = vmatprep.subr.mxu0 0.0
    %4139 = vmatpush2.msra.mxu0 0.0
    %4140 = vmatprep.subr.mxu0 0.0
    %4141 = vmatpush2.msra.mxu0 0.0
    %4142 = vmatprep.subr.mxu0 0.0
    %4143 = vmatpush2.msra.mxu0 0.0
    %4144 = vmatprep.subr.mxu0 0.0
    %4145 = vmatpush2.msra.mxu0 0.0
    %4146 = vmatprep.subr.mxu0 0.0
    %4147 = vmatpush2.msra.mxu0 0.0
    %4148 = vmatprep.subr.mxu0 0.0
    %4149 = vmatpush2.msra.mxu0 0.0
    %4150 = vmatprep.mubr.f32.mxu0 0.0
    %4151 = vmatmul.mubr.f32.gmra.mxu0 %v4084
    %v4152 = vpop.f32.mrf.mxu0
    %v4153 = vadd.f32 %v1793, %v4152
    %v4154 = vpop.f32.mrf.mxu0
    %4155 = vdwg.mxu0
    %4156 = vmatprep.subr.mxu0 0.0
    %4157 = vmatpush1.msra.mxu0 0.0
    %4158 = vmatprep.subr.mxu0 0.0
    %4159 = vmatpush1.msra.mxu0 0.0
    %4160 = vmatprep.subr.mxu0 0.0
    %4161 = vmatpush1.msra.mxu0 0.0
    %4162 = vmatprep.subr.mxu0 0.0
    %4163 = vmatpush1.msra.mxu0 0.0
    %4164 = vmatprep.subr.mxu0 0.0
    %4165 = vmatpush1.msra.mxu0 0.0
    %4166 = vmatprep.subr.mxu0 0.0
    %4167 = vmatpush1.msra.mxu0 0.0
    %4168 = vmatprep.subr.mxu0 0.0
    %4169 = vmatpush1.msra.mxu0 0.0
    %4170 = vmatprep.subr.mxu0 0.0
    %4171 = vmatpush1.msra.mxu0 0.0
    %4172 = vmatprep.subr.mxu0 0.0
    %4173 = vmatpush1.msra.mxu0 0.0
    %4174 = vmatprep.subr.mxu0 0.0
    %4175 = vmatpush1.msra.mxu0 0.0
    %4176 = vmatprep.subr.mxu0 0.0
    %4177 = vmatpush1.msra.mxu0 0.0
    %4178 = vmatprep.subr.mxu0 0.0
    %4179 = vmatpush1.msra.mxu0 0.0
    %4180 = vmatprep.subr.mxu0 0.0
    %4181 = vmatpush1.msra.mxu0 0.0
    %4182 = vmatprep.subr.mxu0 0.0
    %4183 = vmatpush1.msra.mxu0 0.0
    %4184 = vmatprep.subr.mxu0 0.0
    %4185 = vmatpush1.msra.mxu0 %v1534
    %4186 = vmatprep.subr.mxu0 0.0
    %4187 = vmatpush1.msra.mxu0 %v1533
    %4188 = vmatprep.subr.mxu0 0.0
    %4189 = vmatpush2.msra.mxu0 0.0
    %4190 = vmatprep.subr.mxu0 0.0
    %4191 = vmatpush2.msra.mxu0 0.0
    %4192 = vmatprep.subr.mxu0 0.0
    %4193 = vmatpush2.msra.mxu0 0.0
    %4194 = vmatprep.subr.mxu0 0.0
    %4195 = vmatpush2.msra.mxu0 0.0
    %4196 = vmatprep.subr.mxu0 0.0
    %4197 = vmatpush2.msra.mxu0 0.0
    %4198 = vmatprep.subr.mxu0 0.0
    %4199 = vmatpush2.msra.mxu0 0.0
    %4200 = vmatprep.subr.mxu0 0.0
    %4201 = vmatpush2.msra.mxu0 0.0
    %4202 = vmatprep.subr.mxu0 0.0
    %4203 = vmatpush2.msra.mxu0 0.0
    %4204 = vmatprep.subr.mxu0 0.0
    %4205 = vmatpush2.msra.mxu0 0.0
    %4206 = vmatprep.subr.mxu0 0.0
    %4207 = vmatpush2.msra.mxu0 0.0
    %4208 = vmatprep.subr.mxu0 0.0
    %4209 = vmatpush2.msra.mxu0 0.0
    %4210 = vmatprep.subr.mxu0 0.0
    %4211 = vmatpush2.msra.mxu0 0.0
    %4212 = vmatprep.subr.mxu0 0.0
    %4213 = vmatpush2.msra.mxu0 0.0
    %4214 = vmatprep.subr.mxu0 0.0
    %4215 = vmatpush2.msra.mxu0 0.0
    %4216 = vmatprep.subr.mxu0 0.0
    %4217 = vmatpush2.msra.mxu0 0.0
    %4218 = vmatprep.subr.mxu0 0.0
    %4219 = vmatpush2.msra.mxu0 0.0
    %4220 = vmatprep.mubr.f32.mxu0 0.0
    %4221 = vmatmul.mubr.f32.gmra.mxu0 %v3685
    %v4222 = vpop.f32.mrf.mxu0
    %v4223 = vadd.f32 0.0, %v4222
    %v4224 = vpop.f32.mrf.mxu0
    %4225 = vdwg.mxu0
    %v4226 = vadd.f32 %v4153, %v4223
    %v4227 = vadd.f32 %v4226, %v1945
    %v4228 = vxor.u32 %v4227, 2147483648
    %v4229 = vmul.f32 %v4228, 1.442695
    %v4230 = vpow.pop %v4229
    %v4231 = vadd.f32 %v4230, 1.0
    %v4232 = vrcp.pop %v4231
    %v4233 = vmul.f32 1.0, %v4232
    %v4234 = vtanh.pop %v4227
    %v4235 = vmul.f32 %v4233, %v3675
    %4237 = vrot.lane.b32.xlu0 %v4234, 96
    %v4238 = vpop.permute.xlu0 %4237
    %v4240 = vmul.f32 %v4233, %v4238
    %4242 = vrot.lane.b32.xlu0 %v4240, 16
    %v4243 = vpop.permute.xlu0 %4242
    %v4245 = vadd.f32 %v4235, %v4243
    %v4246 = vtanh.pop %v4245
    %4248 = vrot.lane.b32.xlu0 %v4246, 32
    %v4249 = vpop.permute.xlu0 %4248
    %v4251 = vmul.f32 %v4233, %v4249
    %4253 = vrot.lane.b32.xlu0 %v4251, 80
    %v4254 = vpop.permute.xlu0 %4253
    %v4255 = vsel %vm527, %v4254, 0
    %4257 = vmatprep.subr.mxu0 0.0
    %4258 = vmatpush1.msra.mxu0 0.0
    %4259 = vmatprep.subr.mxu0 0.0
    %4260 = vmatpush1.msra.mxu0 0.0
    %4261 = vmatprep.subr.mxu0 0.0
    %4262 = vmatpush1.msra.mxu0 0.0
    %4263 = vmatprep.subr.mxu0 0.0
    %4264 = vmatpush1.msra.mxu0 0.0
    %4265 = vmatprep.subr.mxu0 0.0
    %4266 = vmatpush1.msra.mxu0 0.0
    %4267 = vmatprep.subr.mxu0 0.0
    %4268 = vmatpush1.msra.mxu0 0.0
    %4269 = vmatprep.subr.mxu0 0.0
    %4270 = vmatpush1.msra.mxu0 0.0
    %4271 = vmatprep.subr.mxu0 0.0
    %4272 = vmatpush1.msra.mxu0 0.0
    %4273 = vmatprep.subr.mxu0 0.0
    %4274 = vmatpush1.msra.mxu0 0.0
    %4275 = vmatprep.subr.mxu0 0.0
    %4276 = vmatpush1.msra.mxu0 0.0
    %4277 = vmatprep.subr.mxu0 0.0
    %4278 = vmatpush1.msra.mxu0 0.0
    %4279 = vmatprep.subr.mxu0 0.0
    %4280 = vmatpush1.msra.mxu0 0.0
    %4281 = vmatprep.subr.mxu0 0.0
    %4282 = vmatpush1.msra.mxu0 0.0
    %4283 = vmatprep.subr.mxu0 0.0
    %4284 = vmatpush1.msra.mxu0 0.0
    %4285 = vmatprep.subr.mxu0 0.0
    %4286 = vmatpush1.msra.mxu0 %v1521
    %4287 = vmatprep.subr.mxu0 0.0
    %4288 = vmatpush1.msra.mxu0 %v1520
    %4289 = vmatprep.subr.mxu0 0.0
    %4290 = vmatpush2.msra.mxu0 0.0
    %4291 = vmatprep.subr.mxu0 0.0
    %4292 = vmatpush2.msra.mxu0 0.0
    %4293 = vmatprep.subr.mxu0 0.0
    %4294 = vmatpush2.msra.mxu0 0.0
    %4295 = vmatprep.subr.mxu0 0.0
    %4296 = vmatpush2.msra.mxu0 0.0
    %4297 = vmatprep.subr.mxu0 0.0
    %4298 = vmatpush2.msra.mxu0 0.0
    %4299 = vmatprep.subr.mxu0 0.0
    %4300 = vmatpush2.msra.mxu0 0.0
    %4301 = vmatprep.subr.mxu0 0.0
    %4302 = vmatpush2.msra.mxu0 0.0
    %4303 = vmatprep.subr.mxu0 0.0
    %4304 = vmatpush2.msra.mxu0 0.0
    %4305 = vmatprep.subr.mxu0 0.0
    %4306 = vmatpush2.msra.mxu0 0.0
    %4307 = vmatprep.subr.mxu0 0.0
    %4308 = vmatpush2.msra.mxu0 0.0
    %4309 = vmatprep.subr.mxu0 0.0
    %4310 = vmatpush2.msra.mxu0 0.0
    %4311 = vmatprep.subr.mxu0 0.0
    %4312 = vmatpush2.msra.mxu0 0.0
    %4313 = vmatprep.subr.mxu0 0.0
    %4314 = vmatpush2.msra.mxu0 0.0
    %4315 = vmatprep.subr.mxu0 0.0
    %4316 = vmatpush2.msra.mxu0 0.0
    %4317 = vmatprep.subr.mxu0 0.0
    %4318 = vmatpush2.msra.mxu0 0.0
    %4319 = vmatprep.subr.mxu0 0.0
    %4320 = vmatpush2.msra.mxu0 0.0
    %4321 = vmatprep.mubr.f32.mxu0 0.0
    %4322 = vmatmul.mubr.f32.gmra.mxu0 %v4255
    %v4323 = vpop.f32.mrf.mxu0
    %v4324 = vadd.f32 0.0, %v4323
    %v4325 = vpop.f32.mrf.mxu0
    %4326 = vdwg.mxu0
    %v4327 = vsel %vm1522, %v4324, -1e+30
    %v4328 = vsel %vm159, %v4327, -inf
    %4329 = vmax.xlane.f32.xlu0 %v4328
    %v4330 = vpop.xlane.xlu0 %4329
    %v4331 = vsub.f32 %v4324, %v4330
    %v4332 = vmul.f32 %v4331, 1.442695
    %v4333 = vpow.pop %v4332
    %v4334 = vsel %vm1522, %v4333, 0.0
    %v4335 = vsel %vm159, %v4334, 0.0
    %4336 = vadd.xlane.f32.xlu0 %v4335
    %v4337 = vpop.xlane.xlu0 %4336
    %v4338 = vadd.f32 %v4337, 1e-16
    %v4339 = vrcp.pop %v4338
    %v4340 = vmul.f32 %v4334, %v4339
    %4341 = vmatprep.subr.mxu0 0.0
    %4342 = vmatpush1.xpose.msra.mxu0 0.0
    %4343 = vmatprep.subr.mxu0 0.0
    %4344 = vmatpush1.xpose.msra.mxu0 0.0
    %4345 = vmatprep.subr.mxu0 0.0
    %4346 = vmatpush1.xpose.msra.mxu0 0.0
    %4347 = vmatprep.subr.mxu0 0.0
    %4348 = vmatpush1.xpose.msra.mxu0 0.0
    %4349 = vmatprep.subr.mxu0 0.0
    %4350 = vmatpush1.xpose.msra.mxu0 0.0
    %4351 = vmatprep.subr.mxu0 0.0
    %4352 = vmatpush1.xpose.msra.mxu0 0.0
    %4353 = vmatprep.subr.mxu0 0.0
    %4354 = vmatpush1.xpose.msra.mxu0 0.0
    %4355 = vmatprep.subr.mxu0 0.0
    %4356 = vmatpush1.xpose.msra.mxu0 0.0
    %4357 = vmatprep.subr.mxu0 0.0
    %4358 = vmatpush1.xpose.msra.mxu0 0.0
    %4359 = vmatprep.subr.mxu0 0.0
    %4360 = vmatpush1.xpose.msra.mxu0 0.0
    %4361 = vmatprep.subr.mxu0 0.0
    %4362 = vmatpush1.xpose.msra.mxu0 0.0
    %4363 = vmatprep.subr.mxu0 0.0
    %4364 = vmatpush1.xpose.msra.mxu0 0.0
    %4365 = vmatprep.subr.mxu0 0.0
    %4366 = vmatpush1.xpose.msra.mxu0 0.0
    %4367 = vmatprep.subr.mxu0 0.0
    %4368 = vmatpush1.xpose.msra.mxu0 0.0
    %4369 = vmatprep.subr.mxu0 0.0
    %4370 = vmatpush1.xpose.msra.mxu0 %v1521
    %4371 = vmatprep.subr.mxu0 0.0
    %4372 = vmatpush1.xpose.msra.mxu0 %v1520
    %4373 = vmatprep.subr.mxu0 0.0
    %4374 = vmatpush2.xpose.msra.mxu0 0.0
    %4375 = vmatprep.subr.mxu0 0.0
    %4376 = vmatpush2.xpose.msra.mxu0 0.0
    %4377 = vmatprep.subr.mxu0 0.0
    %4378 = vmatpush2.xpose.msra.mxu0 0.0
    %4379 = vmatprep.subr.mxu0 0.0
    %4380 = vmatpush2.xpose.msra.mxu0 0.0
    %4381 = vmatprep.subr.mxu0 0.0
    %4382 = vmatpush2.xpose.msra.mxu0 0.0
    %4383 = vmatprep.subr.mxu0 0.0
    %4384 = vmatpush2.xpose.msra.mxu0 0.0
    %4385 = vmatprep.subr.mxu0 0.0
    %4386 = vmatpush2.xpose.msra.mxu0 0.0
    %4387 = vmatprep.subr.mxu0 0.0
    %4388 = vmatpush2.xpose.msra.mxu0 0.0
    %4389 = vmatprep.subr.mxu0 0.0
    %4390 = vmatpush2.xpose.msra.mxu0 0.0
    %4391 = vmatprep.subr.mxu0 0.0
    %4392 = vmatpush2.xpose.msra.mxu0 0.0
    %4393 = vmatprep.subr.mxu0 0.0
    %4394 = vmatpush2.xpose.msra.mxu0 0.0
    %4395 = vmatprep.subr.mxu0 0.0
    %4396 = vmatpush2.xpose.msra.mxu0 0.0
    %4397 = vmatprep.subr.mxu0 0.0
    %4398 = vmatpush2.xpose.msra.mxu0 0.0
    %4399 = vmatprep.subr.mxu0 0.0
    %4400 = vmatpush2.xpose.msra.mxu0 0.0
    %4401 = vmatprep.subr.mxu0 0.0
    %4402 = vmatpush2.xpose.msra.mxu0 0.0
    %4403 = vmatprep.subr.mxu0 0.0
    %4404 = vmatpush2.xpose.msra.mxu0 0.0
    %4405 = vmatprep.mubr.f32.mxu0 0.0
    %4406 = vmatmul.mubr.f32.gmra.mxu0 %v4340
    %v4407 = vpop.f32.mrf.mxu0
    %v4408 = vadd.f32 0.0, %v4407
    %v4409 = vpop.f32.mrf.mxu0
    %4410 = vdwg.mxu0
    %4413 = vrot.lane.b32.xlu0 %v4408, 16
    %v4414 = vpop.permute.xlu0 %4413
    %v4416 = vsel %vm527, %v4254, %v4414
    %v4417 = vsel %vm577, %v4416, 0.0
    %4418 = vst [vmem:[#allocation14] sm:$0x3] %v4417
    // Predicated region
    $region110: #{tpu_custom_call.1} parent=1 // pred_check
      _
    $region111: #{tpu_custom_call.1} parent=1 // pred_check_branch
      %4420 = sbr.rel (0) target = $region113
    $region112: #{tpu_custom_call.1} parent=1 // pred_region
      %s4422 = ssub.s32 32, 32
      %4423 = vsyncadd [#allocation4], %s4422
      %s4425 = sshll.u32 [#allocation14], 4
      %s4426 = int_to_ptr.vmem [resolvable:$true] %s4425
      %4428 = dma.vmem_to_hbm [thread:$0]  %s4426, 32, %s20, [#allocation4]
    $region113: #{tpu_custom_call.1} parent=1 // pred_fallthru
      _
    // Predicated region
    $region114: #{tpu_custom_call.1} parent=1 // pred_check
      _
    $region115: #{tpu_custom_call.1} parent=1 // pred_check_branch
      %4430 = sbr.rel (0) target = $region117
    $region116: #{tpu_custom_call.1} parent=1 // pred_region
      %4431 = dma.done [#allocation4], 32
    $region117: #{tpu_custom_call.1} parent=1 // pred_fallthru
      _
    %4432 = vsyncpa [#allocation3], 1
    %4433 = vsyncpa [#allocation6], 1
    %4434 = vsyncpa [#allocation9], 1
    %4435 = vsyncpa [#allocation12], 1
    %4436 = vsyncpa [#allocation4], 1

</llo_original>
